<compile_context>
chip_gen: v7x
topology: tpu7x:2x2x1
jax: 0.10.0
libtpu: 0.0.40
codegen_flags: <defaults>
</compile_context>

<pallas_src>
import jax
import jax.numpy as jnp
from jax import lax
from jax.experimental import pallas as pl
from jax.experimental.pallas import tpu as pltpu


def upconv_phase_kernel(x_ref, w_ref, b_ref, o_ref):
    # x_ref: (1, C, H, W)     VMEM  - one batch element, original resolution
    # w_ref: (16*C*C,)        SMEM  - effective phase weights, flat:
    #         index = (((py*2+px)*2+ty)*2+tx)*C*C + cout*C + cin
    # b_ref: (C,)             SMEM  - bias
    # o_ref: (1, 4, C, H, W)  VMEM  - the 4 output phases (phase = py*2+px)
    _, C, H, W = x_ref.shape
    x = x_ref[0].astype(jnp.float32)                        # (C, H, W)

    # Zero-pad by 1 in both spatial dims, entirely in VMEM (nothing hits HBM).
    zrow = jnp.zeros((C, 1, W), jnp.float32)
    xp = jnp.concatenate([zrow, x, zrow], axis=1)           # (C, H+2, W)
    zcol = jnp.zeros((C, H + 2, 1), jnp.float32)
    xp = jnp.concatenate([zcol, xp, zcol], axis=2)          # (C, H+2, W+2)

    # The 9 shifted (H, W) windows per input channel: static slices, no reshapes.
    win = [[[xp[ci, r0:r0 + H, c0:c0 + W] for c0 in range(3)]
            for r0 in range(3)] for ci in range(C)]

    # Phase-decomposed conv: 4 output phases x (2x2 taps x Cin) VPU FMAs each,
    # with scalar weights read from SMEM; bias folded into the accumulator init.
    for py in range(2):
        for px in range(2):
            phase = py * 2 + px
            for co in range(C):
                acc = jnp.full((H, W), b_ref[co], jnp.float32)
                for ty in range(2):
                    for tx in range(2):
                        for ci in range(C):
                            widx = (phase * 4 + ty * 2 + tx) * C * C + co * C + ci
                            acc = acc + w_ref[widx] * win[ci][py + ty][px + tx]
                o_ref[0, phase, co] = acc.astype(o_ref.dtype)


def _phase_weights(weight):
    """OIHW (C, C, 3, 3) -> flat (16*C*C,) effective weights for the 4 output
    phases of conv3x3(nearest_x2(x)).
    Layout: index = (((py*2+px)*2+ty)*2+tx)*C*C + cout*C + cin."""
    taps = (((0,), (1, 2)), ((0, 1), (2,)))   # taps[phase][t] -> original 3x3 offsets
    blocks = []
    for py in range(2):
        for px in range(2):
            for ty in range(2):
                for tx in range(2):
                    w_sum = None
                    for dy in taps[py][ty]:
                        for dx in taps[px][tx]:
                            term = weight[:, :, dy, dx]      # (Cout, Cin)
                            w_sum = term if w_sum is None else w_sum + term
                    blocks.append(w_sum)
    return jnp.stack(blocks, axis=0).reshape(-1).astype(jnp.float32)


def upsample_module(x, weight, bias):
    """x: (N, C, H, W); weight: (C, C, 3, 3) OIHW; bias: (C,).
    Returns conv3x3(nearest_upsample_x2(x)) in NCHW, shape (N, C, 2H, 2W)."""
    N, C, H, W = x.shape
    w_flat = _phase_weights(weight)

    out_phases = pl.pallas_call(
        upconv_phase_kernel,
        out_shape=jax.ShapeDtypeStruct((N, 4, C, H, W), x.dtype),
        grid=(N,),
        in_specs=[
            pl.BlockSpec((1, C, H, W), lambda n: (n, 0, 0, 0)),
            pl.BlockSpec(memory_space=pltpu.MemorySpace.SMEM),
            pl.BlockSpec(memory_space=pltpu.MemorySpace.SMEM),
        ],
        out_specs=pl.BlockSpec((1, 4, C, H, W), lambda n: (n, 0, 0, 0, 0)),
        compiler_params=pltpu.CompilerParams(dimension_semantics=("parallel",)),
    )(x, w_flat, bias.astype(jnp.float32))

    # Interleave the phases: (N, py*2+px, C, H, W) -> (N, C, 2H, 2W).
    out = out_phases.reshape(N, 2, 2, C, H, W)
    out = jnp.transpose(out, (0, 3, 4, 1, 5, 2)).reshape(N, C, 2 * H, 2 * W)
    return out


def reference(x_nchw, weight, bias):
    """Pure-JAX reference matching PyTorch semantics (NCHW)."""
    up = jnp.repeat(jnp.repeat(x_nchw, 2, axis=2), 2, axis=3)
    out = lax.conv_general_dilated(
        up, weight, window_strides=(1, 1), padding=((1, 1), (1, 1)),
        dimension_numbers=("NCHW", "OIHW", "NCHW"),
        precision=lax.Precision.HIGHEST)
    return out + bias[None, :, None, None]


if __name__ == "__main__":
    key = jax.random.PRNGKey(0)
    k_x, k_w, k_b = jax.random.split(key, 3)

    N, C, H, W = 2, 4, 16, 16
    x = jax.random.normal(k_x, (N, C, H, W), dtype=jnp.float32)

    # Deterministic Conv2d-style init (uniform with PyTorch's fan_in bound).
    fan_in = C * 3 * 3
    bound = 1.0 / (fan_in ** 0.5)
    weight = jax.random.uniform(k_w, (C, C, 3, 3), jnp.float32, -bound, bound)
    bias = jax.random.uniform(k_b, (C,), jnp.float32, -bound, bound)

    run = jax.jit(upsample_module)
    out = jax.block_until_ready(run(x, weight, bias))
    ref = jax.block_until_ready(reference(x, weight, bias))

    assert out.shape == (N, C, 2 * H, 2 * W), out.shape
    max_err = float(jnp.max(jnp.abs(out - ref)))
    assert jnp.allclose(out, ref, atol=1e-4, rtol=1e-4), max_err
    print("KERNEL_OK")
</pallas_src>

<mosaic_0001>
module attributes {stable_mosaic.version = 11 : i64} {
  func.func @upconv_phase_kernel(%arg0: i32, %arg1: memref<1x4x16x16xf32, #tpu.memory_space<vmem>>, %arg2: memref<256xf32, #tpu.memory_space<smem>>, %arg3: memref<4xf32, #tpu.memory_space<smem>>, %arg4: memref<1x4x4x16x16xf32, #tpu.memory_space<vmem>>) attributes {dimension_semantics = [#tpu.dimension_semantics<parallel>], iteration_bounds = array<i64: 2>, scalar_prefetch = 0 : i64, scratch_operands = 0 : i64, tpu.core_type = #tpu.core_type<tc>, window_params = [{transform_indices = @transform_0, window_bounds = array<i64: 1, 4, 16, 16>}, {transform_indices = @transform_1, window_bounds = array<i64: 256>}, {transform_indices = @transform_2, window_bounds = array<i64: 4>}, {transform_indices = @transform_3, window_bounds = array<i64: 1, 4, 4, 16, 16>}]} {
    %c0 = arith.constant 0 : index
    %c0_0 = arith.constant 0 : index
    %c0_1 = arith.constant 0 : index
    %c0_2 = arith.constant 0 : index
    %0 = vector.load %arg1[%c0, %c0_0, %c0_1, %c0_2] : memref<1x4x16x16xf32, #tpu.memory_space<vmem>>, vector<1x4x16x16xf32>
    %1 = vector.shape_cast %0 : vector<1x4x16x16xf32> to vector<4x16x16xf32>
    %cst = arith.constant 0.000000e+00 : f32
    %2 = vector.broadcast %cst : f32 to vector<4x1x16xf32>
    %3 = tpu.concatenate %2, %1, %2 in 1 : vector<4x1x16xf32>, vector<4x16x16xf32>, vector<4x1x16xf32> -> vector<4x18x16xf32>
    %cst_3 = arith.constant 0.000000e+00 : f32
    %4 = vector.broadcast %cst_3 : f32 to vector<4x18x1xf32>
    %5 = tpu.concatenate %4, %3, %4 in 2 : vector<4x18x1xf32>, vector<4x18x16xf32>, vector<4x18x1xf32> -> vector<4x18x18xf32>
    %6 = vector.extract_strided_slice %5 {offsets = [0, 0, 0], sizes = [1, 16, 16], strides = [1, 1, 1]} : vector<4x18x18xf32> to vector<1x16x16xf32>
    %7 = vector.shape_cast %6 : vector<1x16x16xf32> to vector<16x16xf32>
    %8 = vector.extract_strided_slice %5 {offsets = [0, 0, 1], sizes = [1, 16, 16], strides = [1, 1, 1]} : vector<4x18x18xf32> to vector<1x16x16xf32>
    %9 = vector.shape_cast %8 : vector<1x16x16xf32> to vector<16x16xf32>
    %10 = vector.extract_strided_slice %5 {offsets = [0, 0, 2], sizes = [1, 16, 16], strides = [1, 1, 1]} : vector<4x18x18xf32> to vector<1x16x16xf32>
    %11 = vector.shape_cast %10 : vector<1x16x16xf32> to vector<16x16xf32>
    %12 = vector.extract_strided_slice %5 {offsets = [0, 1, 0], sizes = [1, 16, 16], strides = [1, 1, 1]} : vector<4x18x18xf32> to vector<1x16x16xf32>
    %13 = vector.shape_cast %12 : vector<1x16x16xf32> to vector<16x16xf32>
    %14 = vector.extract_strided_slice %5 {offsets = [0, 1, 1], sizes = [1, 16, 16], strides = [1, 1, 1]} : vector<4x18x18xf32> to vector<1x16x16xf32>
    %15 = vector.shape_cast %14 : vector<1x16x16xf32> to vector<16x16xf32>
    %16 = vector.extract_strided_slice %5 {offsets = [0, 1, 2], sizes = [1, 16, 16], strides = [1, 1, 1]} : vector<4x18x18xf32> to vector<1x16x16xf32>
    %17 = vector.shape_cast %16 : vector<1x16x16xf32> to vector<16x16xf32>
    %18 = vector.extract_strided_slice %5 {offsets = [0, 2, 0], sizes = [1, 16, 16], strides = [1, 1, 1]} : vector<4x18x18xf32> to vector<1x16x16xf32>
    %19 = vector.shape_cast %18 : vector<1x16x16xf32> to vector<16x16xf32>
    %20 = vector.extract_strided_slice %5 {offsets = [0, 2, 1], sizes = [1, 16, 16], strides = [1, 1, 1]} : vector<4x18x18xf32> to vector<1x16x16xf32>
    %21 = vector.shape_cast %20 : vector<1x16x16xf32> to vector<16x16xf32>
    %22 = vector.extract_strided_slice %5 {offsets = [0, 2, 2], sizes = [1, 16, 16], strides = [1, 1, 1]} : vector<4x18x18xf32> to vector<1x16x16xf32>
    %23 = vector.shape_cast %22 : vector<1x16x16xf32> to vector<16x16xf32>
    %24 = vector.extract_strided_slice %5 {offsets = [1, 0, 0], sizes = [1, 16, 16], strides = [1, 1, 1]} : vector<4x18x18xf32> to vector<1x16x16xf32>
    %25 = vector.shape_cast %24 : vector<1x16x16xf32> to vector<16x16xf32>
    %26 = vector.extract_strided_slice %5 {offsets = [1, 0, 1], sizes = [1, 16, 16], strides = [1, 1, 1]} : vector<4x18x18xf32> to vector<1x16x16xf32>
    %27 = vector.shape_cast %26 : vector<1x16x16xf32> to vector<16x16xf32>
    %28 = vector.extract_strided_slice %5 {offsets = [1, 0, 2], sizes = [1, 16, 16], strides = [1, 1, 1]} : vector<4x18x18xf32> to vector<1x16x16xf32>
    %29 = vector.shape_cast %28 : vector<1x16x16xf32> to vector<16x16xf32>
    %30 = vector.extract_strided_slice %5 {offsets = [1, 1, 0], sizes = [1, 16, 16], strides = [1, 1, 1]} : vector<4x18x18xf32> to vector<1x16x16xf32>
    %31 = vector.shape_cast %30 : vector<1x16x16xf32> to vector<16x16xf32>
    %32 = vector.extract_strided_slice %5 {offsets = [1, 1, 1], sizes = [1, 16, 16], strides = [1, 1, 1]} : vector<4x18x18xf32> to vector<1x16x16xf32>
    %33 = vector.shape_cast %32 : vector<1x16x16xf32> to vector<16x16xf32>
    %34 = vector.extract_strided_slice %5 {offsets = [1, 1, 2], sizes = [1, 16, 16], strides = [1, 1, 1]} : vector<4x18x18xf32> to vector<1x16x16xf32>
    %35 = vector.shape_cast %34 : vector<1x16x16xf32> to vector<16x16xf32>
    %36 = vector.extract_strided_slice %5 {offsets = [1, 2, 0], sizes = [1, 16, 16], strides = [1, 1, 1]} : vector<4x18x18xf32> to vector<1x16x16xf32>
    %37 = vector.shape_cast %36 : vector<1x16x16xf32> to vector<16x16xf32>
    %38 = vector.extract_strided_slice %5 {offsets = [1, 2, 1], sizes = [1, 16, 16], strides = [1, 1, 1]} : vector<4x18x18xf32> to vector<1x16x16xf32>
    %39 = vector.shape_cast %38 : vector<1x16x16xf32> to vector<16x16xf32>
    %40 = vector.extract_strided_slice %5 {offsets = [1, 2, 2], sizes = [1, 16, 16], strides = [1, 1, 1]} : vector<4x18x18xf32> to vector<1x16x16xf32>
    %41 = vector.shape_cast %40 : vector<1x16x16xf32> to vector<16x16xf32>
    %42 = vector.extract_strided_slice %5 {offsets = [2, 0, 0], sizes = [1, 16, 16], strides = [1, 1, 1]} : vector<4x18x18xf32> to vector<1x16x16xf32>
    %43 = vector.shape_cast %42 : vector<1x16x16xf32> to vector<16x16xf32>
    %44 = vector.extract_strided_slice %5 {offsets = [2, 0, 1], sizes = [1, 16, 16], strides = [1, 1, 1]} : vector<4x18x18xf32> to vector<1x16x16xf32>
    %45 = vector.shape_cast %44 : vector<1x16x16xf32> to vector<16x16xf32>
    %46 = vector.extract_strided_slice %5 {offsets = [2, 0, 2], sizes = [1, 16, 16], strides = [1, 1, 1]} : vector<4x18x18xf32> to vector<1x16x16xf32>
    %47 = vector.shape_cast %46 : vector<1x16x16xf32> to vector<16x16xf32>
    %48 = vector.extract_strided_slice %5 {offsets = [2, 1, 0], sizes = [1, 16, 16], strides = [1, 1, 1]} : vector<4x18x18xf32> to vector<1x16x16xf32>
    %49 = vector.shape_cast %48 : vector<1x16x16xf32> to vector<16x16xf32>
    %50 = vector.extract_strided_slice %5 {offsets = [2, 1, 1], sizes = [1, 16, 16], strides = [1, 1, 1]} : vector<4x18x18xf32> to vector<1x16x16xf32>
    %51 = vector.shape_cast %50 : vector<1x16x16xf32> to vector<16x16xf32>
    %52 = vector.extract_strided_slice %5 {offsets = [2, 1, 2], sizes = [1, 16, 16], strides = [1, 1, 1]} : vector<4x18x18xf32> to vector<1x16x16xf32>
    %53 = vector.shape_cast %52 : vector<1x16x16xf32> to vector<16x16xf32>
    %54 = vector.extract_strided_slice %5 {offsets = [2, 2, 0], sizes = [1, 16, 16], strides = [1, 1, 1]} : vector<4x18x18xf32> to vector<1x16x16xf32>
    %55 = vector.shape_cast %54 : vector<1x16x16xf32> to vector<16x16xf32>
    %56 = vector.extract_strided_slice %5 {offsets = [2, 2, 1], sizes = [1, 16, 16], strides = [1, 1, 1]} : vector<4x18x18xf32> to vector<1x16x16xf32>
    %57 = vector.shape_cast %56 : vector<1x16x16xf32> to vector<16x16xf32>
    %58 = vector.extract_strided_slice %5 {offsets = [2, 2, 2], sizes = [1, 16, 16], strides = [1, 1, 1]} : vector<4x18x18xf32> to vector<1x16x16xf32>
    %59 = vector.shape_cast %58 : vector<1x16x16xf32> to vector<16x16xf32>
    %60 = vector.extract_strided_slice %5 {offsets = [3, 0, 0], sizes = [1, 16, 16], strides = [1, 1, 1]} : vector<4x18x18xf32> to vector<1x16x16xf32>
    %61 = vector.shape_cast %60 : vector<1x16x16xf32> to vector<16x16xf32>
    %62 = vector.extract_strided_slice %5 {offsets = [3, 0, 1], sizes = [1, 16, 16], strides = [1, 1, 1]} : vector<4x18x18xf32> to vector<1x16x16xf32>
    %63 = vector.shape_cast %62 : vector<1x16x16xf32> to vector<16x16xf32>
    %64 = vector.extract_strided_slice %5 {offsets = [3, 0, 2], sizes = [1, 16, 16], strides = [1, 1, 1]} : vector<4x18x18xf32> to vector<1x16x16xf32>
    %65 = vector.shape_cast %64 : vector<1x16x16xf32> to vector<16x16xf32>
    %66 = vector.extract_strided_slice %5 {offsets = [3, 1, 0], sizes = [1, 16, 16], strides = [1, 1, 1]} : vector<4x18x18xf32> to vector<1x16x16xf32>
    %67 = vector.shape_cast %66 : vector<1x16x16xf32> to vector<16x16xf32>
    %68 = vector.extract_strided_slice %5 {offsets = [3, 1, 1], sizes = [1, 16, 16], strides = [1, 1, 1]} : vector<4x18x18xf32> to vector<1x16x16xf32>
    %69 = vector.shape_cast %68 : vector<1x16x16xf32> to vector<16x16xf32>
    %70 = vector.extract_strided_slice %5 {offsets = [3, 1, 2], sizes = [1, 16, 16], strides = [1, 1, 1]} : vector<4x18x18xf32> to vector<1x16x16xf32>
    %71 = vector.shape_cast %70 : vector<1x16x16xf32> to vector<16x16xf32>
    %72 = vector.extract_strided_slice %5 {offsets = [3, 2, 0], sizes = [1, 16, 16], strides = [1, 1, 1]} : vector<4x18x18xf32> to vector<1x16x16xf32>
    %73 = vector.shape_cast %72 : vector<1x16x16xf32> to vector<16x16xf32>
    %74 = vector.extract_strided_slice %5 {offsets = [3, 2, 1], sizes = [1, 16, 16], strides = [1, 1, 1]} : vector<4x18x18xf32> to vector<1x16x16xf32>
    %75 = vector.shape_cast %74 : vector<1x16x16xf32> to vector<16x16xf32>
    %76 = vector.extract_strided_slice %5 {offsets = [3, 2, 2], sizes = [1, 16, 16], strides = [1, 1, 1]} : vector<4x18x18xf32> to vector<1x16x16xf32>
    %77 = vector.shape_cast %76 : vector<1x16x16xf32> to vector<16x16xf32>
    %c0_4 = arith.constant 0 : index
    %78 = memref.load %arg3[%c0_4] : memref<4xf32, #tpu.memory_space<smem>>
    %79 = vector.broadcast %78 : f32 to vector<16x16xf32>
    %c0_5 = arith.constant 0 : index
    %80 = memref.load %arg2[%c0_5] : memref<256xf32, #tpu.memory_space<smem>>
    %81 = vector.broadcast %80 : f32 to vector<16x16xf32>
    %82 = arith.mulf %81, %7 : vector<16x16xf32>
    %83 = arith.addf %79, %82 : vector<16x16xf32>
    %c1 = arith.constant 1 : index
    %84 = memref.load %arg2[%c1] : memref<256xf32, #tpu.memory_space<smem>>
    %85 = vector.broadcast %84 : f32 to vector<16x16xf32>
    %86 = arith.mulf %85, %25 : vector<16x16xf32>
    %87 = arith.addf %83, %86 : vector<16x16xf32>
    %c2 = arith.constant 2 : index
    %88 = memref.load %arg2[%c2] : memref<256xf32, #tpu.memory_space<smem>>
    %89 = vector.broadcast %88 : f32 to vector<16x16xf32>
    %90 = arith.mulf %89, %43 : vector<16x16xf32>
    %91 = arith.addf %87, %90 : vector<16x16xf32>
    %c3 = arith.constant 3 : index
    %92 = memref.load %arg2[%c3] : memref<256xf32, #tpu.memory_space<smem>>
    %93 = vector.broadcast %92 : f32 to vector<16x16xf32>
    %94 = arith.mulf %93, %61 : vector<16x16xf32>
    %95 = arith.addf %91, %94 : vector<16x16xf32>
    %c16 = arith.constant 16 : index
    %96 = memref.load %arg2[%c16] : memref<256xf32, #tpu.memory_space<smem>>
    %97 = vector.broadcast %96 : f32 to vector<16x16xf32>
    %98 = arith.mulf %97, %9 : vector<16x16xf32>
    %99 = arith.addf %95, %98 : vector<16x16xf32>
    %c17 = arith.constant 17 : index
    %100 = memref.load %arg2[%c17] : memref<256xf32, #tpu.memory_space<smem>>
    %101 = vector.broadcast %100 : f32 to vector<16x16xf32>
    %102 = arith.mulf %101, %27 : vector<16x16xf32>
    %103 = arith.addf %99, %102 : vector<16x16xf32>
    %c18 = arith.constant 18 : index
    %104 = memref.load %arg2[%c18] : memref<256xf32, #tpu.memory_space<smem>>
    %105 = vector.broadcast %104 : f32 to vector<16x16xf32>
    %106 = arith.mulf %105, %45 : vector<16x16xf32>
    %107 = arith.addf %103, %106 : vector<16x16xf32>
    %c19 = arith.constant 19 : index
    %108 = memref.load %arg2[%c19] : memref<256xf32, #tpu.memory_space<smem>>
    %109 = vector.broadcast %108 : f32 to vector<16x16xf32>
    %110 = arith.mulf %109, %63 : vector<16x16xf32>
    %111 = arith.addf %107, %110 : vector<16x16xf32>
    %c32 = arith.constant 32 : index
    %112 = memref.load %arg2[%c32] : memref<256xf32, #tpu.memory_space<smem>>
    %113 = vector.broadcast %112 : f32 to vector<16x16xf32>
    %114 = arith.mulf %113, %13 : vector<16x16xf32>
    %115 = arith.addf %111, %114 : vector<16x16xf32>
    %c33 = arith.constant 33 : index
    %116 = memref.load %arg2[%c33] : memref<256xf32, #tpu.memory_space<smem>>
    %117 = vector.broadcast %116 : f32 to vector<16x16xf32>
    %118 = arith.mulf %117, %31 : vector<16x16xf32>
    %119 = arith.addf %115, %118 : vector<16x16xf32>
    %c34 = arith.constant 34 : index
    %120 = memref.load %arg2[%c34] : memref<256xf32, #tpu.memory_space<smem>>
    %121 = vector.broadcast %120 : f32 to vector<16x16xf32>
    %122 = arith.mulf %121, %49 : vector<16x16xf32>
    %123 = arith.addf %119, %122 : vector<16x16xf32>
    %c35 = arith.constant 35 : index
    %124 = memref.load %arg2[%c35] : memref<256xf32, #tpu.memory_space<smem>>
    %125 = vector.broadcast %124 : f32 to vector<16x16xf32>
    %126 = arith.mulf %125, %67 : vector<16x16xf32>
    %127 = arith.addf %123, %126 : vector<16x16xf32>
    %c48 = arith.constant 48 : index
    %128 = memref.load %arg2[%c48] : memref<256xf32, #tpu.memory_space<smem>>
    %129 = vector.broadcast %128 : f32 to vector<16x16xf32>
    %130 = arith.mulf %129, %15 : vector<16x16xf32>
    %131 = arith.addf %127, %130 : vector<16x16xf32>
    %c49 = arith.constant 49 : index
    %132 = memref.load %arg2[%c49] : memref<256xf32, #tpu.memory_space<smem>>
    %133 = vector.broadcast %132 : f32 to vector<16x16xf32>
    %134 = arith.mulf %133, %33 : vector<16x16xf32>
    %135 = arith.addf %131, %134 : vector<16x16xf32>
    %c50 = arith.constant 50 : index
    %136 = memref.load %arg2[%c50] : memref<256xf32, #tpu.memory_space<smem>>
    %137 = vector.broadcast %136 : f32 to vector<16x16xf32>
    %138 = arith.mulf %137, %51 : vector<16x16xf32>
    %139 = arith.addf %135, %138 : vector<16x16xf32>
    %c51 = arith.constant 51 : index
    %140 = memref.load %arg2[%c51] : memref<256xf32, #tpu.memory_space<smem>>
    %141 = vector.broadcast %140 : f32 to vector<16x16xf32>
    %142 = arith.mulf %141, %69 : vector<16x16xf32>
    %143 = arith.addf %139, %142 : vector<16x16xf32>
    %c0_6 = arith.constant 0 : index
    %c0_7 = arith.constant 0 : index
    %c0_8 = arith.constant 0 : index
    %c0_9 = arith.constant 0 : index
    %c0_10 = arith.constant 0 : index
    %144 = vector.load %arg4[%c0_6, %c0_7, %c0_8, %c0_9, %c0_10] : memref<1x4x4x16x16xf32, #tpu.memory_space<vmem>>, vector<1x1x1x16x16xf32>
    %145 = vector.shape_cast %144 : vector<1x1x1x16x16xf32> to vector<16x16xf32>
    %146 = vector.shape_cast %143 : vector<16x16xf32> to vector<1x1x1x16x16xf32>
    tpu.vector_store %arg4[%c0_6, %c0_7, %c0_8, %c0_9, %c0_10], %146 {strides = array<i32>} : memref<1x4x4x16x16xf32, #tpu.memory_space<vmem>>, vector<1x1x1x16x16xf32>,
    %c1_11 = arith.constant 1 : index
    %147 = memref.load %arg3[%c1_11] : memref<4xf32, #tpu.memory_space<smem>>
    %148 = vector.broadcast %147 : f32 to vector<16x16xf32>
    %c4 = arith.constant 4 : index
    %149 = memref.load %arg2[%c4] : memref<256xf32, #tpu.memory_space<smem>>
    %150 = vector.broadcast %149 : f32 to vector<16x16xf32>
    %151 = arith.mulf %150, %7 : vector<16x16xf32>
    %152 = arith.addf %148, %151 : vector<16x16xf32>
    %c5 = arith.constant 5 : index
    %153 = memref.load %arg2[%c5] : memref<256xf32, #tpu.memory_space<smem>>
    %154 = vector.broadcast %153 : f32 to vector<16x16xf32>
    %155 = arith.mulf %154, %25 : vector<16x16xf32>
    %156 = arith.addf %152, %155 : vector<16x16xf32>
    %c6 = arith.constant 6 : index
    %157 = memref.load %arg2[%c6] : memref<256xf32, #tpu.memory_space<smem>>
    %158 = vector.broadcast %157 : f32 to vector<16x16xf32>
    %159 = arith.mulf %158, %43 : vector<16x16xf32>
    %160 = arith.addf %156, %159 : vector<16x16xf32>
    %c7 = arith.constant 7 : index
    %161 = memref.load %arg2[%c7] : memref<256xf32, #tpu.memory_space<smem>>
    %162 = vector.broadcast %161 : f32 to vector<16x16xf32>
    %163 = arith.mulf %162, %61 : vector<16x16xf32>
    %164 = arith.addf %160, %163 : vector<16x16xf32>
    %c20 = arith.constant 20 : index
    %165 = memref.load %arg2[%c20] : memref<256xf32, #tpu.memory_space<smem>>
    %166 = vector.broadcast %165 : f32 to vector<16x16xf32>
    %167 = arith.mulf %166, %9 : vector<16x16xf32>
    %168 = arith.addf %164, %167 : vector<16x16xf32>
    %c21 = arith.constant 21 : index
    %169 = memref.load %arg2[%c21] : memref<256xf32, #tpu.memory_space<smem>>
    %170 = vector.broadcast %169 : f32 to vector<16x16xf32>
    %171 = arith.mulf %170, %27 : vector<16x16xf32>
    %172 = arith.addf %168, %171 : vector<16x16xf32>
    %c22 = arith.constant 22 : index
    %173 = memref.load %arg2[%c22] : memref<256xf32, #tpu.memory_space<smem>>
    %174 = vector.broadcast %173 : f32 to vector<16x16xf32>
    %175 = arith.mulf %174, %45 : vector<16x16xf32>
    %176 = arith.addf %172, %175 : vector<16x16xf32>
    %c23 = arith.constant 23 : index
    %177 = memref.load %arg2[%c23] : memref<256xf32, #tpu.memory_space<smem>>
    %178 = vector.broadcast %177 : f32 to vector<16x16xf32>
    %179 = arith.mulf %178, %63 : vector<16x16xf32>
    %180 = arith.addf %176, %179 : vector<16x16xf32>
    %c36 = arith.constant 36 : index
    %181 = memref.load %arg2[%c36] : memref<256xf32, #tpu.memory_space<smem>>
    %182 = vector.broadcast %181 : f32 to vector<16x16xf32>
    %183 = arith.mulf %182, %13 : vector<16x16xf32>
    %184 = arith.addf %180, %183 : vector<16x16xf32>
    %c37 = arith.constant 37 : index
    %185 = memref.load %arg2[%c37] : memref<256xf32, #tpu.memory_space<smem>>
    %186 = vector.broadcast %185 : f32 to vector<16x16xf32>
    %187 = arith.mulf %186, %31 : vector<16x16xf32>
    %188 = arith.addf %184, %187 : vector<16x16xf32>
    %c38 = arith.constant 38 : index
    %189 = memref.load %arg2[%c38] : memref<256xf32, #tpu.memory_space<smem>>
    %190 = vector.broadcast %189 : f32 to vector<16x16xf32>
    %191 = arith.mulf %190, %49 : vector<16x16xf32>
    %192 = arith.addf %188, %191 : vector<16x16xf32>
    %c39 = arith.constant 39 : index
    %193 = memref.load %arg2[%c39] : memref<256xf32, #tpu.memory_space<smem>>
    %194 = vector.broadcast %193 : f32 to vector<16x16xf32>
    %195 = arith.mulf %194, %67 : vector<16x16xf32>
    %196 = arith.addf %192, %195 : vector<16x16xf32>
    %c52 = arith.constant 52 : index
    %197 = memref.load %arg2[%c52] : memref<256xf32, #tpu.memory_space<smem>>
    %198 = vector.broadcast %197 : f32 to vector<16x16xf32>
    %199 = arith.mulf %198, %15 : vector<16x16xf32>
    %200 = arith.addf %196, %199 : vector<16x16xf32>
    %c53 = arith.constant 53 : index
    %201 = memref.load %arg2[%c53] : memref<256xf32, #tpu.memory_space<smem>>
    %202 = vector.broadcast %201 : f32 to vector<16x16xf32>
    %203 = arith.mulf %202, %33 : vector<16x16xf32>
    %204 = arith.addf %200, %203 : vector<16x16xf32>
    %c54 = arith.constant 54 : index
    %205 = memref.load %arg2[%c54] : memref<256xf32, #tpu.memory_space<smem>>
    %206 = vector.broadcast %205 : f32 to vector<16x16xf32>
    %207 = arith.mulf %206, %51 : vector<16x16xf32>
    %208 = arith.addf %204, %207 : vector<16x16xf32>
    %c55 = arith.constant 55 : index
    %209 = memref.load %arg2[%c55] : memref<256xf32, #tpu.memory_space<smem>>
    %210 = vector.broadcast %209 : f32 to vector<16x16xf32>
    %211 = arith.mulf %210, %69 : vector<16x16xf32>
    %212 = arith.addf %208, %211 : vector<16x16xf32>
    %c0_12 = arith.constant 0 : index
    %c0_13 = arith.constant 0 : index
    %c1_14 = arith.constant 1 : index
    %c0_15 = arith.constant 0 : index
    %c0_16 = arith.constant 0 : index
    %213 = vector.load %arg4[%c0_12, %c0_13, %c1_14, %c0_15, %c0_16] : memref<1x4x4x16x16xf32, #tpu.memory_space<vmem>>, vector<1x1x1x16x16xf32>
    %214 = vector.shape_cast %213 : vector<1x1x1x16x16xf32> to vector<16x16xf32>
    %215 = vector.shape_cast %212 : vector<16x16xf32> to vector<1x1x1x16x16xf32>
    tpu.vector_store %arg4[%c0_12, %c0_13, %c1_14, %c0_15, %c0_16], %215 {strides = array<i32>} : memref<1x4x4x16x16xf32, #tpu.memory_space<vmem>>, vector<1x1x1x16x16xf32>,
    %c2_17 = arith.constant 2 : index
    %216 = memref.load %arg3[%c2_17] : memref<4xf32, #tpu.memory_space<smem>>
    %217 = vector.broadcast %216 : f32 to vector<16x16xf32>
    %c8 = arith.constant 8 : index
    %218 = memref.load %arg2[%c8] : memref<256xf32, #tpu.memory_space<smem>>
    %219 = vector.broadcast %218 : f32 to vector<16x16xf32>
    %220 = arith.mulf %219, %7 : vector<16x16xf32>
    %221 = arith.addf %217, %220 : vector<16x16xf32>
    %c9 = arith.constant 9 : index
    %222 = memref.load %arg2[%c9] : memref<256xf32, #tpu.memory_space<smem>>
    %223 = vector.broadcast %222 : f32 to vector<16x16xf32>
    %224 = arith.mulf %223, %25 : vector<16x16xf32>
    %225 = arith.addf %221, %224 : vector<16x16xf32>
    %c10 = arith.constant 10 : index
    %226 = memref.load %arg2[%c10] : memref<256xf32, #tpu.memory_space<smem>>
    %227 = vector.broadcast %226 : f32 to vector<16x16xf32>
    %228 = arith.mulf %227, %43 : vector<16x16xf32>
    %229 = arith.addf %225, %228 : vector<16x16xf32>
    %c11 = arith.constant 11 : index
    %230 = memref.load %arg2[%c11] : memref<256xf32, #tpu.memory_space<smem>>
    %231 = vector.broadcast %230 : f32 to vector<16x16xf32>
    %232 = arith.mulf %231, %61 : vector<16x16xf32>
    %233 = arith.addf %229, %232 : vector<16x16xf32>
    %c24 = arith.constant 24 : index
    %234 = memref.load %arg2[%c24] : memref<256xf32, #tpu.memory_space<smem>>
    %235 = vector.broadcast %234 : f32 to vector<16x16xf32>
    %236 = arith.mulf %235, %9 : vector<16x16xf32>
    %237 = arith.addf %233, %236 : vector<16x16xf32>
    %c25 = arith.constant 25 : index
    %238 = memref.load %arg2[%c25] : memref<256xf32, #tpu.memory_space<smem>>
    %239 = vector.broadcast %238 : f32 to vector<16x16xf32>
    %240 = arith.mulf %239, %27 : vector<16x16xf32>
    %241 = arith.addf %237, %240 : vector<16x16xf32>
    %c26 = arith.constant 26 : index
    %242 = memref.load %arg2[%c26] : memref<256xf32, #tpu.memory_space<smem>>
    %243 = vector.broadcast %242 : f32 to vector<16x16xf32>
    %244 = arith.mulf %243, %45 : vector<16x16xf32>
    %245 = arith.addf %241, %244 : vector<16x16xf32>
    %c27 = arith.constant 27 : index
    %246 = memref.load %arg2[%c27] : memref<256xf32, #tpu.memory_space<smem>>
    %247 = vector.broadcast %246 : f32 to vector<16x16xf32>
    %248 = arith.mulf %247, %63 : vector<16x16xf32>
    %249 = arith.addf %245, %248 : vector<16x16xf32>
    %c40 = arith.constant 40 : index
    %250 = memref.load %arg2[%c40] : memref<256xf32, #tpu.memory_space<smem>>
    %251 = vector.broadcast %250 : f32 to vector<16x16xf32>
    %252 = arith.mulf %251, %13 : vector<16x16xf32>
    %253 = arith.addf %249, %252 : vector<16x16xf32>
    %c41 = arith.constant 41 : index
    %254 = memref.load %arg2[%c41] : memref<256xf32, #tpu.memory_space<smem>>
    %255 = vector.broadcast %254 : f32 to vector<16x16xf32>
    %256 = arith.mulf %255, %31 : vector<16x16xf32>
    %257 = arith.addf %253, %256 : vector<16x16xf32>
    %c42 = arith.constant 42 : index
    %258 = memref.load %arg2[%c42] : memref<256xf32, #tpu.memory_space<smem>>
    %259 = vector.broadcast %258 : f32 to vector<16x16xf32>
    %260 = arith.mulf %259, %49 : vector<16x16xf32>
    %261 = arith.addf %257, %260 : vector<16x16xf32>
    %c43 = arith.constant 43 : index
    %262 = memref.load %arg2[%c43] : memref<256xf32, #tpu.memory_space<smem>>
    %263 = vector.broadcast %262 : f32 to vector<16x16xf32>
    %264 = arith.mulf %263, %67 : vector<16x16xf32>
    %265 = arith.addf %261, %264 : vector<16x16xf32>
    %c56 = arith.constant 56 : index
    %266 = memref.load %arg2[%c56] : memref<256xf32, #tpu.memory_space<smem>>
    %267 = vector.broadcast %266 : f32 to vector<16x16xf32>
    %268 = arith.mulf %267, %15 : vector<16x16xf32>
    %269 = arith.addf %265, %268 : vector<16x16xf32>
    %c57 = arith.constant 57 : index
    %270 = memref.load %arg2[%c57] : memref<256xf32, #tpu.memory_space<smem>>
    %271 = vector.broadcast %270 : f32 to vector<16x16xf32>
    %272 = arith.mulf %271, %33 : vector<16x16xf32>
    %273 = arith.addf %269, %272 : vector<16x16xf32>
    %c58 = arith.constant 58 : index
    %274 = memref.load %arg2[%c58] : memref<256xf32, #tpu.memory_space<smem>>
    %275 = vector.broadcast %274 : f32 to vector<16x16xf32>
    %276 = arith.mulf %275, %51 : vector<16x16xf32>
    %277 = arith.addf %273, %276 : vector<16x16xf32>
    %c59 = arith.constant 59 : index
    %278 = memref.load %arg2[%c59] : memref<256xf32, #tpu.memory_space<smem>>
    %279 = vector.broadcast %278 : f32 to vector<16x16xf32>
    %280 = arith.mulf %279, %69 : vector<16x16xf32>
    %281 = arith.addf %277, %280 : vector<16x16xf32>
    %c0_18 = arith.constant 0 : index
    %c0_19 = arith.constant 0 : index
    %c2_20 = arith.constant 2 : index
    %c0_21 = arith.constant 0 : index
    %c0_22 = arith.constant 0 : index
    %282 = vector.load %arg4[%c0_18, %c0_19, %c2_20, %c0_21, %c0_22] : memref<1x4x4x16x16xf32, #tpu.memory_space<vmem>>, vector<1x1x1x16x16xf32>
    %283 = vector.shape_cast %282 : vector<1x1x1x16x16xf32> to vector<16x16xf32>
    %284 = vector.shape_cast %281 : vector<16x16xf32> to vector<1x1x1x16x16xf32>
    tpu.vector_store %arg4[%c0_18, %c0_19, %c2_20, %c0_21, %c0_22], %284 {strides = array<i32>} : memref<1x4x4x16x16xf32, #tpu.memory_space<vmem>>, vector<1x1x1x16x16xf32>,
    %c3_23 = arith.constant 3 : index
    %285 = memref.load %arg3[%c3_23] : memref<4xf32, #tpu.memory_space<smem>>
    %286 = vector.broadcast %285 : f32 to vector<16x16xf32>
    %c12 = arith.constant 12 : index
    %287 = memref.load %arg2[%c12] : memref<256xf32, #tpu.memory_space<smem>>
    %288 = vector.broadcast %287 : f32 to vector<16x16xf32>
    %289 = arith.mulf %288, %7 : vector<16x16xf32>
    %290 = arith.addf %286, %289 : vector<16x16xf32>
    %c13 = arith.constant 13 : index
    %291 = memref.load %arg2[%c13] : memref<256xf32, #tpu.memory_space<smem>>
    %292 = vector.broadcast %291 : f32 to vector<16x16xf32>
    %293 = arith.mulf %292, %25 : vector<16x16xf32>
    %294 = arith.addf %290, %293 : vector<16x16xf32>
    %c14 = arith.constant 14 : index
    %295 = memref.load %arg2[%c14] : memref<256xf32, #tpu.memory_space<smem>>
    %296 = vector.broadcast %295 : f32 to vector<16x16xf32>
    %297 = arith.mulf %296, %43 : vector<16x16xf32>
    %298 = arith.addf %294, %297 : vector<16x16xf32>
    %c15 = arith.constant 15 : index
    %299 = memref.load %arg2[%c15] : memref<256xf32, #tpu.memory_space<smem>>
    %300 = vector.broadcast %299 : f32 to vector<16x16xf32>
    %301 = arith.mulf %300, %61 : vector<16x16xf32>
    %302 = arith.addf %298, %301 : vector<16x16xf32>
    %c28 = arith.constant 28 : index
    %303 = memref.load %arg2[%c28] : memref<256xf32, #tpu.memory_space<smem>>
    %304 = vector.broadcast %303 : f32 to vector<16x16xf32>
    %305 = arith.mulf %304, %9 : vector<16x16xf32>
    %306 = arith.addf %302, %305 : vector<16x16xf32>
    %c29 = arith.constant 29 : index
    %307 = memref.load %arg2[%c29] : memref<256xf32, #tpu.memory_space<smem>>
    %308 = vector.broadcast %307 : f32 to vector<16x16xf32>
    %309 = arith.mulf %308, %27 : vector<16x16xf32>
    %310 = arith.addf %306, %309 : vector<16x16xf32>
    %c30 = arith.constant 30 : index
    %311 = memref.load %arg2[%c30] : memref<256xf32, #tpu.memory_space<smem>>
    %312 = vector.broadcast %311 : f32 to vector<16x16xf32>
    %313 = arith.mulf %312, %45 : vector<16x16xf32>
    %314 = arith.addf %310, %313 : vector<16x16xf32>
    %c31 = arith.constant 31 : index
    %315 = memref.load %arg2[%c31] : memref<256xf32, #tpu.memory_space<smem>>
    %316 = vector.broadcast %315 : f32 to vector<16x16xf32>
    %317 = arith.mulf %316, %63 : vector<16x16xf32>
    %318 = arith.addf %314, %317 : vector<16x16xf32>
    %c44 = arith.constant 44 : index
    %319 = memref.load %arg2[%c44] : memref<256xf32, #tpu.memory_space<smem>>
    %320 = vector.broadcast %319 : f32 to vector<16x16xf32>
    %321 = arith.mulf %320, %13 : vector<16x16xf32>
    %322 = arith.addf %318, %321 : vector<16x16xf32>
    %c45 = arith.constant 45 : index
    %323 = memref.load %arg2[%c45] : memref<256xf32, #tpu.memory_space<smem>>
    %324 = vector.broadcast %323 : f32 to vector<16x16xf32>
    %325 = arith.mulf %324, %31 : vector<16x16xf32>
    %326 = arith.addf %322, %325 : vector<16x16xf32>
    %c46 = arith.constant 46 : index
    %327 = memref.load %arg2[%c46] : memref<256xf32, #tpu.memory_space<smem>>
    %328 = vector.broadcast %327 : f32 to vector<16x16xf32>
    %329 = arith.mulf %328, %49 : vector<16x16xf32>
    %330 = arith.addf %326, %329 : vector<16x16xf32>
    %c47 = arith.constant 47 : index
    %331 = memref.load %arg2[%c47] : memref<256xf32, #tpu.memory_space<smem>>
    %332 = vector.broadcast %331 : f32 to vector<16x16xf32>
    %333 = arith.mulf %332, %67 : vector<16x16xf32>
    %334 = arith.addf %330, %333 : vector<16x16xf32>
    %c60 = arith.constant 60 : index
    %335 = memref.load %arg2[%c60] : memref<256xf32, #tpu.memory_space<smem>>
    %336 = vector.broadcast %335 : f32 to vector<16x16xf32>
    %337 = arith.mulf %336, %15 : vector<16x16xf32>
    %338 = arith.addf %334, %337 : vector<16x16xf32>
    %c61 = arith.constant 61 : index
    %339 = memref.load %arg2[%c61] : memref<256xf32, #tpu.memory_space<smem>>
    %340 = vector.broadcast %339 : f32 to vector<16x16xf32>
    %341 = arith.mulf %340, %33 : vector<16x16xf32>
    %342 = arith.addf %338, %341 : vector<16x16xf32>
    %c62 = arith.constant 62 : index
    %343 = memref.load %arg2[%c62] : memref<256xf32, #tpu.memory_space<smem>>
    %344 = vector.broadcast %343 : f32 to vector<16x16xf32>
    %345 = arith.mulf %344, %51 : vector<16x16xf32>
    %346 = arith.addf %342, %345 : vector<16x16xf32>
    %c63 = arith.constant 63 : index
    %347 = memref.load %arg2[%c63] : memref<256xf32, #tpu.memory_space<smem>>
    %348 = vector.broadcast %347 : f32 to vector<16x16xf32>
    %349 = arith.mulf %348, %69 : vector<16x16xf32>
    %350 = arith.addf %346, %349 : vector<16x16xf32>
    %c0_24 = arith.constant 0 : index
    %c0_25 = arith.constant 0 : index
    %c3_26 = arith.constant 3 : index
    %c0_27 = arith.constant 0 : index
    %c0_28 = arith.constant 0 : index
    %351 = vector.load %arg4[%c0_24, %c0_25, %c3_26, %c0_27, %c0_28] : memref<1x4x4x16x16xf32, #tpu.memory_space<vmem>>, vector<1x1x1x16x16xf32>
    %352 = vector.shape_cast %351 : vector<1x1x1x16x16xf32> to vector<16x16xf32>
    %353 = vector.shape_cast %350 : vector<16x16xf32> to vector<1x1x1x16x16xf32>
    tpu.vector_store %arg4[%c0_24, %c0_25, %c3_26, %c0_27, %c0_28], %353 {strides = array<i32>} : memref<1x4x4x16x16xf32, #tpu.memory_space<vmem>>, vector<1x1x1x16x16xf32>,
    %c0_29 = arith.constant 0 : index
    %354 = memref.load %arg3[%c0_29] : memref<4xf32, #tpu.memory_space<smem>>
    %355 = vector.broadcast %354 : f32 to vector<16x16xf32>
    %c64 = arith.constant 64 : index
    %356 = memref.load %arg2[%c64] : memref<256xf32, #tpu.memory_space<smem>>
    %357 = vector.broadcast %356 : f32 to vector<16x16xf32>
    %358 = arith.mulf %357, %9 : vector<16x16xf32>
    %359 = arith.addf %355, %358 : vector<16x16xf32>
    %c65 = arith.constant 65 : index
    %360 = memref.load %arg2[%c65] : memref<256xf32, #tpu.memory_space<smem>>
    %361 = vector.broadcast %360 : f32 to vector<16x16xf32>
    %362 = arith.mulf %361, %27 : vector<16x16xf32>
    %363 = arith.addf %359, %362 : vector<16x16xf32>
    %c66 = arith.constant 66 : index
    %364 = memref.load %arg2[%c66] : memref<256xf32, #tpu.memory_space<smem>>
    %365 = vector.broadcast %364 : f32 to vector<16x16xf32>
    %366 = arith.mulf %365, %45 : vector<16x16xf32>
    %367 = arith.addf %363, %366 : vector<16x16xf32>
    %c67 = arith.constant 67 : index
    %368 = memref.load %arg2[%c67] : memref<256xf32, #tpu.memory_space<smem>>
    %369 = vector.broadcast %368 : f32 to vector<16x16xf32>
    %370 = arith.mulf %369, %63 : vector<16x16xf32>
    %371 = arith.addf %367, %370 : vector<16x16xf32>
    %c80 = arith.constant 80 : index
    %372 = memref.load %arg2[%c80] : memref<256xf32, #tpu.memory_space<smem>>
    %373 = vector.broadcast %372 : f32 to vector<16x16xf32>
    %374 = arith.mulf %373, %11 : vector<16x16xf32>
    %375 = arith.addf %371, %374 : vector<16x16xf32>
    %c81 = arith.constant 81 : index
    %376 = memref.load %arg2[%c81] : memref<256xf32, #tpu.memory_space<smem>>
    %377 = vector.broadcast %376 : f32 to vector<16x16xf32>
    %378 = arith.mulf %377, %29 : vector<16x16xf32>
    %379 = arith.addf %375, %378 : vector<16x16xf32>
    %c82 = arith.constant 82 : index
    %380 = memref.load %arg2[%c82] : memref<256xf32, #tpu.memory_space<smem>>
    %381 = vector.broadcast %380 : f32 to vector<16x16xf32>
    %382 = arith.mulf %381, %47 : vector<16x16xf32>
    %383 = arith.addf %379, %382 : vector<16x16xf32>
    %c83 = arith.constant 83 : index
    %384 = memref.load %arg2[%c83] : memref<256xf32, #tpu.memory_space<smem>>
    %385 = vector.broadcast %384 : f32 to vector<16x16xf32>
    %386 = arith.mulf %385, %65 : vector<16x16xf32>
    %387 = arith.addf %383, %386 : vector<16x16xf32>
    %c96 = arith.constant 96 : index
    %388 = memref.load %arg2[%c96] : memref<256xf32, #tpu.memory_space<smem>>
    %389 = vector.broadcast %388 : f32 to vector<16x16xf32>
    %390 = arith.mulf %389, %15 : vector<16x16xf32>
    %391 = arith.addf %387, %390 : vector<16x16xf32>
    %c97 = arith.constant 97 : index
    %392 = memref.load %arg2[%c97] : memref<256xf32, #tpu.memory_space<smem>>
    %393 = vector.broadcast %392 : f32 to vector<16x16xf32>
    %394 = arith.mulf %393, %33 : vector<16x16xf32>
    %395 = arith.addf %391, %394 : vector<16x16xf32>
    %c98 = arith.constant 98 : index
    %396 = memref.load %arg2[%c98] : memref<256xf32, #tpu.memory_space<smem>>
    %397 = vector.broadcast %396 : f32 to vector<16x16xf32>
    %398 = arith.mulf %397, %51 : vector<16x16xf32>
    %399 = arith.addf %395, %398 : vector<16x16xf32>
    %c99 = arith.constant 99 : index
    %400 = memref.load %arg2[%c99] : memref<256xf32, #tpu.memory_space<smem>>
    %401 = vector.broadcast %400 : f32 to vector<16x16xf32>
    %402 = arith.mulf %401, %69 : vector<16x16xf32>
    %403 = arith.addf %399, %402 : vector<16x16xf32>
    %c112 = arith.constant 112 : index
    %404 = memref.load %arg2[%c112] : memref<256xf32, #tpu.memory_space<smem>>
    %405 = vector.broadcast %404 : f32 to vector<16x16xf32>
    %406 = arith.mulf %405, %17 : vector<16x16xf32>
    %407 = arith.addf %403, %406 : vector<16x16xf32>
    %c113 = arith.constant 113 : index
    %408 = memref.load %arg2[%c113] : memref<256xf32, #tpu.memory_space<smem>>
    %409 = vector.broadcast %408 : f32 to vector<16x16xf32>
    %410 = arith.mulf %409, %35 : vector<16x16xf32>
    %411 = arith.addf %407, %410 : vector<16x16xf32>
    %c114 = arith.constant 114 : index
    %412 = memref.load %arg2[%c114] : memref<256xf32, #tpu.memory_space<smem>>
    %413 = vector.broadcast %412 : f32 to vector<16x16xf32>
    %414 = arith.mulf %413, %53 : vector<16x16xf32>
    %415 = arith.addf %411, %414 : vector<16x16xf32>
    %c115 = arith.constant 115 : index
    %416 = memref.load %arg2[%c115] : memref<256xf32, #tpu.memory_space<smem>>
    %417 = vector.broadcast %416 : f32 to vector<16x16xf32>
    %418 = arith.mulf %417, %71 : vector<16x16xf32>
    %419 = arith.addf %415, %418 : vector<16x16xf32>
    %c0_30 = arith.constant 0 : index
    %c1_31 = arith.constant 1 : index
    %c0_32 = arith.constant 0 : index
    %c0_33 = arith.constant 0 : index
    %c0_34 = arith.constant 0 : index
    %420 = vector.load %arg4[%c0_30, %c1_31, %c0_32, %c0_33, %c0_34] : memref<1x4x4x16x16xf32, #tpu.memory_space<vmem>>, vector<1x1x1x16x16xf32>
    %421 = vector.shape_cast %420 : vector<1x1x1x16x16xf32> to vector<16x16xf32>
    %422 = vector.shape_cast %419 : vector<16x16xf32> to vector<1x1x1x16x16xf32>
    tpu.vector_store %arg4[%c0_30, %c1_31, %c0_32, %c0_33, %c0_34], %422 {strides = array<i32>} : memref<1x4x4x16x16xf32, #tpu.memory_space<vmem>>, vector<1x1x1x16x16xf32>,
    %c1_35 = arith.constant 1 : index
    %423 = memref.load %arg3[%c1_35] : memref<4xf32, #tpu.memory_space<smem>>
    %424 = vector.broadcast %423 : f32 to vector<16x16xf32>
    %c68 = arith.constant 68 : index
    %425 = memref.load %arg2[%c68] : memref<256xf32, #tpu.memory_space<smem>>
    %426 = vector.broadcast %425 : f32 to vector<16x16xf32>
    %427 = arith.mulf %426, %9 : vector<16x16xf32>
    %428 = arith.addf %424, %427 : vector<16x16xf32>
    %c69 = arith.constant 69 : index
    %429 = memref.load %arg2[%c69] : memref<256xf32, #tpu.memory_space<smem>>
    %430 = vector.broadcast %429 : f32 to vector<16x16xf32>
    %431 = arith.mulf %430, %27 : vector<16x16xf32>
    %432 = arith.addf %428, %431 : vector<16x16xf32>
    %c70 = arith.constant 70 : index
    %433 = memref.load %arg2[%c70] : memref<256xf32, #tpu.memory_space<smem>>
    %434 = vector.broadcast %433 : f32 to vector<16x16xf32>
    %435 = arith.mulf %434, %45 : vector<16x16xf32>
    %436 = arith.addf %432, %435 : vector<16x16xf32>
    %c71 = arith.constant 71 : index
    %437 = memref.load %arg2[%c71] : memref<256xf32, #tpu.memory_space<smem>>
    %438 = vector.broadcast %437 : f32 to vector<16x16xf32>
    %439 = arith.mulf %438, %63 : vector<16x16xf32>
    %440 = arith.addf %436, %439 : vector<16x16xf32>
    %c84 = arith.constant 84 : index
    %441 = memref.load %arg2[%c84] : memref<256xf32, #tpu.memory_space<smem>>
    %442 = vector.broadcast %441 : f32 to vector<16x16xf32>
    %443 = arith.mulf %442, %11 : vector<16x16xf32>
    %444 = arith.addf %440, %443 : vector<16x16xf32>
    %c85 = arith.constant 85 : index
    %445 = memref.load %arg2[%c85] : memref<256xf32, #tpu.memory_space<smem>>
    %446 = vector.broadcast %445 : f32 to vector<16x16xf32>
    %447 = arith.mulf %446, %29 : vector<16x16xf32>
    %448 = arith.addf %444, %447 : vector<16x16xf32>
    %c86 = arith.constant 86 : index
    %449 = memref.load %arg2[%c86] : memref<256xf32, #tpu.memory_space<smem>>
    %450 = vector.broadcast %449 : f32 to vector<16x16xf32>
    %451 = arith.mulf %450, %47 : vector<16x16xf32>
    %452 = arith.addf %448, %451 : vector<16x16xf32>
    %c87 = arith.constant 87 : index
    %453 = memref.load %arg2[%c87] : memref<256xf32, #tpu.memory_space<smem>>
    %454 = vector.broadcast %453 : f32 to vector<16x16xf32>
    %455 = arith.mulf %454, %65 : vector<16x16xf32>
    %456 = arith.addf %452, %455 : vector<16x16xf32>
    %c100 = arith.constant 100 : index
    %457 = memref.load %arg2[%c100] : memref<256xf32, #tpu.memory_space<smem>>
    %458 = vector.broadcast %457 : f32 to vector<16x16xf32>
    %459 = arith.mulf %458, %15 : vector<16x16xf32>
    %460 = arith.addf %456, %459 : vector<16x16xf32>
    %c101 = arith.constant 101 : index
    %461 = memref.load %arg2[%c101] : memref<256xf32, #tpu.memory_space<smem>>
    %462 = vector.broadcast %461 : f32 to vector<16x16xf32>
    %463 = arith.mulf %462, %33 : vector<16x16xf32>
    %464 = arith.addf %460, %463 : vector<16x16xf32>
    %c102 = arith.constant 102 : index
    %465 = memref.load %arg2[%c102] : memref<256xf32, #tpu.memory_space<smem>>
    %466 = vector.broadcast %465 : f32 to vector<16x16xf32>
    %467 = arith.mulf %466, %51 : vector<16x16xf32>
    %468 = arith.addf %464, %467 : vector<16x16xf32>
    %c103 = arith.constant 103 : index
    %469 = memref.load %arg2[%c103] : memref<256xf32, #tpu.memory_space<smem>>
    %470 = vector.broadcast %469 : f32 to vector<16x16xf32>
    %471 = arith.mulf %470, %69 : vector<16x16xf32>
    %472 = arith.addf %468, %471 : vector<16x16xf32>
    %c116 = arith.constant 116 : index
    %473 = memref.load %arg2[%c116] : memref<256xf32, #tpu.memory_space<smem>>
    %474 = vector.broadcast %473 : f32 to vector<16x16xf32>
    %475 = arith.mulf %474, %17 : vector<16x16xf32>
    %476 = arith.addf %472, %475 : vector<16x16xf32>
    %c117 = arith.constant 117 : index
    %477 = memref.load %arg2[%c117] : memref<256xf32, #tpu.memory_space<smem>>
    %478 = vector.broadcast %477 : f32 to vector<16x16xf32>
    %479 = arith.mulf %478, %35 : vector<16x16xf32>
    %480 = arith.addf %476, %479 : vector<16x16xf32>
    %c118 = arith.constant 118 : index
    %481 = memref.load %arg2[%c118] : memref<256xf32, #tpu.memory_space<smem>>
    %482 = vector.broadcast %481 : f32 to vector<16x16xf32>
    %483 = arith.mulf %482, %53 : vector<16x16xf32>
    %484 = arith.addf %480, %483 : vector<16x16xf32>
    %c119 = arith.constant 119 : index
    %485 = memref.load %arg2[%c119] : memref<256xf32, #tpu.memory_space<smem>>
    %486 = vector.broadcast %485 : f32 to vector<16x16xf32>
    %487 = arith.mulf %486, %71 : vector<16x16xf32>
    %488 = arith.addf %484, %487 : vector<16x16xf32>
    %c0_36 = arith.constant 0 : index
    %c1_37 = arith.constant 1 : index
    %c1_38 = arith.constant 1 : index
    %c0_39 = arith.constant 0 : index
    %c0_40 = arith.constant 0 : index
    %489 = vector.load %arg4[%c0_36, %c1_37, %c1_38, %c0_39, %c0_40] : memref<1x4x4x16x16xf32, #tpu.memory_space<vmem>>, vector<1x1x1x16x16xf32>
    %490 = vector.shape_cast %489 : vector<1x1x1x16x16xf32> to vector<16x16xf32>
    %491 = vector.shape_cast %488 : vector<16x16xf32> to vector<1x1x1x16x16xf32>
    tpu.vector_store %arg4[%c0_36, %c1_37, %c1_38, %c0_39, %c0_40], %491 {strides = array<i32>} : memref<1x4x4x16x16xf32, #tpu.memory_space<vmem>>, vector<1x1x1x16x16xf32>,
    %c2_41 = arith.constant 2 : index
    %492 = memref.load %arg3[%c2_41] : memref<4xf32, #tpu.memory_space<smem>>
    %493 = vector.broadcast %492 : f32 to vector<16x16xf32>
    %c72 = arith.constant 72 : index
    %494 = memref.load %arg2[%c72] : memref<256xf32, #tpu.memory_space<smem>>
    %495 = vector.broadcast %494 : f32 to vector<16x16xf32>
    %496 = arith.mulf %495, %9 : vector<16x16xf32>
    %497 = arith.addf %493, %496 : vector<16x16xf32>
    %c73 = arith.constant 73 : index
    %498 = memref.load %arg2[%c73] : memref<256xf32, #tpu.memory_space<smem>>
    %499 = vector.broadcast %498 : f32 to vector<16x16xf32>
    %500 = arith.mulf %499, %27 : vector<16x16xf32>
    %501 = arith.addf %497, %500 : vector<16x16xf32>
    %c74 = arith.constant 74 : index
    %502 = memref.load %arg2[%c74] : memref<256xf32, #tpu.memory_space<smem>>
    %503 = vector.broadcast %502 : f32 to vector<16x16xf32>
    %504 = arith.mulf %503, %45 : vector<16x16xf32>
    %505 = arith.addf %501, %504 : vector<16x16xf32>
    %c75 = arith.constant 75 : index
    %506 = memref.load %arg2[%c75] : memref<256xf32, #tpu.memory_space<smem>>
    %507 = vector.broadcast %506 : f32 to vector<16x16xf32>
    %508 = arith.mulf %507, %63 : vector<16x16xf32>
    %509 = arith.addf %505, %508 : vector<16x16xf32>
    %c88 = arith.constant 88 : index
    %510 = memref.load %arg2[%c88] : memref<256xf32, #tpu.memory_space<smem>>
    %511 = vector.broadcast %510 : f32 to vector<16x16xf32>
    %512 = arith.mulf %511, %11 : vector<16x16xf32>
    %513 = arith.addf %509, %512 : vector<16x16xf32>
    %c89 = arith.constant 89 : index
    %514 = memref.load %arg2[%c89] : memref<256xf32, #tpu.memory_space<smem>>
    %515 = vector.broadcast %514 : f32 to vector<16x16xf32>
    %516 = arith.mulf %515, %29 : vector<16x16xf32>
    %517 = arith.addf %513, %516 : vector<16x16xf32>
    %c90 = arith.constant 90 : index
    %518 = memref.load %arg2[%c90] : memref<256xf32, #tpu.memory_space<smem>>
    %519 = vector.broadcast %518 : f32 to vector<16x16xf32>
    %520 = arith.mulf %519, %47 : vector<16x16xf32>
    %521 = arith.addf %517, %520 : vector<16x16xf32>
    %c91 = arith.constant 91 : index
    %522 = memref.load %arg2[%c91] : memref<256xf32, #tpu.memory_space<smem>>
    %523 = vector.broadcast %522 : f32 to vector<16x16xf32>
    %524 = arith.mulf %523, %65 : vector<16x16xf32>
    %525 = arith.addf %521, %524 : vector<16x16xf32>
    %c104 = arith.constant 104 : index
    %526 = memref.load %arg2[%c104] : memref<256xf32, #tpu.memory_space<smem>>
    %527 = vector.broadcast %526 : f32 to vector<16x16xf32>
    %528 = arith.mulf %527, %15 : vector<16x16xf32>
    %529 = arith.addf %525, %528 : vector<16x16xf32>
    %c105 = arith.constant 105 : index
    %530 = memref.load %arg2[%c105] : memref<256xf32, #tpu.memory_space<smem>>
    %531 = vector.broadcast %530 : f32 to vector<16x16xf32>
    %532 = arith.mulf %531, %33 : vector<16x16xf32>
    %533 = arith.addf %529, %532 : vector<16x16xf32>
    %c106 = arith.constant 106 : index
    %534 = memref.load %arg2[%c106] : memref<256xf32, #tpu.memory_space<smem>>
    %535 = vector.broadcast %534 : f32 to vector<16x16xf32>
    %536 = arith.mulf %535, %51 : vector<16x16xf32>
    %537 = arith.addf %533, %536 : vector<16x16xf32>
    %c107 = arith.constant 107 : index
    %538 = memref.load %arg2[%c107] : memref<256xf32, #tpu.memory_space<smem>>
    %539 = vector.broadcast %538 : f32 to vector<16x16xf32>
    %540 = arith.mulf %539, %69 : vector<16x16xf32>
    %541 = arith.addf %537, %540 : vector<16x16xf32>
    %c120 = arith.constant 120 : index
    %542 = memref.load %arg2[%c120] : memref<256xf32, #tpu.memory_space<smem>>
    %543 = vector.broadcast %542 : f32 to vector<16x16xf32>
    %544 = arith.mulf %543, %17 : vector<16x16xf32>
    %545 = arith.addf %541, %544 : vector<16x16xf32>
    %c121 = arith.constant 121 : index
    %546 = memref.load %arg2[%c121] : memref<256xf32, #tpu.memory_space<smem>>
    %547 = vector.broadcast %546 : f32 to vector<16x16xf32>
    %548 = arith.mulf %547, %35 : vector<16x16xf32>
    %549 = arith.addf %545, %548 : vector<16x16xf32>
    %c122 = arith.constant 122 : index
    %550 = memref.load %arg2[%c122] : memref<256xf32, #tpu.memory_space<smem>>
    %551 = vector.broadcast %550 : f32 to vector<16x16xf32>
    %552 = arith.mulf %551, %53 : vector<16x16xf32>
    %553 = arith.addf %549, %552 : vector<16x16xf32>
    %c123 = arith.constant 123 : index
    %554 = memref.load %arg2[%c123] : memref<256xf32, #tpu.memory_space<smem>>
    %555 = vector.broadcast %554 : f32 to vector<16x16xf32>
    %556 = arith.mulf %555, %71 : vector<16x16xf32>
    %557 = arith.addf %553, %556 : vector<16x16xf32>
    %c0_42 = arith.constant 0 : index
    %c1_43 = arith.constant 1 : index
    %c2_44 = arith.constant 2 : index
    %c0_45 = arith.constant 0 : index
    %c0_46 = arith.constant 0 : index
    %558 = vector.load %arg4[%c0_42, %c1_43, %c2_44, %c0_45, %c0_46] : memref<1x4x4x16x16xf32, #tpu.memory_space<vmem>>, vector<1x1x1x16x16xf32>
    %559 = vector.shape_cast %558 : vector<1x1x1x16x16xf32> to vector<16x16xf32>
    %560 = vector.shape_cast %557 : vector<16x16xf32> to vector<1x1x1x16x16xf32>
    tpu.vector_store %arg4[%c0_42, %c1_43, %c2_44, %c0_45, %c0_46], %560 {strides = array<i32>} : memref<1x4x4x16x16xf32, #tpu.memory_space<vmem>>, vector<1x1x1x16x16xf32>,
    %c3_47 = arith.constant 3 : index
    %561 = memref.load %arg3[%c3_47] : memref<4xf32, #tpu.memory_space<smem>>
    %562 = vector.broadcast %561 : f32 to vector<16x16xf32>
    %c76 = arith.constant 76 : index
    %563 = memref.load %arg2[%c76] : memref<256xf32, #tpu.memory_space<smem>>
    %564 = vector.broadcast %563 : f32 to vector<16x16xf32>
    %565 = arith.mulf %564, %9 : vector<16x16xf32>
    %566 = arith.addf %562, %565 : vector<16x16xf32>
    %c77 = arith.constant 77 : index
    %567 = memref.load %arg2[%c77] : memref<256xf32, #tpu.memory_space<smem>>
    %568 = vector.broadcast %567 : f32 to vector<16x16xf32>
    %569 = arith.mulf %568, %27 : vector<16x16xf32>
    %570 = arith.addf %566, %569 : vector<16x16xf32>
    %c78 = arith.constant 78 : index
    %571 = memref.load %arg2[%c78] : memref<256xf32, #tpu.memory_space<smem>>
    %572 = vector.broadcast %571 : f32 to vector<16x16xf32>
    %573 = arith.mulf %572, %45 : vector<16x16xf32>
    %574 = arith.addf %570, %573 : vector<16x16xf32>
    %c79 = arith.constant 79 : index
    %575 = memref.load %arg2[%c79] : memref<256xf32, #tpu.memory_space<smem>>
    %576 = vector.broadcast %575 : f32 to vector<16x16xf32>
    %577 = arith.mulf %576, %63 : vector<16x16xf32>
    %578 = arith.addf %574, %577 : vector<16x16xf32>
    %c92 = arith.constant 92 : index
    %579 = memref.load %arg2[%c92] : memref<256xf32, #tpu.memory_space<smem>>
    %580 = vector.broadcast %579 : f32 to vector<16x16xf32>
    %581 = arith.mulf %580, %11 : vector<16x16xf32>
    %582 = arith.addf %578, %581 : vector<16x16xf32>
    %c93 = arith.constant 93 : index
    %583 = memref.load %arg2[%c93] : memref<256xf32, #tpu.memory_space<smem>>
    %584 = vector.broadcast %583 : f32 to vector<16x16xf32>
    %585 = arith.mulf %584, %29 : vector<16x16xf32>
    %586 = arith.addf %582, %585 : vector<16x16xf32>
    %c94 = arith.constant 94 : index
    %587 = memref.load %arg2[%c94] : memref<256xf32, #tpu.memory_space<smem>>
    %588 = vector.broadcast %587 : f32 to vector<16x16xf32>
    %589 = arith.mulf %588, %47 : vector<16x16xf32>
    %590 = arith.addf %586, %589 : vector<16x16xf32>
    %c95 = arith.constant 95 : index
    %591 = memref.load %arg2[%c95] : memref<256xf32, #tpu.memory_space<smem>>
    %592 = vector.broadcast %591 : f32 to vector<16x16xf32>
    %593 = arith.mulf %592, %65 : vector<16x16xf32>
    %594 = arith.addf %590, %593 : vector<16x16xf32>
    %c108 = arith.constant 108 : index
    %595 = memref.load %arg2[%c108] : memref<256xf32, #tpu.memory_space<smem>>
    %596 = vector.broadcast %595 : f32 to vector<16x16xf32>
    %597 = arith.mulf %596, %15 : vector<16x16xf32>
    %598 = arith.addf %594, %597 : vector<16x16xf32>
    %c109 = arith.constant 109 : index
    %599 = memref.load %arg2[%c109] : memref<256xf32, #tpu.memory_space<smem>>
    %600 = vector.broadcast %599 : f32 to vector<16x16xf32>
    %601 = arith.mulf %600, %33 : vector<16x16xf32>
    %602 = arith.addf %598, %601 : vector<16x16xf32>
    %c110 = arith.constant 110 : index
    %603 = memref.load %arg2[%c110] : memref<256xf32, #tpu.memory_space<smem>>
    %604 = vector.broadcast %603 : f32 to vector<16x16xf32>
    %605 = arith.mulf %604, %51 : vector<16x16xf32>
    %606 = arith.addf %602, %605 : vector<16x16xf32>
    %c111 = arith.constant 111 : index
    %607 = memref.load %arg2[%c111] : memref<256xf32, #tpu.memory_space<smem>>
    %608 = vector.broadcast %607 : f32 to vector<16x16xf32>
    %609 = arith.mulf %608, %69 : vector<16x16xf32>
    %610 = arith.addf %606, %609 : vector<16x16xf32>
    %c124 = arith.constant 124 : index
    %611 = memref.load %arg2[%c124] : memref<256xf32, #tpu.memory_space<smem>>
    %612 = vector.broadcast %611 : f32 to vector<16x16xf32>
    %613 = arith.mulf %612, %17 : vector<16x16xf32>
    %614 = arith.addf %610, %613 : vector<16x16xf32>
    %c125 = arith.constant 125 : index
    %615 = memref.load %arg2[%c125] : memref<256xf32, #tpu.memory_space<smem>>
    %616 = vector.broadcast %615 : f32 to vector<16x16xf32>
    %617 = arith.mulf %616, %35 : vector<16x16xf32>
    %618 = arith.addf %614, %617 : vector<16x16xf32>
    %c126 = arith.constant 126 : index
    %619 = memref.load %arg2[%c126] : memref<256xf32, #tpu.memory_space<smem>>
    %620 = vector.broadcast %619 : f32 to vector<16x16xf32>
    %621 = arith.mulf %620, %53 : vector<16x16xf32>
    %622 = arith.addf %618, %621 : vector<16x16xf32>
    %c127 = arith.constant 127 : index
    %623 = memref.load %arg2[%c127] : memref<256xf32, #tpu.memory_space<smem>>
    %624 = vector.broadcast %623 : f32 to vector<16x16xf32>
    %625 = arith.mulf %624, %71 : vector<16x16xf32>
    %626 = arith.addf %622, %625 : vector<16x16xf32>
    %c0_48 = arith.constant 0 : index
    %c1_49 = arith.constant 1 : index
    %c3_50 = arith.constant 3 : index
    %c0_51 = arith.constant 0 : index
    %c0_52 = arith.constant 0 : index
    %627 = vector.load %arg4[%c0_48, %c1_49, %c3_50, %c0_51, %c0_52] : memref<1x4x4x16x16xf32, #tpu.memory_space<vmem>>, vector<1x1x1x16x16xf32>
    %628 = vector.shape_cast %627 : vector<1x1x1x16x16xf32> to vector<16x16xf32>
    %629 = vector.shape_cast %626 : vector<16x16xf32> to vector<1x1x1x16x16xf32>
    tpu.vector_store %arg4[%c0_48, %c1_49, %c3_50, %c0_51, %c0_52], %629 {strides = array<i32>} : memref<1x4x4x16x16xf32, #tpu.memory_space<vmem>>, vector<1x1x1x16x16xf32>,
    %c0_53 = arith.constant 0 : index
    %630 = memref.load %arg3[%c0_53] : memref<4xf32, #tpu.memory_space<smem>>
    %631 = vector.broadcast %630 : f32 to vector<16x16xf32>
    %c128 = arith.constant 128 : index
    %632 = memref.load %arg2[%c128] : memref<256xf32, #tpu.memory_space<smem>>
    %633 = vector.broadcast %632 : f32 to vector<16x16xf32>
    %634 = arith.mulf %633, %13 : vector<16x16xf32>
    %635 = arith.addf %631, %634 : vector<16x16xf32>
    %c129 = arith.constant 129 : index
    %636 = memref.load %arg2[%c129] : memref<256xf32, #tpu.memory_space<smem>>
    %637 = vector.broadcast %636 : f32 to vector<16x16xf32>
    %638 = arith.mulf %637, %31 : vector<16x16xf32>
    %639 = arith.addf %635, %638 : vector<16x16xf32>
    %c130 = arith.constant 130 : index
    %640 = memref.load %arg2[%c130] : memref<256xf32, #tpu.memory_space<smem>>
    %641 = vector.broadcast %640 : f32 to vector<16x16xf32>
    %642 = arith.mulf %641, %49 : vector<16x16xf32>
    %643 = arith.addf %639, %642 : vector<16x16xf32>
    %c131 = arith.constant 131 : index
    %644 = memref.load %arg2[%c131] : memref<256xf32, #tpu.memory_space<smem>>
    %645 = vector.broadcast %644 : f32 to vector<16x16xf32>
    %646 = arith.mulf %645, %67 : vector<16x16xf32>
    %647 = arith.addf %643, %646 : vector<16x16xf32>
    %c144 = arith.constant 144 : index
    %648 = memref.load %arg2[%c144] : memref<256xf32, #tpu.memory_space<smem>>
    %649 = vector.broadcast %648 : f32 to vector<16x16xf32>
    %650 = arith.mulf %649, %15 : vector<16x16xf32>
    %651 = arith.addf %647, %650 : vector<16x16xf32>
    %c145 = arith.constant 145 : index
    %652 = memref.load %arg2[%c145] : memref<256xf32, #tpu.memory_space<smem>>
    %653 = vector.broadcast %652 : f32 to vector<16x16xf32>
    %654 = arith.mulf %653, %33 : vector<16x16xf32>
    %655 = arith.addf %651, %654 : vector<16x16xf32>
    %c146 = arith.constant 146 : index
    %656 = memref.load %arg2[%c146] : memref<256xf32, #tpu.memory_space<smem>>
    %657 = vector.broadcast %656 : f32 to vector<16x16xf32>
    %658 = arith.mulf %657, %51 : vector<16x16xf32>
    %659 = arith.addf %655, %658 : vector<16x16xf32>
    %c147 = arith.constant 147 : index
    %660 = memref.load %arg2[%c147] : memref<256xf32, #tpu.memory_space<smem>>
    %661 = vector.broadcast %660 : f32 to vector<16x16xf32>
    %662 = arith.mulf %661, %69 : vector<16x16xf32>
    %663 = arith.addf %659, %662 : vector<16x16xf32>
    %c160 = arith.constant 160 : index
    %664 = memref.load %arg2[%c160] : memref<256xf32, #tpu.memory_space<smem>>
    %665 = vector.broadcast %664 : f32 to vector<16x16xf32>
    %666 = arith.mulf %665, %19 : vector<16x16xf32>
    %667 = arith.addf %663, %666 : vector<16x16xf32>
    %c161 = arith.constant 161 : index
    %668 = memref.load %arg2[%c161] : memref<256xf32, #tpu.memory_space<smem>>
    %669 = vector.broadcast %668 : f32 to vector<16x16xf32>
    %670 = arith.mulf %669, %37 : vector<16x16xf32>
    %671 = arith.addf %667, %670 : vector<16x16xf32>
    %c162 = arith.constant 162 : index
    %672 = memref.load %arg2[%c162] : memref<256xf32, #tpu.memory_space<smem>>
    %673 = vector.broadcast %672 : f32 to vector<16x16xf32>
    %674 = arith.mulf %673, %55 : vector<16x16xf32>
    %675 = arith.addf %671, %674 : vector<16x16xf32>
    %c163 = arith.constant 163 : index
    %676 = memref.load %arg2[%c163] : memref<256xf32, #tpu.memory_space<smem>>
    %677 = vector.broadcast %676 : f32 to vector<16x16xf32>
    %678 = arith.mulf %677, %73 : vector<16x16xf32>
    %679 = arith.addf %675, %678 : vector<16x16xf32>
    %c176 = arith.constant 176 : index
    %680 = memref.load %arg2[%c176] : memref<256xf32, #tpu.memory_space<smem>>
    %681 = vector.broadcast %680 : f32 to vector<16x16xf32>
    %682 = arith.mulf %681, %21 : vector<16x16xf32>
    %683 = arith.addf %679, %682 : vector<16x16xf32>
    %c177 = arith.constant 177 : index
    %684 = memref.load %arg2[%c177] : memref<256xf32, #tpu.memory_space<smem>>
    %685 = vector.broadcast %684 : f32 to vector<16x16xf32>
    %686 = arith.mulf %685, %39 : vector<16x16xf32>
    %687 = arith.addf %683, %686 : vector<16x16xf32>
    %c178 = arith.constant 178 : index
    %688 = memref.load %arg2[%c178] : memref<256xf32, #tpu.memory_space<smem>>
    %689 = vector.broadcast %688 : f32 to vector<16x16xf32>
    %690 = arith.mulf %689, %57 : vector<16x16xf32>
    %691 = arith.addf %687, %690 : vector<16x16xf32>
    %c179 = arith.constant 179 : index
    %692 = memref.load %arg2[%c179] : memref<256xf32, #tpu.memory_space<smem>>
    %693 = vector.broadcast %692 : f32 to vector<16x16xf32>
    %694 = arith.mulf %693, %75 : vector<16x16xf32>
    %695 = arith.addf %691, %694 : vector<16x16xf32>
    %c0_54 = arith.constant 0 : index
    %c2_55 = arith.constant 2 : index
    %c0_56 = arith.constant 0 : index
    %c0_57 = arith.constant 0 : index
    %c0_58 = arith.constant 0 : index
    %696 = vector.load %arg4[%c0_54, %c2_55, %c0_56, %c0_57, %c0_58] : memref<1x4x4x16x16xf32, #tpu.memory_space<vmem>>, vector<1x1x1x16x16xf32>
    %697 = vector.shape_cast %696 : vector<1x1x1x16x16xf32> to vector<16x16xf32>
    %698 = vector.shape_cast %695 : vector<16x16xf32> to vector<1x1x1x16x16xf32>
    tpu.vector_store %arg4[%c0_54, %c2_55, %c0_56, %c0_57, %c0_58], %698 {strides = array<i32>} : memref<1x4x4x16x16xf32, #tpu.memory_space<vmem>>, vector<1x1x1x16x16xf32>,
    %c1_59 = arith.constant 1 : index
    %699 = memref.load %arg3[%c1_59] : memref<4xf32, #tpu.memory_space<smem>>
    %700 = vector.broadcast %699 : f32 to vector<16x16xf32>
    %c132 = arith.constant 132 : index
    %701 = memref.load %arg2[%c132] : memref<256xf32, #tpu.memory_space<smem>>
    %702 = vector.broadcast %701 : f32 to vector<16x16xf32>
    %703 = arith.mulf %702, %13 : vector<16x16xf32>
    %704 = arith.addf %700, %703 : vector<16x16xf32>
    %c133 = arith.constant 133 : index
    %705 = memref.load %arg2[%c133] : memref<256xf32, #tpu.memory_space<smem>>
    %706 = vector.broadcast %705 : f32 to vector<16x16xf32>
    %707 = arith.mulf %706, %31 : vector<16x16xf32>
    %708 = arith.addf %704, %707 : vector<16x16xf32>
    %c134 = arith.constant 134 : index
    %709 = memref.load %arg2[%c134] : memref<256xf32, #tpu.memory_space<smem>>
    %710 = vector.broadcast %709 : f32 to vector<16x16xf32>
    %711 = arith.mulf %710, %49 : vector<16x16xf32>
    %712 = arith.addf %708, %711 : vector<16x16xf32>
    %c135 = arith.constant 135 : index
    %713 = memref.load %arg2[%c135] : memref<256xf32, #tpu.memory_space<smem>>
    %714 = vector.broadcast %713 : f32 to vector<16x16xf32>
    %715 = arith.mulf %714, %67 : vector<16x16xf32>
    %716 = arith.addf %712, %715 : vector<16x16xf32>
    %c148 = arith.constant 148 : index
    %717 = memref.load %arg2[%c148] : memref<256xf32, #tpu.memory_space<smem>>
    %718 = vector.broadcast %717 : f32 to vector<16x16xf32>
    %719 = arith.mulf %718, %15 : vector<16x16xf32>
    %720 = arith.addf %716, %719 : vector<16x16xf32>
    %c149 = arith.constant 149 : index
    %721 = memref.load %arg2[%c149] : memref<256xf32, #tpu.memory_space<smem>>
    %722 = vector.broadcast %721 : f32 to vector<16x16xf32>
    %723 = arith.mulf %722, %33 : vector<16x16xf32>
    %724 = arith.addf %720, %723 : vector<16x16xf32>
    %c150 = arith.constant 150 : index
    %725 = memref.load %arg2[%c150] : memref<256xf32, #tpu.memory_space<smem>>
    %726 = vector.broadcast %725 : f32 to vector<16x16xf32>
    %727 = arith.mulf %726, %51 : vector<16x16xf32>
    %728 = arith.addf %724, %727 : vector<16x16xf32>
    %c151 = arith.constant 151 : index
    %729 = memref.load %arg2[%c151] : memref<256xf32, #tpu.memory_space<smem>>
    %730 = vector.broadcast %729 : f32 to vector<16x16xf32>
    %731 = arith.mulf %730, %69 : vector<16x16xf32>
    %732 = arith.addf %728, %731 : vector<16x16xf32>
    %c164 = arith.constant 164 : index
    %733 = memref.load %arg2[%c164] : memref<256xf32, #tpu.memory_space<smem>>
    %734 = vector.broadcast %733 : f32 to vector<16x16xf32>
    %735 = arith.mulf %734, %19 : vector<16x16xf32>
    %736 = arith.addf %732, %735 : vector<16x16xf32>
    %c165 = arith.constant 165 : index
    %737 = memref.load %arg2[%c165] : memref<256xf32, #tpu.memory_space<smem>>
    %738 = vector.broadcast %737 : f32 to vector<16x16xf32>
    %739 = arith.mulf %738, %37 : vector<16x16xf32>
    %740 = arith.addf %736, %739 : vector<16x16xf32>
    %c166 = arith.constant 166 : index
    %741 = memref.load %arg2[%c166] : memref<256xf32, #tpu.memory_space<smem>>
    %742 = vector.broadcast %741 : f32 to vector<16x16xf32>
    %743 = arith.mulf %742, %55 : vector<16x16xf32>
    %744 = arith.addf %740, %743 : vector<16x16xf32>
    %c167 = arith.constant 167 : index
    %745 = memref.load %arg2[%c167] : memref<256xf32, #tpu.memory_space<smem>>
    %746 = vector.broadcast %745 : f32 to vector<16x16xf32>
    %747 = arith.mulf %746, %73 : vector<16x16xf32>
    %748 = arith.addf %744, %747 : vector<16x16xf32>
    %c180 = arith.constant 180 : index
    %749 = memref.load %arg2[%c180] : memref<256xf32, #tpu.memory_space<smem>>
    %750 = vector.broadcast %749 : f32 to vector<16x16xf32>
    %751 = arith.mulf %750, %21 : vector<16x16xf32>
    %752 = arith.addf %748, %751 : vector<16x16xf32>
    %c181 = arith.constant 181 : index
    %753 = memref.load %arg2[%c181] : memref<256xf32, #tpu.memory_space<smem>>
    %754 = vector.broadcast %753 : f32 to vector<16x16xf32>
    %755 = arith.mulf %754, %39 : vector<16x16xf32>
    %756 = arith.addf %752, %755 : vector<16x16xf32>
    %c182 = arith.constant 182 : index
    %757 = memref.load %arg2[%c182] : memref<256xf32, #tpu.memory_space<smem>>
    %758 = vector.broadcast %757 : f32 to vector<16x16xf32>
    %759 = arith.mulf %758, %57 : vector<16x16xf32>
    %760 = arith.addf %756, %759 : vector<16x16xf32>
    %c183 = arith.constant 183 : index
    %761 = memref.load %arg2[%c183] : memref<256xf32, #tpu.memory_space<smem>>
    %762 = vector.broadcast %761 : f32 to vector<16x16xf32>
    %763 = arith.mulf %762, %75 : vector<16x16xf32>
    %764 = arith.addf %760, %763 : vector<16x16xf32>
    %c0_60 = arith.constant 0 : index
    %c2_61 = arith.constant 2 : index
    %c1_62 = arith.constant 1 : index
    %c0_63 = arith.constant 0 : index
    %c0_64 = arith.constant 0 : index
    %765 = vector.load %arg4[%c0_60, %c2_61, %c1_62, %c0_63, %c0_64] : memref<1x4x4x16x16xf32, #tpu.memory_space<vmem>>, vector<1x1x1x16x16xf32>
    %766 = vector.shape_cast %765 : vector<1x1x1x16x16xf32> to vector<16x16xf32>
    %767 = vector.shape_cast %764 : vector<16x16xf32> to vector<1x1x1x16x16xf32>
    tpu.vector_store %arg4[%c0_60, %c2_61, %c1_62, %c0_63, %c0_64], %767 {strides = array<i32>} : memref<1x4x4x16x16xf32, #tpu.memory_space<vmem>>, vector<1x1x1x16x16xf32>,
    %c2_65 = arith.constant 2 : index
    %768 = memref.load %arg3[%c2_65] : memref<4xf32, #tpu.memory_space<smem>>
    %769 = vector.broadcast %768 : f32 to vector<16x16xf32>
    %c136 = arith.constant 136 : index
    %770 = memref.load %arg2[%c136] : memref<256xf32, #tpu.memory_space<smem>>
    %771 = vector.broadcast %770 : f32 to vector<16x16xf32>
    %772 = arith.mulf %771, %13 : vector<16x16xf32>
    %773 = arith.addf %769, %772 : vector<16x16xf32>
    %c137 = arith.constant 137 : index
    %774 = memref.load %arg2[%c137] : memref<256xf32, #tpu.memory_space<smem>>
    %775 = vector.broadcast %774 : f32 to vector<16x16xf32>
    %776 = arith.mulf %775, %31 : vector<16x16xf32>
    %777 = arith.addf %773, %776 : vector<16x16xf32>
    %c138 = arith.constant 138 : index
    %778 = memref.load %arg2[%c138] : memref<256xf32, #tpu.memory_space<smem>>
    %779 = vector.broadcast %778 : f32 to vector<16x16xf32>
    %780 = arith.mulf %779, %49 : vector<16x16xf32>
    %781 = arith.addf %777, %780 : vector<16x16xf32>
    %c139 = arith.constant 139 : index
    %782 = memref.load %arg2[%c139] : memref<256xf32, #tpu.memory_space<smem>>
    %783 = vector.broadcast %782 : f32 to vector<16x16xf32>
    %784 = arith.mulf %783, %67 : vector<16x16xf32>
    %785 = arith.addf %781, %784 : vector<16x16xf32>
    %c152 = arith.constant 152 : index
    %786 = memref.load %arg2[%c152] : memref<256xf32, #tpu.memory_space<smem>>
    %787 = vector.broadcast %786 : f32 to vector<16x16xf32>
    %788 = arith.mulf %787, %15 : vector<16x16xf32>
    %789 = arith.addf %785, %788 : vector<16x16xf32>
    %c153 = arith.constant 153 : index
    %790 = memref.load %arg2[%c153] : memref<256xf32, #tpu.memory_space<smem>>
    %791 = vector.broadcast %790 : f32 to vector<16x16xf32>
    %792 = arith.mulf %791, %33 : vector<16x16xf32>
    %793 = arith.addf %789, %792 : vector<16x16xf32>
    %c154 = arith.constant 154 : index
    %794 = memref.load %arg2[%c154] : memref<256xf32, #tpu.memory_space<smem>>
    %795 = vector.broadcast %794 : f32 to vector<16x16xf32>
    %796 = arith.mulf %795, %51 : vector<16x16xf32>
    %797 = arith.addf %793, %796 : vector<16x16xf32>
    %c155 = arith.constant 155 : index
    %798 = memref.load %arg2[%c155] : memref<256xf32, #tpu.memory_space<smem>>
    %799 = vector.broadcast %798 : f32 to vector<16x16xf32>
    %800 = arith.mulf %799, %69 : vector<16x16xf32>
    %801 = arith.addf %797, %800 : vector<16x16xf32>
    %c168 = arith.constant 168 : index
    %802 = memref.load %arg2[%c168] : memref<256xf32, #tpu.memory_space<smem>>
    %803 = vector.broadcast %802 : f32 to vector<16x16xf32>
    %804 = arith.mulf %803, %19 : vector<16x16xf32>
    %805 = arith.addf %801, %804 : vector<16x16xf32>
    %c169 = arith.constant 169 : index
    %806 = memref.load %arg2[%c169] : memref<256xf32, #tpu.memory_space<smem>>
    %807 = vector.broadcast %806 : f32 to vector<16x16xf32>
    %808 = arith.mulf %807, %37 : vector<16x16xf32>
    %809 = arith.addf %805, %808 : vector<16x16xf32>
    %c170 = arith.constant 170 : index
    %810 = memref.load %arg2[%c170] : memref<256xf32, #tpu.memory_space<smem>>
    %811 = vector.broadcast %810 : f32 to vector<16x16xf32>
    %812 = arith.mulf %811, %55 : vector<16x16xf32>
    %813 = arith.addf %809, %812 : vector<16x16xf32>
    %c171 = arith.constant 171 : index
    %814 = memref.load %arg2[%c171] : memref<256xf32, #tpu.memory_space<smem>>
    %815 = vector.broadcast %814 : f32 to vector<16x16xf32>
    %816 = arith.mulf %815, %73 : vector<16x16xf32>
    %817 = arith.addf %813, %816 : vector<16x16xf32>
    %c184 = arith.constant 184 : index
    %818 = memref.load %arg2[%c184] : memref<256xf32, #tpu.memory_space<smem>>
    %819 = vector.broadcast %818 : f32 to vector<16x16xf32>
    %820 = arith.mulf %819, %21 : vector<16x16xf32>
    %821 = arith.addf %817, %820 : vector<16x16xf32>
    %c185 = arith.constant 185 : index
    %822 = memref.load %arg2[%c185] : memref<256xf32, #tpu.memory_space<smem>>
    %823 = vector.broadcast %822 : f32 to vector<16x16xf32>
    %824 = arith.mulf %823, %39 : vector<16x16xf32>
    %825 = arith.addf %821, %824 : vector<16x16xf32>
    %c186 = arith.constant 186 : index
    %826 = memref.load %arg2[%c186] : memref<256xf32, #tpu.memory_space<smem>>
    %827 = vector.broadcast %826 : f32 to vector<16x16xf32>
    %828 = arith.mulf %827, %57 : vector<16x16xf32>
    %829 = arith.addf %825, %828 : vector<16x16xf32>
    %c187 = arith.constant 187 : index
    %830 = memref.load %arg2[%c187] : memref<256xf32, #tpu.memory_space<smem>>
    %831 = vector.broadcast %830 : f32 to vector<16x16xf32>
    %832 = arith.mulf %831, %75 : vector<16x16xf32>
    %833 = arith.addf %829, %832 : vector<16x16xf32>
    %c0_66 = arith.constant 0 : index
    %c2_67 = arith.constant 2 : index
    %c2_68 = arith.constant 2 : index
    %c0_69 = arith.constant 0 : index
    %c0_70 = arith.constant 0 : index
    %834 = vector.load %arg4[%c0_66, %c2_67, %c2_68, %c0_69, %c0_70] : memref<1x4x4x16x16xf32, #tpu.memory_space<vmem>>, vector<1x1x1x16x16xf32>
    %835 = vector.shape_cast %834 : vector<1x1x1x16x16xf32> to vector<16x16xf32>
    %836 = vector.shape_cast %833 : vector<16x16xf32> to vector<1x1x1x16x16xf32>
    tpu.vector_store %arg4[%c0_66, %c2_67, %c2_68, %c0_69, %c0_70], %836 {strides = array<i32>} : memref<1x4x4x16x16xf32, #tpu.memory_space<vmem>>, vector<1x1x1x16x16xf32>,
    %c3_71 = arith.constant 3 : index
    %837 = memref.load %arg3[%c3_71] : memref<4xf32, #tpu.memory_space<smem>>
    %838 = vector.broadcast %837 : f32 to vector<16x16xf32>
    %c140 = arith.constant 140 : index
    %839 = memref.load %arg2[%c140] : memref<256xf32, #tpu.memory_space<smem>>
    %840 = vector.broadcast %839 : f32 to vector<16x16xf32>
    %841 = arith.mulf %840, %13 : vector<16x16xf32>
    %842 = arith.addf %838, %841 : vector<16x16xf32>
    %c141 = arith.constant 141 : index
    %843 = memref.load %arg2[%c141] : memref<256xf32, #tpu.memory_space<smem>>
    %844 = vector.broadcast %843 : f32 to vector<16x16xf32>
    %845 = arith.mulf %844, %31 : vector<16x16xf32>
    %846 = arith.addf %842, %845 : vector<16x16xf32>
    %c142 = arith.constant 142 : index
    %847 = memref.load %arg2[%c142] : memref<256xf32, #tpu.memory_space<smem>>
    %848 = vector.broadcast %847 : f32 to vector<16x16xf32>
    %849 = arith.mulf %848, %49 : vector<16x16xf32>
    %850 = arith.addf %846, %849 : vector<16x16xf32>
    %c143 = arith.constant 143 : index
    %851 = memref.load %arg2[%c143] : memref<256xf32, #tpu.memory_space<smem>>
    %852 = vector.broadcast %851 : f32 to vector<16x16xf32>
    %853 = arith.mulf %852, %67 : vector<16x16xf32>
    %854 = arith.addf %850, %853 : vector<16x16xf32>
    %c156 = arith.constant 156 : index
    %855 = memref.load %arg2[%c156] : memref<256xf32, #tpu.memory_space<smem>>
    %856 = vector.broadcast %855 : f32 to vector<16x16xf32>
    %857 = arith.mulf %856, %15 : vector<16x16xf32>
    %858 = arith.addf %854, %857 : vector<16x16xf32>
    %c157 = arith.constant 157 : index
    %859 = memref.load %arg2[%c157] : memref<256xf32, #tpu.memory_space<smem>>
    %860 = vector.broadcast %859 : f32 to vector<16x16xf32>
    %861 = arith.mulf %860, %33 : vector<16x16xf32>
    %862 = arith.addf %858, %861 : vector<16x16xf32>
    %c158 = arith.constant 158 : index
    %863 = memref.load %arg2[%c158] : memref<256xf32, #tpu.memory_space<smem>>
    %864 = vector.broadcast %863 : f32 to vector<16x16xf32>
    %865 = arith.mulf %864, %51 : vector<16x16xf32>
    %866 = arith.addf %862, %865 : vector<16x16xf32>
    %c159 = arith.constant 159 : index
    %867 = memref.load %arg2[%c159] : memref<256xf32, #tpu.memory_space<smem>>
    %868 = vector.broadcast %867 : f32 to vector<16x16xf32>
    %869 = arith.mulf %868, %69 : vector<16x16xf32>
    %870 = arith.addf %866, %869 : vector<16x16xf32>
    %c172 = arith.constant 172 : index
    %871 = memref.load %arg2[%c172] : memref<256xf32, #tpu.memory_space<smem>>
    %872 = vector.broadcast %871 : f32 to vector<16x16xf32>
    %873 = arith.mulf %872, %19 : vector<16x16xf32>
    %874 = arith.addf %870, %873 : vector<16x16xf32>
    %c173 = arith.constant 173 : index
    %875 = memref.load %arg2[%c173] : memref<256xf32, #tpu.memory_space<smem>>
    %876 = vector.broadcast %875 : f32 to vector<16x16xf32>
    %877 = arith.mulf %876, %37 : vector<16x16xf32>
    %878 = arith.addf %874, %877 : vector<16x16xf32>
    %c174 = arith.constant 174 : index
    %879 = memref.load %arg2[%c174] : memref<256xf32, #tpu.memory_space<smem>>
    %880 = vector.broadcast %879 : f32 to vector<16x16xf32>
    %881 = arith.mulf %880, %55 : vector<16x16xf32>
    %882 = arith.addf %878, %881 : vector<16x16xf32>
    %c175 = arith.constant 175 : index
    %883 = memref.load %arg2[%c175] : memref<256xf32, #tpu.memory_space<smem>>
    %884 = vector.broadcast %883 : f32 to vector<16x16xf32>
    %885 = arith.mulf %884, %73 : vector<16x16xf32>
    %886 = arith.addf %882, %885 : vector<16x16xf32>
    %c188 = arith.constant 188 : index
    %887 = memref.load %arg2[%c188] : memref<256xf32, #tpu.memory_space<smem>>
    %888 = vector.broadcast %887 : f32 to vector<16x16xf32>
    %889 = arith.mulf %888, %21 : vector<16x16xf32>
    %890 = arith.addf %886, %889 : vector<16x16xf32>
    %c189 = arith.constant 189 : index
    %891 = memref.load %arg2[%c189] : memref<256xf32, #tpu.memory_space<smem>>
    %892 = vector.broadcast %891 : f32 to vector<16x16xf32>
    %893 = arith.mulf %892, %39 : vector<16x16xf32>
    %894 = arith.addf %890, %893 : vector<16x16xf32>
    %c190 = arith.constant 190 : index
    %895 = memref.load %arg2[%c190] : memref<256xf32, #tpu.memory_space<smem>>
    %896 = vector.broadcast %895 : f32 to vector<16x16xf32>
    %897 = arith.mulf %896, %57 : vector<16x16xf32>
    %898 = arith.addf %894, %897 : vector<16x16xf32>
    %c191 = arith.constant 191 : index
    %899 = memref.load %arg2[%c191] : memref<256xf32, #tpu.memory_space<smem>>
    %900 = vector.broadcast %899 : f32 to vector<16x16xf32>
    %901 = arith.mulf %900, %75 : vector<16x16xf32>
    %902 = arith.addf %898, %901 : vector<16x16xf32>
    %c0_72 = arith.constant 0 : index
    %c2_73 = arith.constant 2 : index
    %c3_74 = arith.constant 3 : index
    %c0_75 = arith.constant 0 : index
    %c0_76 = arith.constant 0 : index
    %903 = vector.load %arg4[%c0_72, %c2_73, %c3_74, %c0_75, %c0_76] : memref<1x4x4x16x16xf32, #tpu.memory_space<vmem>>, vector<1x1x1x16x16xf32>
    %904 = vector.shape_cast %903 : vector<1x1x1x16x16xf32> to vector<16x16xf32>
    %905 = vector.shape_cast %902 : vector<16x16xf32> to vector<1x1x1x16x16xf32>
    tpu.vector_store %arg4[%c0_72, %c2_73, %c3_74, %c0_75, %c0_76], %905 {strides = array<i32>} : memref<1x4x4x16x16xf32, #tpu.memory_space<vmem>>, vector<1x1x1x16x16xf32>,
    %c0_77 = arith.constant 0 : index
    %906 = memref.load %arg3[%c0_77] : memref<4xf32, #tpu.memory_space<smem>>
    %907 = vector.broadcast %906 : f32 to vector<16x16xf32>
    %c192 = arith.constant 192 : index
    %908 = memref.load %arg2[%c192] : memref<256xf32, #tpu.memory_space<smem>>
    %909 = vector.broadcast %908 : f32 to vector<16x16xf32>
    %910 = arith.mulf %909, %15 : vector<16x16xf32>
    %911 = arith.addf %907, %910 : vector<16x16xf32>
    %c193 = arith.constant 193 : index
    %912 = memref.load %arg2[%c193] : memref<256xf32, #tpu.memory_space<smem>>
    %913 = vector.broadcast %912 : f32 to vector<16x16xf32>
    %914 = arith.mulf %913, %33 : vector<16x16xf32>
    %915 = arith.addf %911, %914 : vector<16x16xf32>
    %c194 = arith.constant 194 : index
    %916 = memref.load %arg2[%c194] : memref<256xf32, #tpu.memory_space<smem>>
    %917 = vector.broadcast %916 : f32 to vector<16x16xf32>
    %918 = arith.mulf %917, %51 : vector<16x16xf32>
    %919 = arith.addf %915, %918 : vector<16x16xf32>
    %c195 = arith.constant 195 : index
    %920 = memref.load %arg2[%c195] : memref<256xf32, #tpu.memory_space<smem>>
    %921 = vector.broadcast %920 : f32 to vector<16x16xf32>
    %922 = arith.mulf %921, %69 : vector<16x16xf32>
    %923 = arith.addf %919, %922 : vector<16x16xf32>
    %c208 = arith.constant 208 : index
    %924 = memref.load %arg2[%c208] : memref<256xf32, #tpu.memory_space<smem>>
    %925 = vector.broadcast %924 : f32 to vector<16x16xf32>
    %926 = arith.mulf %925, %17 : vector<16x16xf32>
    %927 = arith.addf %923, %926 : vector<16x16xf32>
    %c209 = arith.constant 209 : index
    %928 = memref.load %arg2[%c209] : memref<256xf32, #tpu.memory_space<smem>>
    %929 = vector.broadcast %928 : f32 to vector<16x16xf32>
    %930 = arith.mulf %929, %35 : vector<16x16xf32>
    %931 = arith.addf %927, %930 : vector<16x16xf32>
    %c210 = arith.constant 210 : index
    %932 = memref.load %arg2[%c210] : memref<256xf32, #tpu.memory_space<smem>>
    %933 = vector.broadcast %932 : f32 to vector<16x16xf32>
    %934 = arith.mulf %933, %53 : vector<16x16xf32>
    %935 = arith.addf %931, %934 : vector<16x16xf32>
    %c211 = arith.constant 211 : index
    %936 = memref.load %arg2[%c211] : memref<256xf32, #tpu.memory_space<smem>>
    %937 = vector.broadcast %936 : f32 to vector<16x16xf32>
    %938 = arith.mulf %937, %71 : vector<16x16xf32>
    %939 = arith.addf %935, %938 : vector<16x16xf32>
    %c224 = arith.constant 224 : index
    %940 = memref.load %arg2[%c224] : memref<256xf32, #tpu.memory_space<smem>>
    %941 = vector.broadcast %940 : f32 to vector<16x16xf32>
    %942 = arith.mulf %941, %21 : vector<16x16xf32>
    %943 = arith.addf %939, %942 : vector<16x16xf32>
    %c225 = arith.constant 225 : index
    %944 = memref.load %arg2[%c225] : memref<256xf32, #tpu.memory_space<smem>>
    %945 = vector.broadcast %944 : f32 to vector<16x16xf32>
    %946 = arith.mulf %945, %39 : vector<16x16xf32>
    %947 = arith.addf %943, %946 : vector<16x16xf32>
    %c226 = arith.constant 226 : index
    %948 = memref.load %arg2[%c226] : memref<256xf32, #tpu.memory_space<smem>>
    %949 = vector.broadcast %948 : f32 to vector<16x16xf32>
    %950 = arith.mulf %949, %57 : vector<16x16xf32>
    %951 = arith.addf %947, %950 : vector<16x16xf32>
    %c227 = arith.constant 227 : index
    %952 = memref.load %arg2[%c227] : memref<256xf32, #tpu.memory_space<smem>>
    %953 = vector.broadcast %952 : f32 to vector<16x16xf32>
    %954 = arith.mulf %953, %75 : vector<16x16xf32>
    %955 = arith.addf %951, %954 : vector<16x16xf32>
    %c240 = arith.constant 240 : index
    %956 = memref.load %arg2[%c240] : memref<256xf32, #tpu.memory_space<smem>>
    %957 = vector.broadcast %956 : f32 to vector<16x16xf32>
    %958 = arith.mulf %957, %23 : vector<16x16xf32>
    %959 = arith.addf %955, %958 : vector<16x16xf32>
    %c241 = arith.constant 241 : index
    %960 = memref.load %arg2[%c241] : memref<256xf32, #tpu.memory_space<smem>>
    %961 = vector.broadcast %960 : f32 to vector<16x16xf32>
    %962 = arith.mulf %961, %41 : vector<16x16xf32>
    %963 = arith.addf %959, %962 : vector<16x16xf32>
    %c242 = arith.constant 242 : index
    %964 = memref.load %arg2[%c242] : memref<256xf32, #tpu.memory_space<smem>>
    %965 = vector.broadcast %964 : f32 to vector<16x16xf32>
    %966 = arith.mulf %965, %59 : vector<16x16xf32>
    %967 = arith.addf %963, %966 : vector<16x16xf32>
    %c243 = arith.constant 243 : index
    %968 = memref.load %arg2[%c243] : memref<256xf32, #tpu.memory_space<smem>>
    %969 = vector.broadcast %968 : f32 to vector<16x16xf32>
    %970 = arith.mulf %969, %77 : vector<16x16xf32>
    %971 = arith.addf %967, %970 : vector<16x16xf32>
    %c0_78 = arith.constant 0 : index
    %c3_79 = arith.constant 3 : index
    %c0_80 = arith.constant 0 : index
    %c0_81 = arith.constant 0 : index
    %c0_82 = arith.constant 0 : index
    %972 = vector.load %arg4[%c0_78, %c3_79, %c0_80, %c0_81, %c0_82] : memref<1x4x4x16x16xf32, #tpu.memory_space<vmem>>, vector<1x1x1x16x16xf32>
    %973 = vector.shape_cast %972 : vector<1x1x1x16x16xf32> to vector<16x16xf32>
    %974 = vector.shape_cast %971 : vector<16x16xf32> to vector<1x1x1x16x16xf32>
    tpu.vector_store %arg4[%c0_78, %c3_79, %c0_80, %c0_81, %c0_82], %974 {strides = array<i32>} : memref<1x4x4x16x16xf32, #tpu.memory_space<vmem>>, vector<1x1x1x16x16xf32>,
    %c1_83 = arith.constant 1 : index
    %975 = memref.load %arg3[%c1_83] : memref<4xf32, #tpu.memory_space<smem>>
    %976 = vector.broadcast %975 : f32 to vector<16x16xf32>
    %c196 = arith.constant 196 : index
    %977 = memref.load %arg2[%c196] : memref<256xf32, #tpu.memory_space<smem>>
    %978 = vector.broadcast %977 : f32 to vector<16x16xf32>
    %979 = arith.mulf %978, %15 : vector<16x16xf32>
    %980 = arith.addf %976, %979 : vector<16x16xf32>
    %c197 = arith.constant 197 : index
    %981 = memref.load %arg2[%c197] : memref<256xf32, #tpu.memory_space<smem>>
    %982 = vector.broadcast %981 : f32 to vector<16x16xf32>
    %983 = arith.mulf %982, %33 : vector<16x16xf32>
    %984 = arith.addf %980, %983 : vector<16x16xf32>
    %c198 = arith.constant 198 : index
    %985 = memref.load %arg2[%c198] : memref<256xf32, #tpu.memory_space<smem>>
    %986 = vector.broadcast %985 : f32 to vector<16x16xf32>
    %987 = arith.mulf %986, %51 : vector<16x16xf32>
    %988 = arith.addf %984, %987 : vector<16x16xf32>
    %c199 = arith.constant 199 : index
    %989 = memref.load %arg2[%c199] : memref<256xf32, #tpu.memory_space<smem>>
    %990 = vector.broadcast %989 : f32 to vector<16x16xf32>
    %991 = arith.mulf %990, %69 : vector<16x16xf32>
    %992 = arith.addf %988, %991 : vector<16x16xf32>
    %c212 = arith.constant 212 : index
    %993 = memref.load %arg2[%c212] : memref<256xf32, #tpu.memory_space<smem>>
    %994 = vector.broadcast %993 : f32 to vector<16x16xf32>
    %995 = arith.mulf %994, %17 : vector<16x16xf32>
    %996 = arith.addf %992, %995 : vector<16x16xf32>
    %c213 = arith.constant 213 : index
    %997 = memref.load %arg2[%c213] : memref<256xf32, #tpu.memory_space<smem>>
    %998 = vector.broadcast %997 : f32 to vector<16x16xf32>
    %999 = arith.mulf %998, %35 : vector<16x16xf32>
    %1000 = arith.addf %996, %999 : vector<16x16xf32>
    %c214 = arith.constant 214 : index
    %1001 = memref.load %arg2[%c214] : memref<256xf32, #tpu.memory_space<smem>>
    %1002 = vector.broadcast %1001 : f32 to vector<16x16xf32>
    %1003 = arith.mulf %1002, %53 : vector<16x16xf32>
    %1004 = arith.addf %1000, %1003 : vector<16x16xf32>
    %c215 = arith.constant 215 : index
    %1005 = memref.load %arg2[%c215] : memref<256xf32, #tpu.memory_space<smem>>
    %1006 = vector.broadcast %1005 : f32 to vector<16x16xf32>
    %1007 = arith.mulf %1006, %71 : vector<16x16xf32>
    %1008 = arith.addf %1004, %1007 : vector<16x16xf32>
    %c228 = arith.constant 228 : index
    %1009 = memref.load %arg2[%c228] : memref<256xf32, #tpu.memory_space<smem>>
    %1010 = vector.broadcast %1009 : f32 to vector<16x16xf32>
    %1011 = arith.mulf %1010, %21 : vector<16x16xf32>
    %1012 = arith.addf %1008, %1011 : vector<16x16xf32>
    %c229 = arith.constant 229 : index
    %1013 = memref.load %arg2[%c229] : memref<256xf32, #tpu.memory_space<smem>>
    %1014 = vector.broadcast %1013 : f32 to vector<16x16xf32>
    %1015 = arith.mulf %1014, %39 : vector<16x16xf32>
    %1016 = arith.addf %1012, %1015 : vector<16x16xf32>
    %c230 = arith.constant 230 : index
    %1017 = memref.load %arg2[%c230] : memref<256xf32, #tpu.memory_space<smem>>
    %1018 = vector.broadcast %1017 : f32 to vector<16x16xf32>
    %1019 = arith.mulf %1018, %57 : vector<16x16xf32>
    %1020 = arith.addf %1016, %1019 : vector<16x16xf32>
    %c231 = arith.constant 231 : index
    %1021 = memref.load %arg2[%c231] : memref<256xf32, #tpu.memory_space<smem>>
    %1022 = vector.broadcast %1021 : f32 to vector<16x16xf32>
    %1023 = arith.mulf %1022, %75 : vector<16x16xf32>
    %1024 = arith.addf %1020, %1023 : vector<16x16xf32>
    %c244 = arith.constant 244 : index
    %1025 = memref.load %arg2[%c244] : memref<256xf32, #tpu.memory_space<smem>>
    %1026 = vector.broadcast %1025 : f32 to vector<16x16xf32>
    %1027 = arith.mulf %1026, %23 : vector<16x16xf32>
    %1028 = arith.addf %1024, %1027 : vector<16x16xf32>
    %c245 = arith.constant 245 : index
    %1029 = memref.load %arg2[%c245] : memref<256xf32, #tpu.memory_space<smem>>
    %1030 = vector.broadcast %1029 : f32 to vector<16x16xf32>
    %1031 = arith.mulf %1030, %41 : vector<16x16xf32>
    %1032 = arith.addf %1028, %1031 : vector<16x16xf32>
    %c246 = arith.constant 246 : index
    %1033 = memref.load %arg2[%c246] : memref<256xf32, #tpu.memory_space<smem>>
    %1034 = vector.broadcast %1033 : f32 to vector<16x16xf32>
    %1035 = arith.mulf %1034, %59 : vector<16x16xf32>
    %1036 = arith.addf %1032, %1035 : vector<16x16xf32>
    %c247 = arith.constant 247 : index
    %1037 = memref.load %arg2[%c247] : memref<256xf32, #tpu.memory_space<smem>>
    %1038 = vector.broadcast %1037 : f32 to vector<16x16xf32>
    %1039 = arith.mulf %1038, %77 : vector<16x16xf32>
    %1040 = arith.addf %1036, %1039 : vector<16x16xf32>
    %c0_84 = arith.constant 0 : index
    %c3_85 = arith.constant 3 : index
    %c1_86 = arith.constant 1 : index
    %c0_87 = arith.constant 0 : index
    %c0_88 = arith.constant 0 : index
    %1041 = vector.load %arg4[%c0_84, %c3_85, %c1_86, %c0_87, %c0_88] : memref<1x4x4x16x16xf32, #tpu.memory_space<vmem>>, vector<1x1x1x16x16xf32>
    %1042 = vector.shape_cast %1041 : vector<1x1x1x16x16xf32> to vector<16x16xf32>
    %1043 = vector.shape_cast %1040 : vector<16x16xf32> to vector<1x1x1x16x16xf32>
    tpu.vector_store %arg4[%c0_84, %c3_85, %c1_86, %c0_87, %c0_88], %1043 {strides = array<i32>} : memref<1x4x4x16x16xf32, #tpu.memory_space<vmem>>, vector<1x1x1x16x16xf32>,
    %c2_89 = arith.constant 2 : index
    %1044 = memref.load %arg3[%c2_89] : memref<4xf32, #tpu.memory_space<smem>>
    %1045 = vector.broadcast %1044 : f32 to vector<16x16xf32>
    %c200 = arith.constant 200 : index
    %1046 = memref.load %arg2[%c200] : memref<256xf32, #tpu.memory_space<smem>>
    %1047 = vector.broadcast %1046 : f32 to vector<16x16xf32>
    %1048 = arith.mulf %1047, %15 : vector<16x16xf32>
    %1049 = arith.addf %1045, %1048 : vector<16x16xf32>
    %c201 = arith.constant 201 : index
    %1050 = memref.load %arg2[%c201] : memref<256xf32, #tpu.memory_space<smem>>
    %1051 = vector.broadcast %1050 : f32 to vector<16x16xf32>
    %1052 = arith.mulf %1051, %33 : vector<16x16xf32>
    %1053 = arith.addf %1049, %1052 : vector<16x16xf32>
    %c202 = arith.constant 202 : index
    %1054 = memref.load %arg2[%c202] : memref<256xf32, #tpu.memory_space<smem>>
    %1055 = vector.broadcast %1054 : f32 to vector<16x16xf32>
    %1056 = arith.mulf %1055, %51 : vector<16x16xf32>
    %1057 = arith.addf %1053, %1056 : vector<16x16xf32>
    %c203 = arith.constant 203 : index
    %1058 = memref.load %arg2[%c203] : memref<256xf32, #tpu.memory_space<smem>>
    %1059 = vector.broadcast %1058 : f32 to vector<16x16xf32>
    %1060 = arith.mulf %1059, %69 : vector<16x16xf32>
    %1061 = arith.addf %1057, %1060 : vector<16x16xf32>
    %c216 = arith.constant 216 : index
    %1062 = memref.load %arg2[%c216] : memref<256xf32, #tpu.memory_space<smem>>
    %1063 = vector.broadcast %1062 : f32 to vector<16x16xf32>
    %1064 = arith.mulf %1063, %17 : vector<16x16xf32>
    %1065 = arith.addf %1061, %1064 : vector<16x16xf32>
    %c217 = arith.constant 217 : index
    %1066 = memref.load %arg2[%c217] : memref<256xf32, #tpu.memory_space<smem>>
    %1067 = vector.broadcast %1066 : f32 to vector<16x16xf32>
    %1068 = arith.mulf %1067, %35 : vector<16x16xf32>
    %1069 = arith.addf %1065, %1068 : vector<16x16xf32>
    %c218 = arith.constant 218 : index
    %1070 = memref.load %arg2[%c218] : memref<256xf32, #tpu.memory_space<smem>>
    %1071 = vector.broadcast %1070 : f32 to vector<16x16xf32>
    %1072 = arith.mulf %1071, %53 : vector<16x16xf32>
    %1073 = arith.addf %1069, %1072 : vector<16x16xf32>
    %c219 = arith.constant 219 : index
    %1074 = memref.load %arg2[%c219] : memref<256xf32, #tpu.memory_space<smem>>
    %1075 = vector.broadcast %1074 : f32 to vector<16x16xf32>
    %1076 = arith.mulf %1075, %71 : vector<16x16xf32>
    %1077 = arith.addf %1073, %1076 : vector<16x16xf32>
    %c232 = arith.constant 232 : index
    %1078 = memref.load %arg2[%c232] : memref<256xf32, #tpu.memory_space<smem>>
    %1079 = vector.broadcast %1078 : f32 to vector<16x16xf32>
    %1080 = arith.mulf %1079, %21 : vector<16x16xf32>
    %1081 = arith.addf %1077, %1080 : vector<16x16xf32>
    %c233 = arith.constant 233 : index
    %1082 = memref.load %arg2[%c233] : memref<256xf32, #tpu.memory_space<smem>>
    %1083 = vector.broadcast %1082 : f32 to vector<16x16xf32>
    %1084 = arith.mulf %1083, %39 : vector<16x16xf32>
    %1085 = arith.addf %1081, %1084 : vector<16x16xf32>
    %c234 = arith.constant 234 : index
    %1086 = memref.load %arg2[%c234] : memref<256xf32, #tpu.memory_space<smem>>
    %1087 = vector.broadcast %1086 : f32 to vector<16x16xf32>
    %1088 = arith.mulf %1087, %57 : vector<16x16xf32>
    %1089 = arith.addf %1085, %1088 : vector<16x16xf32>
    %c235 = arith.constant 235 : index
    %1090 = memref.load %arg2[%c235] : memref<256xf32, #tpu.memory_space<smem>>
    %1091 = vector.broadcast %1090 : f32 to vector<16x16xf32>
    %1092 = arith.mulf %1091, %75 : vector<16x16xf32>
    %1093 = arith.addf %1089, %1092 : vector<16x16xf32>
    %c248 = arith.constant 248 : index
    %1094 = memref.load %arg2[%c248] : memref<256xf32, #tpu.memory_space<smem>>
    %1095 = vector.broadcast %1094 : f32 to vector<16x16xf32>
    %1096 = arith.mulf %1095, %23 : vector<16x16xf32>
    %1097 = arith.addf %1093, %1096 : vector<16x16xf32>
    %c249 = arith.constant 249 : index
    %1098 = memref.load %arg2[%c249] : memref<256xf32, #tpu.memory_space<smem>>
    %1099 = vector.broadcast %1098 : f32 to vector<16x16xf32>
    %1100 = arith.mulf %1099, %41 : vector<16x16xf32>
    %1101 = arith.addf %1097, %1100 : vector<16x16xf32>
    %c250 = arith.constant 250 : index
    %1102 = memref.load %arg2[%c250] : memref<256xf32, #tpu.memory_space<smem>>
    %1103 = vector.broadcast %1102 : f32 to vector<16x16xf32>
    %1104 = arith.mulf %1103, %59 : vector<16x16xf32>
    %1105 = arith.addf %1101, %1104 : vector<16x16xf32>
    %c251 = arith.constant 251 : index
    %1106 = memref.load %arg2[%c251] : memref<256xf32, #tpu.memory_space<smem>>
    %1107 = vector.broadcast %1106 : f32 to vector<16x16xf32>
    %1108 = arith.mulf %1107, %77 : vector<16x16xf32>
    %1109 = arith.addf %1105, %1108 : vector<16x16xf32>
    %c0_90 = arith.constant 0 : index
    %c3_91 = arith.constant 3 : index
    %c2_92 = arith.constant 2 : index
    %c0_93 = arith.constant 0 : index
    %c0_94 = arith.constant 0 : index
    %1110 = vector.load %arg4[%c0_90, %c3_91, %c2_92, %c0_93, %c0_94] : memref<1x4x4x16x16xf32, #tpu.memory_space<vmem>>, vector<1x1x1x16x16xf32>
    %1111 = vector.shape_cast %1110 : vector<1x1x1x16x16xf32> to vector<16x16xf32>
    %1112 = vector.shape_cast %1109 : vector<16x16xf32> to vector<1x1x1x16x16xf32>
    tpu.vector_store %arg4[%c0_90, %c3_91, %c2_92, %c0_93, %c0_94], %1112 {strides = array<i32>} : memref<1x4x4x16x16xf32, #tpu.memory_space<vmem>>, vector<1x1x1x16x16xf32>,
    %c3_95 = arith.constant 3 : index
    %1113 = memref.load %arg3[%c3_95] : memref<4xf32, #tpu.memory_space<smem>>
    %1114 = vector.broadcast %1113 : f32 to vector<16x16xf32>
    %c204 = arith.constant 204 : index
    %1115 = memref.load %arg2[%c204] : memref<256xf32, #tpu.memory_space<smem>>
    %1116 = vector.broadcast %1115 : f32 to vector<16x16xf32>
    %1117 = arith.mulf %1116, %15 : vector<16x16xf32>
    %1118 = arith.addf %1114, %1117 : vector<16x16xf32>
    %c205 = arith.constant 205 : index
    %1119 = memref.load %arg2[%c205] : memref<256xf32, #tpu.memory_space<smem>>
    %1120 = vector.broadcast %1119 : f32 to vector<16x16xf32>
    %1121 = arith.mulf %1120, %33 : vector<16x16xf32>
    %1122 = arith.addf %1118, %1121 : vector<16x16xf32>
    %c206 = arith.constant 206 : index
    %1123 = memref.load %arg2[%c206] : memref<256xf32, #tpu.memory_space<smem>>
    %1124 = vector.broadcast %1123 : f32 to vector<16x16xf32>
    %1125 = arith.mulf %1124, %51 : vector<16x16xf32>
    %1126 = arith.addf %1122, %1125 : vector<16x16xf32>
    %c207 = arith.constant 207 : index
    %1127 = memref.load %arg2[%c207] : memref<256xf32, #tpu.memory_space<smem>>
    %1128 = vector.broadcast %1127 : f32 to vector<16x16xf32>
    %1129 = arith.mulf %1128, %69 : vector<16x16xf32>
    %1130 = arith.addf %1126, %1129 : vector<16x16xf32>
    %c220 = arith.constant 220 : index
    %1131 = memref.load %arg2[%c220] : memref<256xf32, #tpu.memory_space<smem>>
    %1132 = vector.broadcast %1131 : f32 to vector<16x16xf32>
    %1133 = arith.mulf %1132, %17 : vector<16x16xf32>
    %1134 = arith.addf %1130, %1133 : vector<16x16xf32>
    %c221 = arith.constant 221 : index
    %1135 = memref.load %arg2[%c221] : memref<256xf32, #tpu.memory_space<smem>>
    %1136 = vector.broadcast %1135 : f32 to vector<16x16xf32>
    %1137 = arith.mulf %1136, %35 : vector<16x16xf32>
    %1138 = arith.addf %1134, %1137 : vector<16x16xf32>
    %c222 = arith.constant 222 : index
    %1139 = memref.load %arg2[%c222] : memref<256xf32, #tpu.memory_space<smem>>
    %1140 = vector.broadcast %1139 : f32 to vector<16x16xf32>
    %1141 = arith.mulf %1140, %53 : vector<16x16xf32>
    %1142 = arith.addf %1138, %1141 : vector<16x16xf32>
    %c223 = arith.constant 223 : index
    %1143 = memref.load %arg2[%c223] : memref<256xf32, #tpu.memory_space<smem>>
    %1144 = vector.broadcast %1143 : f32 to vector<16x16xf32>
    %1145 = arith.mulf %1144, %71 : vector<16x16xf32>
    %1146 = arith.addf %1142, %1145 : vector<16x16xf32>
    %c236 = arith.constant 236 : index
    %1147 = memref.load %arg2[%c236] : memref<256xf32, #tpu.memory_space<smem>>
    %1148 = vector.broadcast %1147 : f32 to vector<16x16xf32>
    %1149 = arith.mulf %1148, %21 : vector<16x16xf32>
    %1150 = arith.addf %1146, %1149 : vector<16x16xf32>
    %c237 = arith.constant 237 : index
    %1151 = memref.load %arg2[%c237] : memref<256xf32, #tpu.memory_space<smem>>
    %1152 = vector.broadcast %1151 : f32 to vector<16x16xf32>
    %1153 = arith.mulf %1152, %39 : vector<16x16xf32>
    %1154 = arith.addf %1150, %1153 : vector<16x16xf32>
    %c238 = arith.constant 238 : index
    %1155 = memref.load %arg2[%c238] : memref<256xf32, #tpu.memory_space<smem>>
    %1156 = vector.broadcast %1155 : f32 to vector<16x16xf32>
    %1157 = arith.mulf %1156, %57 : vector<16x16xf32>
    %1158 = arith.addf %1154, %1157 : vector<16x16xf32>
    %c239 = arith.constant 239 : index
    %1159 = memref.load %arg2[%c239] : memref<256xf32, #tpu.memory_space<smem>>
    %1160 = vector.broadcast %1159 : f32 to vector<16x16xf32>
    %1161 = arith.mulf %1160, %75 : vector<16x16xf32>
    %1162 = arith.addf %1158, %1161 : vector<16x16xf32>
    %c252 = arith.constant 252 : index
    %1163 = memref.load %arg2[%c252] : memref<256xf32, #tpu.memory_space<smem>>
    %1164 = vector.broadcast %1163 : f32 to vector<16x16xf32>
    %1165 = arith.mulf %1164, %23 : vector<16x16xf32>
    %1166 = arith.addf %1162, %1165 : vector<16x16xf32>
    %c253 = arith.constant 253 : index
    %1167 = memref.load %arg2[%c253] : memref<256xf32, #tpu.memory_space<smem>>
    %1168 = vector.broadcast %1167 : f32 to vector<16x16xf32>
    %1169 = arith.mulf %1168, %41 : vector<16x16xf32>
    %1170 = arith.addf %1166, %1169 : vector<16x16xf32>
    %c254 = arith.constant 254 : index
    %1171 = memref.load %arg2[%c254] : memref<256xf32, #tpu.memory_space<smem>>
    %1172 = vector.broadcast %1171 : f32 to vector<16x16xf32>
    %1173 = arith.mulf %1172, %59 : vector<16x16xf32>
    %1174 = arith.addf %1170, %1173 : vector<16x16xf32>
    %c255 = arith.constant 255 : index
    %1175 = memref.load %arg2[%c255] : memref<256xf32, #tpu.memory_space<smem>>
    %1176 = vector.broadcast %1175 : f32 to vector<16x16xf32>
    %1177 = arith.mulf %1176, %77 : vector<16x16xf32>
    %1178 = arith.addf %1174, %1177 : vector<16x16xf32>
    %c0_96 = arith.constant 0 : index
    %c3_97 = arith.constant 3 : index
    %c3_98 = arith.constant 3 : index
    %c0_99 = arith.constant 0 : index
    %c0_100 = arith.constant 0 : index
    %1179 = vector.load %arg4[%c0_96, %c3_97, %c3_98, %c0_99, %c0_100] : memref<1x4x4x16x16xf32, #tpu.memory_space<vmem>>, vector<1x1x1x16x16xf32>
    %1180 = vector.shape_cast %1179 : vector<1x1x1x16x16xf32> to vector<16x16xf32>
    %1181 = vector.shape_cast %1178 : vector<16x16xf32> to vector<1x1x1x16x16xf32>
    tpu.vector_store %arg4[%c0_96, %c3_97, %c3_98, %c0_99, %c0_100], %1181 {strides = array<i32>} : memref<1x4x4x16x16xf32, #tpu.memory_space<vmem>>, vector<1x1x1x16x16xf32>,
    return
  }
  func.func @transform_0(%arg0: i32) -> (i32, i32, i32, i32) {
    %c0_i32 = arith.constant 0 : i32
    %c0_i32_0 = arith.constant 0 : i32
    %c0_i32_1 = arith.constant 0 : i32
    %c0_i32_2 = arith.constant 0 : i32
    return %arg0, %c0_i32, %c0_i32_0, %c0_i32_1 : i32, i32, i32, i32
  }
  func.func @transform_1(%arg0: i32) -> i32 {
    %c0_i32 = arith.constant 0 : i32
    %c0_i32_0 = arith.constant 0 : i32
    return %c0_i32 : i32
  }
  func.func @transform_2(%arg0: i32) -> i32 {
    %c0_i32 = arith.constant 0 : i32
    %c0_i32_0 = arith.constant 0 : i32
    return %c0_i32 : i32
  }
  func.func @transform_3(%arg0: i32) -> (i32, i32, i32, i32, i32) {
    %c0_i32 = arith.constant 0 : i32
    %c0_i32_0 = arith.constant 0 : i32
    %c0_i32_1 = arith.constant 0 : i32
    %c0_i32_2 = arith.constant 0 : i32
    %c0_i32_3 = arith.constant 0 : i32
    return %arg0, %c0_i32, %c0_i32_0, %c0_i32_1, %c0_i32_2 : i32, i32, i32, i32, i32
  }
}

</mosaic_0001>

<llo_original>
// kernel: upsample_module.1
$region0: #{upsample_module.1}
  #allocation0 [shape = 'u32[]', space=smem, size = 0x4, offset = 0x4, fixed_abs, tag = 'smem constant byte address 0x4 - core index']
  #allocation1 [shape = 'u32[144,128]{1,0:T(1,128)}', space=vmem, size = 0x12000, scoped, tag = 'internal scratch']
  %s0 = inlined_call_operand.vmem [shape: f32[2,4,16,16], index: 0, kind: input, shape index: {}]
  %s1 = inlined_call_operand.vmem [shape: f32[256], index: 1, kind: input, shape index: {}]
  %s2 = inlined_call_operand.vmem [shape: f32[4], index: 2, kind: input, shape index: {}]
  %s3 = inlined_call_operand.vmem [shape: f32[2,4,4,16,16], index: 3, kind: output, shape index: {}]
  %s4 = sld [smem:[#allocation0]]
  $region53: #{upsample_module.1} parent=0
    _
  %s6 = ssub.s32 1, %s4
  %s7 = scalar_select 0, %s6, %s4
  $region1: #{upsample_module.1} parent=0
    #allocation2 [shape = 'u8[1024]{0}', space=smem, size = 0x400, scoped, tag = 'input window, operand 1, single buffered']
    #allocation3 [shape = 's32[2]{0}', space=sflag, size = 0x8, scoped, tag = 'scoped memory for upsample_module.1']
    #allocation4 [shape = 'u8[512]{0}', space=smem, size = 0x200, scoped, tag = 'input window, operand 2, single buffered']
    #allocation5 [shape = 's32[1]{0}', space=sflag, size = 0x4, scoped, tag = 'scoped memory for upsample_module.1']
    %8 = vsyncpa [#allocation3], 0
    %9 = vsyncpa [#allocation5], 0
    loop: start=0, step=1, limit=4
    $region2: #{upsample_module.1} parent=1 // loop_pre_header
      _
    $region3: #{upsample_module.1} parent=1 // loop_header
      %s11 = sphi 0, %s15
      %p12 = scmp.ge.s32.totalorder %s11, 4
      %s21 = sphi 0, %s23
      %s24 = sphi 0, %s21
      %s25 = sphi 0, %s24
      %s41 = sphi 0, %s25
      %s45 = sphi 0, %s45
      %s47 = sphi 0, %s45
      %s48 = sphi 0, %s47
      %s62 = sphi 0, %s48
      %s66 = sphi 0, %s66
      %s68 = sphi 0, %s66
      %s69 = sphi 0, %s68
      %s83 = sphi 0, %s69
      %s89 = sphi 0, %s91
      %s92 = sphi 0, %s89
      %s93 = sphi 0, %s92
      %s109 = sphi 0, %s93
    $region4: #{upsample_module.1} parent=1 // loop_header_branch
      %14 = sbr.rel (%p12) target = $region8
    $region5: #{upsample_module.1} parent=1 // loop_body
      %s16 = ssub.s32 %s11, 1
      %s17 = ssub.s32 %s11, 2
      %s18 = sadd.s32 %s11, 1
      %s19 = ssub.s32 %s11, %s18
      %p20 = scmp.eq.s32.totalorder %s19, 0
      %s22 = sadd.s32 %s21, 1
      %s23 = scalar_select %p20, %s21, %s22
      %p26 = pneg %p20
      %p27 = scmp.eq.s32.totalorder %s11, 1
      %p28 = por %p26, %p27
      %p29 = scmp.ne.s32.totalorder %s21, %s24
      %p30 = scmp.eq.s32.totalorder %s11, 0
      %p31 = por %p29, %p30
      %p32 = scmp.ne.s32.totalorder %s21, %s24
      %p33 = scmp.eq.s32.totalorder %s16, 1
      %p34 = por %p32, %p33
      %p35 = scmp.ne.s32.totalorder %s24, %s25
      %p36 = scmp.eq.s32.totalorder %s16, 0
      %p37 = por %p35, %p36
      %p38 = scmp.ne.s32.totalorder %s24, %s25
      %p39 = scmp.eq.s32.totalorder %s17, 1
      %p40 = por %p38, %p39
      %p42 = scmp.ne.s32.totalorder %s25, %s41
      %p43 = scmp.eq.s32.totalorder %s17, 0
      %p44 = por %p42, %p43
      %s46 = sadd.s32 %s45, 1
      %p49 = scmp.eq.s32.totalorder %s11, 1
      %p50 = scmp.ne.s32.totalorder %s45, %s47
      %p51 = scmp.eq.s32.totalorder %s11, 0
      %p52 = por %p50, %p51
      %p53 = scmp.ne.s32.totalorder %s45, %s47
      %p54 = scmp.eq.s32.totalorder %s16, 1
      %p55 = por %p53, %p54
      %p56 = scmp.ne.s32.totalorder %s47, %s48
      %p57 = scmp.eq.s32.totalorder %s16, 0
      %p58 = por %p56, %p57
      %p59 = scmp.ne.s32.totalorder %s47, %s48
      %p60 = scmp.eq.s32.totalorder %s17, 1
      %p61 = por %p59, %p60
      %p63 = scmp.ne.s32.totalorder %s48, %s62
      %p64 = scmp.eq.s32.totalorder %s17, 0
      %p65 = por %p63, %p64
      %s67 = sadd.s32 %s66, 1
      %p70 = scmp.eq.s32.totalorder %s11, 1
      %p71 = scmp.ne.s32.totalorder %s66, %s68
      %p72 = scmp.eq.s32.totalorder %s11, 0
      %p73 = por %p71, %p72
      %p74 = scmp.ne.s32.totalorder %s66, %s68
      %p75 = scmp.eq.s32.totalorder %s16, 1
      %p76 = por %p74, %p75
      %p77 = scmp.ne.s32.totalorder %s68, %s69
      %p78 = scmp.eq.s32.totalorder %s16, 0
      %p79 = por %p77, %p78
      %p80 = scmp.ne.s32.totalorder %s68, %s69
      %p81 = scmp.eq.s32.totalorder %s17, 1
      %p82 = por %p80, %p81
      %p84 = scmp.ne.s32.totalorder %s69, %s83
      %p85 = scmp.eq.s32.totalorder %s17, 0
      %p86 = por %p84, %p85
      %s87 = ssub.s32 %s11, %s18
      %p88 = scmp.eq.s32.totalorder %s87, 0
      %s90 = sadd.s32 %s89, 1
      %s91 = scalar_select %p88, %s89, %s90
      %p94 = pneg %p88
      %p95 = scmp.eq.s32.totalorder %s11, 1
      %p96 = por %p94, %p95
      %p97 = scmp.ne.s32.totalorder %s89, %s92
      %p98 = scmp.eq.s32.totalorder %s11, 0
      %p99 = por %p97, %p98
      %p100 = scmp.ne.s32.totalorder %s89, %s92
      %p101 = scmp.eq.s32.totalorder %s16, 1
      %p102 = por %p100, %p101
      %p103 = scmp.ne.s32.totalorder %s92, %s93
      %p104 = scmp.eq.s32.totalorder %s16, 0
      %p105 = por %p103, %p104
      %p106 = scmp.ne.s32.totalorder %s92, %s93
      %p107 = scmp.eq.s32.totalorder %s17, 1
      %p108 = por %p106, %p107
      %p110 = scmp.ne.s32.totalorder %s93, %s109
      %p111 = scmp.eq.s32.totalorder %s17, 0
      %p112 = por %p110, %p111
      %p113 = scmp.le.s32.totalorder 1, %s11
      %p114 = scmp.lt.s32.totalorder %s11, 3
      %p115 = pnand %p113, %p114
      %p116 = pneg %p115
      // Predicated region
      $region9: #{upsample_module.1} parent=5 // pred_check
        _
      $region10: #{upsample_module.1} parent=5 // pred_check_branch
        %118 = sbr.rel (%p115) target = $region12
      $region11: #{upsample_module.1} parent=5 // pred_region
        %s119 = ssub.s32 %s11, 1
        // Predicated region
        $region13: #{upsample_module.1} parent=11 // pred_check
          %p120 = pneg %p58
        $region14: #{upsample_module.1} parent=11 // pred_check_branch
          %122 = sbr.rel (%p120) target = $region16
        $region15: #{upsample_module.1} parent=11 // pred_region
          %s124 = ssub.s32 32, 32
          %125 = vsyncadd [#allocation3], %s124
          %s127 = sshll.u32 %s1, 4
          %s128 = int_to_ptr.vmem [resolvable:$true] %s127
          %130 = dma.vmem_to_smem %s128, 32, [#allocation2], [#allocation3]
        $region16: #{upsample_module.1} parent=11 // pred_fallthru
          _
        // Predicated region
        $region17: #{upsample_module.1} parent=11 // pred_check
          %p131 = pneg %p79
        $region18: #{upsample_module.1} parent=11 // pred_check_branch
          %133 = sbr.rel (%p131) target = $region20
        $region19: #{upsample_module.1} parent=11 // pred_region
          %s135 = ssub.s32 16, 16
          %136 = vsyncadd [#allocation5], %s135
          %s138 = sshll.u32 %s2, 4
          %s139 = int_to_ptr.vmem [resolvable:$true] %s138
          %141 = dma.vmem_to_smem %s139, 16, [#allocation4], [#allocation5]
        $region20: #{upsample_module.1} parent=11 // pred_fallthru
          _
      $region12: #{upsample_module.1} parent=5 // pred_fallthru
        _
      %p142 = scmp.lt.s32.totalorder %s11, 2
      // Predicated region
      $region21: #{upsample_module.1} parent=5 // pred_check
        %p143 = pneg %p142
      $region22: #{upsample_module.1} parent=5 // pred_check_branch
        %145 = sbr.rel (%p143) target = $region24
      $region23: #{upsample_module.1} parent=5 // pred_region
        // Predicated region
        $region25: #{upsample_module.1} parent=23 // pred_check
          %p146 = pneg %p31
        $region26: #{upsample_module.1} parent=23 // pred_check_branch
          %148 = sbr.rel (%p146) target = $region28
        $region27: #{upsample_module.1} parent=23 // pred_region
          %p149 = scmp.lt.s32.totalorder %s11, 1
          %s150 = scalar_select %p149, %s11, 1
          %s151 = smul.addr %s150, 8
          %s152 = smul.addr %s151, 8
          %s153 = scalar_lea.vmem %s0, %s152
        $region28: #{upsample_module.1} parent=23 // pred_fallthru
          _
      $region24: #{upsample_module.1} parent=5 // pred_fallthru
        _
      %p154 = scmp.le.s32.totalorder 1, %s11
      %p155 = scmp.lt.s32.totalorder %s11, 3
      %p156 = pnand %p154, %p155
      %p157 = pneg %p156
      // Predicated region
      $region29: #{upsample_module.1} parent=5 // pred_check
        _
      $region30: #{upsample_module.1} parent=5 // pred_check_branch
        %159 = sbr.rel (%p156) target = $region32
      $region31: #{upsample_module.1} parent=5 // pred_region
        %s160 = ssub.s32 %s11, 1
        // Predicated region
        $region33: #{upsample_module.1} parent=31 // pred_check
          %p161 = pneg %p58
        $region34: #{upsample_module.1} parent=31 // pred_check_branch
          %163 = sbr.rel (%p161) target = $region36
        $region35: #{upsample_module.1} parent=31 // pred_region
          %164 = dma.done [#allocation3], 32
        $region36: #{upsample_module.1} parent=31 // pred_fallthru
          _
        // Predicated region
        $region37: #{upsample_module.1} parent=31 // pred_check
          %p165 = pneg %p79
        $region38: #{upsample_module.1} parent=31 // pred_check_branch
          %167 = sbr.rel (%p165) target = $region40
        $region39: #{upsample_module.1} parent=31 // pred_region
          %168 = dma.done [#allocation5], 16
        $region40: #{upsample_module.1} parent=31 // pred_fallthru
          _
        %169 = sfence
        %p170 = scmp.lt.s32.totalorder %s16, 1
        %s171 = scalar_select %p170, %s16, 1
        %s172 = smul.addr %s171, 8
        %s173 = smul.addr %s172, 8
        %s174 = scalar_lea.vmem %s0, %s173
        %p175 = pneg %p37
        %p176 = pneg %p34
        %p177 = pneg %p58
        %p178 = pneg %p55
        %p179 = pneg %p79
        %p180 = pneg %p76
        %p181 = pneg %p105
        %p182 = pneg %p102
        %p183 = scmp.lt.s32.totalorder %s16, 1
        %s184 = scalar_select %p183, %s16, 1
        %s185 = smul.addr %s184, 32
        %s186 = smul.addr %s185, 8
        %s187 = scalar_lea.vmem %s3, %s186
        %p188 = scmp.lt.s32.totalorder %s16, 1
        %s189 = scalar_select %p188, %s16, 1
        %s190 = smul.addr %s189, 8
        %s191 = smul.addr %s190, 8
        %s192 = scalar_lea.vmem %s0, %s191
        %p193 = scmp.lt.s32.totalorder %s16, 1
        %s194 = scalar_select %p193, %s16, 1
        %s195 = smul.addr %s194, 32
        %s196 = smul.addr %s195, 8
        %s197 = scalar_lea.vmem %s3, %s196
        %v198 = vld [vmem:[%s192] sm:$0xff]
        %v199 = vld [vmem:[%s192 + $0x8] sm:$0xff]
        %v200 = vld [vmem:[%s192 + $0x10] sm:$0xff]
        %v201 = vld [vmem:[%s192 + $0x18] sm:$0xff]
        %v202 = vld [vmem:[%s192 + $0x20] sm:$0xff]
        %v203 = vld [vmem:[%s192 + $0x28] sm:$0xff]
        %v204 = vld [vmem:[%s192 + $0x30] sm:$0xff]
        %v205 = vld [vmem:[%s192 + $0x38] sm:$0xff]
        %vm214 = vcmask 1040384
        %v215 = vrot.slane %v198, 7
        %v216 = vrot.slane %v199, 7
        %v217 = vsel %vm214, %v215, %v216
        %v218 = vrot.slane %v200, 7
        %v219 = vrot.slane %v201, 7
        %v220 = vsel %vm214, %v218, %v219
        %v221 = vrot.slane %v202, 7
        %v222 = vrot.slane %v203, 7
        %v223 = vsel %vm214, %v221, %v222
        %v224 = vrot.slane %v204, 7
        %v225 = vrot.slane %v205, 7
        %v226 = vsel %vm214, %v224, %v225
        %v235 = vsel %vm214, 0.0, %v215
        %v236 = vsel %vm214, 0.0, %v218
        %v237 = vsel %vm214, 0.0, %v221
        %v238 = vsel %vm214, 0.0, %v224
        %v239 = vsel %vm214, %v216, 0.0
        %v240 = vsel %vm214, %v219, 0.0
        %v241 = vsel %vm214, %v222, 0.0
        %v242 = vsel %vm214, %v225, 0.0
        %251 = vrot.lane.b32.xlu0 %v235, 1
        %v252 = vpop.permute.xlu0 %251
        %253 = vrot.lane.b32.xlu0 %v217, 1
        %v254 = vpop.permute.xlu0 %253
        %255 = vrot.lane.b32.xlu0 %v239, 1
        %v256 = vpop.permute.xlu0 %255
        %257 = vrot.lane.b32.xlu0 %v236, 1
        %v258 = vpop.permute.xlu0 %257
        %259 = vrot.lane.b32.xlu0 %v220, 1
        %v260 = vpop.permute.xlu0 %259
        %261 = vrot.lane.b32.xlu0 %v240, 1
        %v262 = vpop.permute.xlu0 %261
        %263 = vrot.lane.b32.xlu0 %v237, 1
        %v264 = vpop.permute.xlu0 %263
        %265 = vrot.lane.b32.xlu0 %v223, 1
        %v266 = vpop.permute.xlu0 %265
        %267 = vrot.lane.b32.xlu0 %v241, 1
        %v268 = vpop.permute.xlu0 %267
        %269 = vrot.lane.b32.xlu0 %v238, 1
        %v270 = vpop.permute.xlu0 %269
        %271 = vrot.lane.b32.xlu0 %v226, 1
        %v272 = vpop.permute.xlu0 %271
        %273 = vrot.lane.b32.xlu0 %v242, 1
        %v274 = vpop.permute.xlu0 %273
        %vm287 = vcmask 7168
        %v288 = vsel %vm287, 0.0, %v252
        %v289 = vsel %vm287, 0.0, %v254
        %v290 = vsel %vm287, 0.0, %v256
        %v291 = vsel %vm287, 0.0, %v258
        %v292 = vsel %vm287, 0.0, %v260
        %v293 = vsel %vm287, 0.0, %v262
        %v294 = vsel %vm287, 0.0, %v264
        %v295 = vsel %vm287, 0.0, %v266
        %v296 = vsel %vm287, 0.0, %v268
        %v297 = vsel %vm287, 0.0, %v270
        %v298 = vsel %vm287, 0.0, %v272
        %v299 = vsel %vm287, 0.0, %v274
        %vm300 = vcmask 138240
        %v301 = vsel %vm300, %v288, 0.0
        %v302 = vsel %vm300, %v289, 0.0
        %v303 = vsel %vm300, %v290, 0.0
        %v304 = vsel %vm300, %v291, 0.0
        %v305 = vsel %vm300, %v292, 0.0
        %v306 = vsel %vm300, %v293, 0.0
        %v307 = vsel %vm300, %v294, 0.0
        %v308 = vsel %vm300, %v295, 0.0
        %v309 = vsel %vm300, %v296, 0.0
        %v310 = vsel %vm300, %v297, 0.0
        %v311 = vsel %vm300, %v298, 0.0
        %v312 = vsel %vm300, %v299, 0.0
        %s313 = sld [smem:[#allocation4]]
        %v314 = vstv %s313
        %s315 = sld [smem:[#allocation2]]
        %v316 = vstv %s315
        %v317 = vmul.f32 %v316, %v301
        %v318 = vmul.f32 %v316, %v302
        %v319 = vadd.f32 %v314, %v317
        %v320 = vadd.f32 %v314, %v318
        %s321 = sld [smem:[#allocation2 + $0x1]]
        %v322 = vstv %s321
        %v323 = vmul.f32 %v322, %v304
        %v324 = vmul.f32 %v322, %v305
        %v325 = vadd.f32 %v319, %v323
        %v326 = vadd.f32 %v320, %v324
        %s327 = sld [smem:[#allocation2 + $0x2]]
        %v328 = vstv %s327
        %v329 = vmul.f32 %v328, %v307
        %v330 = vmul.f32 %v328, %v308
        %v331 = vadd.f32 %v325, %v329
        %v332 = vadd.f32 %v326, %v330
        %s333 = sld [smem:[#allocation2 + $0x3]]
        %v334 = vstv %s333
        %v335 = vmul.f32 %v334, %v310
        %v336 = vmul.f32 %v334, %v311
        %v337 = vadd.f32 %v331, %v335
        %v338 = vadd.f32 %v332, %v336
        %s339 = sld [smem:[#allocation2 + $0x10]]
        %v340 = vstv %s339
        %v341 = vmul.f32 %v340, %v301
        %v342 = vmul.f32 %v340, %v302
        %345 = vrot.lane.b32.xlu0 %v341, 127
        %v346 = vpop.permute.xlu0 %345
        %347 = vrot.lane.b32.xlu0 %v342, 127
        %v348 = vpop.permute.xlu0 %347
        %v351 = vadd.f32 %v337, %v346
        %v352 = vadd.f32 %v338, %v348
        %s353 = sld [smem:[#allocation2 + $0x11]]
        %v354 = vstv %s353
        %v355 = vmul.f32 %v354, %v304
        %v356 = vmul.f32 %v354, %v305
        %359 = vrot.lane.b32.xlu0 %v355, 127
        %v360 = vpop.permute.xlu0 %359
        %361 = vrot.lane.b32.xlu0 %v356, 127
        %v362 = vpop.permute.xlu0 %361
        %v365 = vadd.f32 %v351, %v360
        %v366 = vadd.f32 %v352, %v362
        %s367 = sld [smem:[#allocation2 + $0x12]]
        %v368 = vstv %s367
        %v369 = vmul.f32 %v368, %v307
        %v370 = vmul.f32 %v368, %v308
        %373 = vrot.lane.b32.xlu0 %v369, 127
        %v374 = vpop.permute.xlu0 %373
        %375 = vrot.lane.b32.xlu0 %v370, 127
        %v376 = vpop.permute.xlu0 %375
        %v379 = vadd.f32 %v365, %v374
        %v380 = vadd.f32 %v366, %v376
        %s381 = sld [smem:[#allocation2 + $0x13]]
        %v382 = vstv %s381
        %v383 = vmul.f32 %v382, %v310
        %v384 = vmul.f32 %v382, %v311
        %387 = vrot.lane.b32.xlu0 %v383, 127
        %v388 = vpop.permute.xlu0 %387
        %389 = vrot.lane.b32.xlu0 %v384, 127
        %v390 = vpop.permute.xlu0 %389
        %v393 = vadd.f32 %v379, %v388
        %v394 = vadd.f32 %v380, %v390
        %s395 = sld [smem:[#allocation2 + $0x20]]
        %v396 = vstv %s395
        %v397 = vmul.f32 %v396, %v301
        %v398 = vmul.f32 %v396, %v302
        %v399 = vmul.f32 %v396, %v303
        %vm403 = vcmask 1046528
        %v404 = vrot.slane %v397, 1
        %v405 = vrot.slane %v398, 1
        %v406 = vsel %vm403, %v404, %v405
        %v407 = vrot.slane %v399, 1
        %v408 = vsel %vm403, %v405, %v407
        %v411 = vadd.f32 %v393, %v406
        %v412 = vadd.f32 %v394, %v408
        %s413 = sld [smem:[#allocation2 + $0x21]]
        %v414 = vstv %s413
        %v415 = vmul.f32 %v414, %v304
        %v416 = vmul.f32 %v414, %v305
        %v417 = vmul.f32 %v414, %v306
        %v421 = vrot.slane %v415, 1
        %v422 = vrot.slane %v416, 1
        %v423 = vsel %vm403, %v421, %v422
        %v424 = vrot.slane %v417, 1
        %v425 = vsel %vm403, %v422, %v424
        %v428 = vadd.f32 %v411, %v423
        %v429 = vadd.f32 %v412, %v425
        %s430 = sld [smem:[#allocation2 + $0x22]]
        %v431 = vstv %s430
        %v432 = vmul.f32 %v431, %v307
        %v433 = vmul.f32 %v431, %v308
        %v434 = vmul.f32 %v431, %v309
        %v438 = vrot.slane %v432, 1
        %v439 = vrot.slane %v433, 1
        %v440 = vsel %vm403, %v438, %v439
        %v441 = vrot.slane %v434, 1
        %v442 = vsel %vm403, %v439, %v441
        %v445 = vadd.f32 %v428, %v440
        %v446 = vadd.f32 %v429, %v442
        %s447 = sld [smem:[#allocation2 + $0x23]]
        %v448 = vstv %s447
        %v449 = vmul.f32 %v448, %v310
        %v450 = vmul.f32 %v448, %v311
        %v451 = vmul.f32 %v448, %v312
        %v455 = vrot.slane %v449, 1
        %v456 = vrot.slane %v450, 1
        %v457 = vsel %vm403, %v455, %v456
        %v458 = vrot.slane %v451, 1
        %v459 = vsel %vm403, %v456, %v458
        %v462 = vadd.f32 %v445, %v457
        %v463 = vadd.f32 %v446, %v459
        %s464 = sld [smem:[#allocation2 + $0x30]]
        %v465 = vstv %s464
        %v466 = vmul.f32 %v465, %v301
        %v467 = vmul.f32 %v465, %v302
        %v468 = vmul.f32 %v465, %v303
        %v472 = vrot.slane %v466, 1
        %v473 = vrot.slane %v467, 1
        %v474 = vsel %vm403, %v472, %v473
        %v475 = vrot.slane %v468, 1
        %v476 = vsel %vm403, %v473, %v475
        %477 = vrot.lane.b32.xlu0 %v474, 127
        %v478 = vpop.permute.xlu0 %477
        %479 = vrot.lane.b32.xlu0 %v476, 127
        %v480 = vpop.permute.xlu0 %479
        %v483 = vadd.f32 %v462, %v478
        %v484 = vadd.f32 %v463, %v480
        %s485 = sld [smem:[#allocation2 + $0x31]]
        %v486 = vstv %s485
        %v487 = vmul.f32 %v486, %v304
        %v488 = vmul.f32 %v486, %v305
        %v489 = vmul.f32 %v486, %v306
        %v493 = vrot.slane %v487, 1
        %v494 = vrot.slane %v488, 1
        %v495 = vsel %vm403, %v493, %v494
        %v496 = vrot.slane %v489, 1
        %v497 = vsel %vm403, %v494, %v496
        %498 = vrot.lane.b32.xlu0 %v495, 127
        %v499 = vpop.permute.xlu0 %498
        %500 = vrot.lane.b32.xlu0 %v497, 127
        %v501 = vpop.permute.xlu0 %500
        %v504 = vadd.f32 %v483, %v499
        %v505 = vadd.f32 %v484, %v501
        %s506 = sld [smem:[#allocation2 + $0x32]]
        %v507 = vstv %s506
        %v508 = vmul.f32 %v507, %v307
        %v509 = vmul.f32 %v507, %v308
        %v510 = vmul.f32 %v507, %v309
        %v514 = vrot.slane %v508, 1
        %v515 = vrot.slane %v509, 1
        %v516 = vsel %vm403, %v514, %v515
        %v517 = vrot.slane %v510, 1
        %v518 = vsel %vm403, %v515, %v517
        %519 = vrot.lane.b32.xlu0 %v516, 127
        %v520 = vpop.permute.xlu0 %519
        %521 = vrot.lane.b32.xlu0 %v518, 127
        %v522 = vpop.permute.xlu0 %521
        %v525 = vadd.f32 %v504, %v520
        %v526 = vadd.f32 %v505, %v522
        %s527 = sld [smem:[#allocation2 + $0x33]]
        %v528 = vstv %s527
        %v529 = vmul.f32 %v528, %v310
        %v530 = vmul.f32 %v528, %v311
        %v531 = vmul.f32 %v528, %v312
        %v535 = vrot.slane %v529, 1
        %v536 = vrot.slane %v530, 1
        %v537 = vsel %vm403, %v535, %v536
        %v538 = vrot.slane %v531, 1
        %v539 = vsel %vm403, %v536, %v538
        %540 = vrot.lane.b32.xlu0 %v537, 127
        %v541 = vpop.permute.xlu0 %540
        %542 = vrot.lane.b32.xlu0 %v539, 127
        %v543 = vpop.permute.xlu0 %542
        %v546 = vadd.f32 %v525, %v541
        %v547 = vadd.f32 %v526, %v543
        %vm548 = vcmask 130048
        %549 = vst.msk [vmem:[%s197] sm:$0xff] %vm548, %v546
        %550 = vst.msk [vmem:[%s197 + $0x8] sm:$0xff] %vm548, %v547
        %s551 = sld [smem:[#allocation4 + $0x1]]
        %v552 = vstv %s551
        %s553 = sld [smem:[#allocation2 + $0x4]]
        %v554 = vstv %s553
        %v555 = vmul.f32 %v554, %v301
        %v556 = vmul.f32 %v554, %v302
        %v557 = vadd.f32 %v552, %v555
        %v558 = vadd.f32 %v552, %v556
        %s559 = sld [smem:[#allocation2 + $0x5]]
        %v560 = vstv %s559
        %v561 = vmul.f32 %v560, %v304
        %v562 = vmul.f32 %v560, %v305
        %v563 = vadd.f32 %v557, %v561
        %v564 = vadd.f32 %v558, %v562
        %s565 = sld [smem:[#allocation2 + $0x6]]
        %v566 = vstv %s565
        %v567 = vmul.f32 %v566, %v307
        %v568 = vmul.f32 %v566, %v308
        %v569 = vadd.f32 %v563, %v567
        %v570 = vadd.f32 %v564, %v568
        %s571 = sld [smem:[#allocation2 + $0x7]]
        %v572 = vstv %s571
        %v573 = vmul.f32 %v572, %v310
        %v574 = vmul.f32 %v572, %v311
        %v575 = vadd.f32 %v569, %v573
        %v576 = vadd.f32 %v570, %v574
        %s577 = sld [smem:[#allocation2 + $0x14]]
        %v578 = vstv %s577
        %v579 = vmul.f32 %v578, %v301
        %v580 = vmul.f32 %v578, %v302
        %583 = vrot.lane.b32.xlu0 %v579, 127
        %v584 = vpop.permute.xlu0 %583
        %585 = vrot.lane.b32.xlu0 %v580, 127
        %v586 = vpop.permute.xlu0 %585
        %v589 = vadd.f32 %v575, %v584
        %v590 = vadd.f32 %v576, %v586
        %s591 = sld [smem:[#allocation2 + $0x15]]
        %v592 = vstv %s591
        %v593 = vmul.f32 %v592, %v304
        %v594 = vmul.f32 %v592, %v305
        %597 = vrot.lane.b32.xlu0 %v593, 127
        %v598 = vpop.permute.xlu0 %597
        %599 = vrot.lane.b32.xlu0 %v594, 127
        %v600 = vpop.permute.xlu0 %599
        %v603 = vadd.f32 %v589, %v598
        %v604 = vadd.f32 %v590, %v600
        %s605 = sld [smem:[#allocation2 + $0x16]]
        %v606 = vstv %s605
        %v607 = vmul.f32 %v606, %v307
        %v608 = vmul.f32 %v606, %v308
        %611 = vrot.lane.b32.xlu0 %v607, 127
        %v612 = vpop.permute.xlu0 %611
        %613 = vrot.lane.b32.xlu0 %v608, 127
        %v614 = vpop.permute.xlu0 %613
        %v617 = vadd.f32 %v603, %v612
        %v618 = vadd.f32 %v604, %v614
        %s619 = sld [smem:[#allocation2 + $0x17]]
        %v620 = vstv %s619
        %v621 = vmul.f32 %v620, %v310
        %v622 = vmul.f32 %v620, %v311
        %625 = vrot.lane.b32.xlu0 %v621, 127
        %v626 = vpop.permute.xlu0 %625
        %627 = vrot.lane.b32.xlu0 %v622, 127
        %v628 = vpop.permute.xlu0 %627
        %v631 = vadd.f32 %v617, %v626
        %v632 = vadd.f32 %v618, %v628
        %s633 = sld [smem:[#allocation2 + $0x24]]
        %v634 = vstv %s633
        %v635 = vmul.f32 %v634, %v301
        %v636 = vmul.f32 %v634, %v302
        %v637 = vmul.f32 %v634, %v303
        %v641 = vrot.slane %v635, 1
        %v642 = vrot.slane %v636, 1
        %v643 = vsel %vm403, %v641, %v642
        %v644 = vrot.slane %v637, 1
        %v645 = vsel %vm403, %v642, %v644
        %v648 = vadd.f32 %v631, %v643
        %v649 = vadd.f32 %v632, %v645
        %s650 = sld [smem:[#allocation2 + $0x25]]
        %v651 = vstv %s650
        %v652 = vmul.f32 %v651, %v304
        %v653 = vmul.f32 %v651, %v305
        %v654 = vmul.f32 %v651, %v306
        %v658 = vrot.slane %v652, 1
        %v659 = vrot.slane %v653, 1
        %v660 = vsel %vm403, %v658, %v659
        %v661 = vrot.slane %v654, 1
        %v662 = vsel %vm403, %v659, %v661
        %v665 = vadd.f32 %v648, %v660
        %v666 = vadd.f32 %v649, %v662
        %s667 = sld [smem:[#allocation2 + $0x26]]
        %v668 = vstv %s667
        %v669 = vmul.f32 %v668, %v307
        %v670 = vmul.f32 %v668, %v308
        %v671 = vmul.f32 %v668, %v309
        %v675 = vrot.slane %v669, 1
        %v676 = vrot.slane %v670, 1
        %v677 = vsel %vm403, %v675, %v676
        %v678 = vrot.slane %v671, 1
        %v679 = vsel %vm403, %v676, %v678
        %v682 = vadd.f32 %v665, %v677
        %v683 = vadd.f32 %v666, %v679
        %s684 = sld [smem:[#allocation2 + $0x27]]
        %v685 = vstv %s684
        %v686 = vmul.f32 %v685, %v310
        %v687 = vmul.f32 %v685, %v311
        %v688 = vmul.f32 %v685, %v312
        %v692 = vrot.slane %v686, 1
        %v693 = vrot.slane %v687, 1
        %v694 = vsel %vm403, %v692, %v693
        %v695 = vrot.slane %v688, 1
        %v696 = vsel %vm403, %v693, %v695
        %v699 = vadd.f32 %v682, %v694
        %v700 = vadd.f32 %v683, %v696
        %s701 = sld [smem:[#allocation2 + $0x34]]
        %v702 = vstv %s701
        %v703 = vmul.f32 %v702, %v301
        %v704 = vmul.f32 %v702, %v302
        %v705 = vmul.f32 %v702, %v303
        %v709 = vrot.slane %v703, 1
        %v710 = vrot.slane %v704, 1
        %v711 = vsel %vm403, %v709, %v710
        %v712 = vrot.slane %v705, 1
        %v713 = vsel %vm403, %v710, %v712
        %714 = vrot.lane.b32.xlu0 %v711, 127
        %v715 = vpop.permute.xlu0 %714
        %716 = vrot.lane.b32.xlu0 %v713, 127
        %v717 = vpop.permute.xlu0 %716
        %v720 = vadd.f32 %v699, %v715
        %v721 = vadd.f32 %v700, %v717
        %s722 = sld [smem:[#allocation2 + $0x35]]
        %v723 = vstv %s722
        %v724 = vmul.f32 %v723, %v304
        %v725 = vmul.f32 %v723, %v305
        %v726 = vmul.f32 %v723, %v306
        %v730 = vrot.slane %v724, 1
        %v731 = vrot.slane %v725, 1
        %v732 = vsel %vm403, %v730, %v731
        %v733 = vrot.slane %v726, 1
        %v734 = vsel %vm403, %v731, %v733
        %735 = vrot.lane.b32.xlu0 %v732, 127
        %v736 = vpop.permute.xlu0 %735
        %737 = vrot.lane.b32.xlu0 %v734, 127
        %v738 = vpop.permute.xlu0 %737
        %v741 = vadd.f32 %v720, %v736
        %v742 = vadd.f32 %v721, %v738
        %s743 = sld [smem:[#allocation2 + $0x36]]
        %v744 = vstv %s743
        %v745 = vmul.f32 %v744, %v307
        %v746 = vmul.f32 %v744, %v308
        %v747 = vmul.f32 %v744, %v309
        %v751 = vrot.slane %v745, 1
        %v752 = vrot.slane %v746, 1
        %v753 = vsel %vm403, %v751, %v752
        %v754 = vrot.slane %v747, 1
        %v755 = vsel %vm403, %v752, %v754
        %756 = vrot.lane.b32.xlu0 %v753, 127
        %v757 = vpop.permute.xlu0 %756
        %758 = vrot.lane.b32.xlu0 %v755, 127
        %v759 = vpop.permute.xlu0 %758
        %v762 = vadd.f32 %v741, %v757
        %v763 = vadd.f32 %v742, %v759
        %s764 = sld [smem:[#allocation2 + $0x37]]
        %v765 = vstv %s764
        %v766 = vmul.f32 %v765, %v310
        %v767 = vmul.f32 %v765, %v311
        %v768 = vmul.f32 %v765, %v312
        %v772 = vrot.slane %v766, 1
        %v773 = vrot.slane %v767, 1
        %v774 = vsel %vm403, %v772, %v773
        %v775 = vrot.slane %v768, 1
        %v776 = vsel %vm403, %v773, %v775
        %777 = vrot.lane.b32.xlu0 %v774, 127
        %v778 = vpop.permute.xlu0 %777
        %779 = vrot.lane.b32.xlu0 %v776, 127
        %v780 = vpop.permute.xlu0 %779
        %v783 = vadd.f32 %v762, %v778
        %v784 = vadd.f32 %v763, %v780
        %s785 = scalar_lea.vmem %s197, 16
        %786 = vst.msk [vmem:[%s785] sm:$0xff] %vm548, %v783
        %787 = vst.msk [vmem:[%s785 + $0x8] sm:$0xff] %vm548, %v784
        %s788 = sld [smem:[#allocation4 + $0x2]]
        %v789 = vstv %s788
        %s790 = sld [smem:[#allocation2 + $0x8]]
        %v791 = vstv %s790
        %v792 = vmul.f32 %v791, %v301
        %v793 = vmul.f32 %v791, %v302
        %v794 = vadd.f32 %v789, %v792
        %v795 = vadd.f32 %v789, %v793
        %s796 = sld [smem:[#allocation2 + $0x9]]
        %v797 = vstv %s796
        %v798 = vmul.f32 %v797, %v304
        %v799 = vmul.f32 %v797, %v305
        %v800 = vadd.f32 %v794, %v798
        %v801 = vadd.f32 %v795, %v799
        %s802 = sld [smem:[#allocation2 + $0xa]]
        %v803 = vstv %s802
        %v804 = vmul.f32 %v803, %v307
        %v805 = vmul.f32 %v803, %v308
        %v806 = vadd.f32 %v800, %v804
        %v807 = vadd.f32 %v801, %v805
        %s808 = sld [smem:[#allocation2 + $0xb]]
        %v809 = vstv %s808
        %v810 = vmul.f32 %v809, %v310
        %v811 = vmul.f32 %v809, %v311
        %v812 = vadd.f32 %v806, %v810
        %v813 = vadd.f32 %v807, %v811
        %s814 = sld [smem:[#allocation2 + $0x18]]
        %v815 = vstv %s814
        %v816 = vmul.f32 %v815, %v301
        %v817 = vmul.f32 %v815, %v302
        %820 = vrot.lane.b32.xlu0 %v816, 127
        %v821 = vpop.permute.xlu0 %820
        %822 = vrot.lane.b32.xlu0 %v817, 127
        %v823 = vpop.permute.xlu0 %822
        %v826 = vadd.f32 %v812, %v821
        %v827 = vadd.f32 %v813, %v823
        %s828 = sld [smem:[#allocation2 + $0x19]]
        %v829 = vstv %s828
        %v830 = vmul.f32 %v829, %v304
        %v831 = vmul.f32 %v829, %v305
        %834 = vrot.lane.b32.xlu0 %v830, 127
        %v835 = vpop.permute.xlu0 %834
        %836 = vrot.lane.b32.xlu0 %v831, 127
        %v837 = vpop.permute.xlu0 %836
        %v840 = vadd.f32 %v826, %v835
        %v841 = vadd.f32 %v827, %v837
        %s842 = sld [smem:[#allocation2 + $0x1a]]
        %v843 = vstv %s842
        %v844 = vmul.f32 %v843, %v307
        %v845 = vmul.f32 %v843, %v308
        %848 = vrot.lane.b32.xlu0 %v844, 127
        %v849 = vpop.permute.xlu0 %848
        %850 = vrot.lane.b32.xlu0 %v845, 127
        %v851 = vpop.permute.xlu0 %850
        %v854 = vadd.f32 %v840, %v849
        %v855 = vadd.f32 %v841, %v851
        %s856 = sld [smem:[#allocation2 + $0x1b]]
        %v857 = vstv %s856
        %v858 = vmul.f32 %v857, %v310
        %v859 = vmul.f32 %v857, %v311
        %862 = vrot.lane.b32.xlu0 %v858, 127
        %v863 = vpop.permute.xlu0 %862
        %864 = vrot.lane.b32.xlu0 %v859, 127
        %v865 = vpop.permute.xlu0 %864
        %v868 = vadd.f32 %v854, %v863
        %v869 = vadd.f32 %v855, %v865
        %s870 = sld [smem:[#allocation2 + $0x28]]
        %v871 = vstv %s870
        %v872 = vmul.f32 %v871, %v301
        %v873 = vmul.f32 %v871, %v302
        %v874 = vmul.f32 %v871, %v303
        %v878 = vrot.slane %v872, 1
        %v879 = vrot.slane %v873, 1
        %v880 = vsel %vm403, %v878, %v879
        %v881 = vrot.slane %v874, 1
        %v882 = vsel %vm403, %v879, %v881
        %v885 = vadd.f32 %v868, %v880
        %v886 = vadd.f32 %v869, %v882
        %s887 = sld [smem:[#allocation2 + $0x29]]
        %v888 = vstv %s887
        %v889 = vmul.f32 %v888, %v304
        %v890 = vmul.f32 %v888, %v305
        %v891 = vmul.f32 %v888, %v306
        %v895 = vrot.slane %v889, 1
        %v896 = vrot.slane %v890, 1
        %v897 = vsel %vm403, %v895, %v896
        %v898 = vrot.slane %v891, 1
        %v899 = vsel %vm403, %v896, %v898
        %v902 = vadd.f32 %v885, %v897
        %v903 = vadd.f32 %v886, %v899
        %s904 = sld [smem:[#allocation2 + $0x2a]]
        %v905 = vstv %s904
        %v906 = vmul.f32 %v905, %v307
        %v907 = vmul.f32 %v905, %v308
        %v908 = vmul.f32 %v905, %v309
        %v912 = vrot.slane %v906, 1
        %v913 = vrot.slane %v907, 1
        %v914 = vsel %vm403, %v912, %v913
        %v915 = vrot.slane %v908, 1
        %v916 = vsel %vm403, %v913, %v915
        %v919 = vadd.f32 %v902, %v914
        %v920 = vadd.f32 %v903, %v916
        %s921 = sld [smem:[#allocation2 + $0x2b]]
        %v922 = vstv %s921
        %v923 = vmul.f32 %v922, %v310
        %v924 = vmul.f32 %v922, %v311
        %v925 = vmul.f32 %v922, %v312
        %v929 = vrot.slane %v923, 1
        %v930 = vrot.slane %v924, 1
        %v931 = vsel %vm403, %v929, %v930
        %v932 = vrot.slane %v925, 1
        %v933 = vsel %vm403, %v930, %v932
        %v936 = vadd.f32 %v919, %v931
        %v937 = vadd.f32 %v920, %v933
        %s938 = sld [smem:[#allocation2 + $0x38]]
        %v939 = vstv %s938
        %v940 = vmul.f32 %v939, %v301
        %v941 = vmul.f32 %v939, %v302
        %v942 = vmul.f32 %v939, %v303
        %v946 = vrot.slane %v940, 1
        %v947 = vrot.slane %v941, 1
        %v948 = vsel %vm403, %v946, %v947
        %v949 = vrot.slane %v942, 1
        %v950 = vsel %vm403, %v947, %v949
        %951 = vrot.lane.b32.xlu0 %v948, 127
        %v952 = vpop.permute.xlu0 %951
        %953 = vrot.lane.b32.xlu0 %v950, 127
        %v954 = vpop.permute.xlu0 %953
        %v957 = vadd.f32 %v936, %v952
        %v958 = vadd.f32 %v937, %v954
        %s959 = sld [smem:[#allocation2 + $0x39]]
        %v960 = vstv %s959
        %v961 = vmul.f32 %v960, %v304
        %v962 = vmul.f32 %v960, %v305
        %v963 = vmul.f32 %v960, %v306
        %v967 = vrot.slane %v961, 1
        %v968 = vrot.slane %v962, 1
        %v969 = vsel %vm403, %v967, %v968
        %v970 = vrot.slane %v963, 1
        %v971 = vsel %vm403, %v968, %v970
        %972 = vrot.lane.b32.xlu0 %v969, 127
        %v973 = vpop.permute.xlu0 %972
        %974 = vrot.lane.b32.xlu0 %v971, 127
        %v975 = vpop.permute.xlu0 %974
        %v978 = vadd.f32 %v957, %v973
        %v979 = vadd.f32 %v958, %v975
        %s980 = sld [smem:[#allocation2 + $0x3a]]
        %v981 = vstv %s980
        %v982 = vmul.f32 %v981, %v307
        %v983 = vmul.f32 %v981, %v308
        %v984 = vmul.f32 %v981, %v309
        %v988 = vrot.slane %v982, 1
        %v989 = vrot.slane %v983, 1
        %v990 = vsel %vm403, %v988, %v989
        %v991 = vrot.slane %v984, 1
        %v992 = vsel %vm403, %v989, %v991
        %993 = vrot.lane.b32.xlu0 %v990, 127
        %v994 = vpop.permute.xlu0 %993
        %995 = vrot.lane.b32.xlu0 %v992, 127
        %v996 = vpop.permute.xlu0 %995
        %v999 = vadd.f32 %v978, %v994
        %v1000 = vadd.f32 %v979, %v996
        %s1001 = sld [smem:[#allocation2 + $0x3b]]
        %v1002 = vstv %s1001
        %v1003 = vmul.f32 %v1002, %v310
        %v1004 = vmul.f32 %v1002, %v311
        %v1005 = vmul.f32 %v1002, %v312
        %v1009 = vrot.slane %v1003, 1
        %v1010 = vrot.slane %v1004, 1
        %v1011 = vsel %vm403, %v1009, %v1010
        %v1012 = vrot.slane %v1005, 1
        %v1013 = vsel %vm403, %v1010, %v1012
        %1014 = vrot.lane.b32.xlu0 %v1011, 127
        %v1015 = vpop.permute.xlu0 %1014
        %1016 = vrot.lane.b32.xlu0 %v1013, 127
        %v1017 = vpop.permute.xlu0 %1016
        %v1020 = vadd.f32 %v999, %v1015
        %v1021 = vadd.f32 %v1000, %v1017
        %s1022 = scalar_lea.vmem %s197, 32
        %1023 = vst.msk [vmem:[%s1022] sm:$0xff] %vm548, %v1020
        %1024 = vst.msk [vmem:[%s1022 + $0x8] sm:$0xff] %vm548, %v1021
        %s1025 = sld [smem:[#allocation4 + $0x3]]
        %v1026 = vstv %s1025
        %s1027 = sld [smem:[#allocation2 + $0xc]]
        %v1028 = vstv %s1027
        %v1029 = vmul.f32 %v1028, %v301
        %v1030 = vmul.f32 %v1028, %v302
        %v1031 = vadd.f32 %v1026, %v1029
        %v1032 = vadd.f32 %v1026, %v1030
        %s1033 = sld [smem:[#allocation2 + $0xd]]
        %v1034 = vstv %s1033
        %v1035 = vmul.f32 %v1034, %v304
        %v1036 = vmul.f32 %v1034, %v305
        %v1037 = vadd.f32 %v1031, %v1035
        %v1038 = vadd.f32 %v1032, %v1036
        %s1039 = sld [smem:[#allocation2 + $0xe]]
        %v1040 = vstv %s1039
        %v1041 = vmul.f32 %v1040, %v307
        %v1042 = vmul.f32 %v1040, %v308
        %v1043 = vadd.f32 %v1037, %v1041
        %v1044 = vadd.f32 %v1038, %v1042
        %s1045 = sld [smem:[#allocation2 + $0xf]]
        %v1046 = vstv %s1045
        %v1047 = vmul.f32 %v1046, %v310
        %v1048 = vmul.f32 %v1046, %v311
        %v1049 = vadd.f32 %v1043, %v1047
        %v1050 = vadd.f32 %v1044, %v1048
        %s1051 = sld [smem:[#allocation2 + $0x1c]]
        %v1052 = vstv %s1051
        %v1053 = vmul.f32 %v1052, %v301
        %v1054 = vmul.f32 %v1052, %v302
        %1057 = vrot.lane.b32.xlu0 %v1053, 127
        %v1058 = vpop.permute.xlu0 %1057
        %1059 = vrot.lane.b32.xlu0 %v1054, 127
        %v1060 = vpop.permute.xlu0 %1059
        %v1063 = vadd.f32 %v1049, %v1058
        %v1064 = vadd.f32 %v1050, %v1060
        %s1065 = sld [smem:[#allocation2 + $0x1d]]
        %v1066 = vstv %s1065
        %v1067 = vmul.f32 %v1066, %v304
        %v1068 = vmul.f32 %v1066, %v305
        %1071 = vrot.lane.b32.xlu0 %v1067, 127
        %v1072 = vpop.permute.xlu0 %1071
        %1073 = vrot.lane.b32.xlu0 %v1068, 127
        %v1074 = vpop.permute.xlu0 %1073
        %v1077 = vadd.f32 %v1063, %v1072
        %v1078 = vadd.f32 %v1064, %v1074
        %s1079 = sld [smem:[#allocation2 + $0x1e]]
        %v1080 = vstv %s1079
        %v1081 = vmul.f32 %v1080, %v307
        %v1082 = vmul.f32 %v1080, %v308
        %1085 = vrot.lane.b32.xlu0 %v1081, 127
        %v1086 = vpop.permute.xlu0 %1085
        %1087 = vrot.lane.b32.xlu0 %v1082, 127
        %v1088 = vpop.permute.xlu0 %1087
        %v1091 = vadd.f32 %v1077, %v1086
        %v1092 = vadd.f32 %v1078, %v1088
        %s1093 = sld [smem:[#allocation2 + $0x1f]]
        %v1094 = vstv %s1093
        %v1095 = vmul.f32 %v1094, %v310
        %v1096 = vmul.f32 %v1094, %v311
        %1099 = vrot.lane.b32.xlu0 %v1095, 127
        %v1100 = vpop.permute.xlu0 %1099
        %1101 = vrot.lane.b32.xlu0 %v1096, 127
        %v1102 = vpop.permute.xlu0 %1101
        %v1105 = vadd.f32 %v1091, %v1100
        %v1106 = vadd.f32 %v1092, %v1102
        %s1107 = sld [smem:[#allocation2 + $0x2c]]
        %v1108 = vstv %s1107
        %v1109 = vmul.f32 %v1108, %v301
        %v1110 = vmul.f32 %v1108, %v302
        %v1111 = vmul.f32 %v1108, %v303
        %v1115 = vrot.slane %v1109, 1
        %v1116 = vrot.slane %v1110, 1
        %v1117 = vsel %vm403, %v1115, %v1116
        %v1118 = vrot.slane %v1111, 1
        %v1119 = vsel %vm403, %v1116, %v1118
        %v1122 = vadd.f32 %v1105, %v1117
        %v1123 = vadd.f32 %v1106, %v1119
        %s1124 = sld [smem:[#allocation2 + $0x2d]]
        %v1125 = vstv %s1124
        %v1126 = vmul.f32 %v1125, %v304
        %v1127 = vmul.f32 %v1125, %v305
        %v1128 = vmul.f32 %v1125, %v306
        %v1132 = vrot.slane %v1126, 1
        %v1133 = vrot.slane %v1127, 1
        %v1134 = vsel %vm403, %v1132, %v1133
        %v1135 = vrot.slane %v1128, 1
        %v1136 = vsel %vm403, %v1133, %v1135
        %v1139 = vadd.f32 %v1122, %v1134
        %v1140 = vadd.f32 %v1123, %v1136
        %s1141 = sld [smem:[#allocation2 + $0x2e]]
        %v1142 = vstv %s1141
        %v1143 = vmul.f32 %v1142, %v307
        %v1144 = vmul.f32 %v1142, %v308
        %v1145 = vmul.f32 %v1142, %v309
        %v1149 = vrot.slane %v1143, 1
        %v1150 = vrot.slane %v1144, 1
        %v1151 = vsel %vm403, %v1149, %v1150
        %v1152 = vrot.slane %v1145, 1
        %v1153 = vsel %vm403, %v1150, %v1152
        %v1156 = vadd.f32 %v1139, %v1151
        %v1157 = vadd.f32 %v1140, %v1153
        %s1158 = sld [smem:[#allocation2 + $0x2f]]
        %v1159 = vstv %s1158
        %v1160 = vmul.f32 %v1159, %v310
        %v1161 = vmul.f32 %v1159, %v311
        %v1162 = vmul.f32 %v1159, %v312
        %v1166 = vrot.slane %v1160, 1
        %v1167 = vrot.slane %v1161, 1
        %v1168 = vsel %vm403, %v1166, %v1167
        %v1169 = vrot.slane %v1162, 1
        %v1170 = vsel %vm403, %v1167, %v1169
        %v1173 = vadd.f32 %v1156, %v1168
        %v1174 = vadd.f32 %v1157, %v1170
        %s1175 = sld [smem:[#allocation2 + $0x3c]]
        %v1176 = vstv %s1175
        %v1177 = vmul.f32 %v1176, %v301
        %v1178 = vmul.f32 %v1176, %v302
        %v1179 = vmul.f32 %v1176, %v303
        %v1183 = vrot.slane %v1177, 1
        %v1184 = vrot.slane %v1178, 1
        %v1185 = vsel %vm403, %v1183, %v1184
        %v1186 = vrot.slane %v1179, 1
        %v1187 = vsel %vm403, %v1184, %v1186
        %1188 = vrot.lane.b32.xlu0 %v1185, 127
        %v1189 = vpop.permute.xlu0 %1188
        %1190 = vrot.lane.b32.xlu0 %v1187, 127
        %v1191 = vpop.permute.xlu0 %1190
        %v1194 = vadd.f32 %v1173, %v1189
        %v1195 = vadd.f32 %v1174, %v1191
        %s1196 = sld [smem:[#allocation2 + $0x3d]]
        %v1197 = vstv %s1196
        %v1198 = vmul.f32 %v1197, %v304
        %v1199 = vmul.f32 %v1197, %v305
        %v1200 = vmul.f32 %v1197, %v306
        %v1204 = vrot.slane %v1198, 1
        %v1205 = vrot.slane %v1199, 1
        %v1206 = vsel %vm403, %v1204, %v1205
        %v1207 = vrot.slane %v1200, 1
        %v1208 = vsel %vm403, %v1205, %v1207
        %1209 = vrot.lane.b32.xlu0 %v1206, 127
        %v1210 = vpop.permute.xlu0 %1209
        %1211 = vrot.lane.b32.xlu0 %v1208, 127
        %v1212 = vpop.permute.xlu0 %1211
        %v1215 = vadd.f32 %v1194, %v1210
        %v1216 = vadd.f32 %v1195, %v1212
        %s1217 = sld [smem:[#allocation2 + $0x3e]]
        %v1218 = vstv %s1217
        %v1219 = vmul.f32 %v1218, %v307
        %v1220 = vmul.f32 %v1218, %v308
        %v1221 = vmul.f32 %v1218, %v309
        %v1225 = vrot.slane %v1219, 1
        %v1226 = vrot.slane %v1220, 1
        %v1227 = vsel %vm403, %v1225, %v1226
        %v1228 = vrot.slane %v1221, 1
        %v1229 = vsel %vm403, %v1226, %v1228
        %1230 = vrot.lane.b32.xlu0 %v1227, 127
        %v1231 = vpop.permute.xlu0 %1230
        %1232 = vrot.lane.b32.xlu0 %v1229, 127
        %v1233 = vpop.permute.xlu0 %1232
        %v1236 = vadd.f32 %v1215, %v1231
        %v1237 = vadd.f32 %v1216, %v1233
        %s1238 = sld [smem:[#allocation2 + $0x3f]]
        %v1239 = vstv %s1238
        %v1240 = vmul.f32 %v1239, %v310
        %v1241 = vmul.f32 %v1239, %v311
        %v1242 = vmul.f32 %v1239, %v312
        %v1246 = vrot.slane %v1240, 1
        %v1247 = vrot.slane %v1241, 1
        %v1248 = vsel %vm403, %v1246, %v1247
        %v1249 = vrot.slane %v1242, 1
        %v1250 = vsel %vm403, %v1247, %v1249
        %1251 = vrot.lane.b32.xlu0 %v1248, 127
        %v1252 = vpop.permute.xlu0 %1251
        %1253 = vrot.lane.b32.xlu0 %v1250, 127
        %v1254 = vpop.permute.xlu0 %1253
        %v1257 = vadd.f32 %v1236, %v1252
        %v1258 = vadd.f32 %v1237, %v1254
        %s1259 = scalar_lea.vmem %s197, 48
        %1260 = vst.msk [vmem:[%s1259] sm:$0xff] %vm548, %v1257
        %1261 = vst.msk [vmem:[%s1259 + $0x8] sm:$0xff] %vm548, %v1258
        %s1262 = sld [smem:[#allocation4]]
        %v1263 = vstv %s1262
        %s1264 = sld [smem:[#allocation2 + $0x40]]
        %v1265 = vstv %s1264
        %v1266 = vmul.f32 %v1265, %v301
        %v1267 = vmul.f32 %v1265, %v302
        %v1268 = vadd.f32 %v1263, %v1266
        %v1269 = vadd.f32 %v1263, %v1267
        %s1270 = sld [smem:[#allocation2 + $0x41]]
        %v1271 = vstv %s1270
        %v1272 = vmul.f32 %v1271, %v304
        %v1273 = vmul.f32 %v1271, %v305
        %v1274 = vadd.f32 %v1268, %v1272
        %v1275 = vadd.f32 %v1269, %v1273
        %s1276 = sld [smem:[#allocation2 + $0x42]]
        %v1277 = vstv %s1276
        %v1278 = vmul.f32 %v1277, %v307
        %v1279 = vmul.f32 %v1277, %v308
        %v1280 = vadd.f32 %v1274, %v1278
        %v1281 = vadd.f32 %v1275, %v1279
        %s1282 = sld [smem:[#allocation2 + $0x43]]
        %v1283 = vstv %s1282
        %v1284 = vmul.f32 %v1283, %v310
        %v1285 = vmul.f32 %v1283, %v311
        %v1286 = vadd.f32 %v1280, %v1284
        %v1287 = vadd.f32 %v1281, %v1285
        %s1288 = sld [smem:[#allocation2 + $0x50]]
        %v1289 = vstv %s1288
        %v1290 = vmul.f32 %v1289, %v301
        %v1291 = vmul.f32 %v1289, %v302
        %1294 = vrot.lane.b32.xlu0 %v1290, 127
        %v1295 = vpop.permute.xlu0 %1294
        %1296 = vrot.lane.b32.xlu0 %v1291, 127
        %v1297 = vpop.permute.xlu0 %1296
        %v1300 = vadd.f32 %v1286, %v1295
        %v1301 = vadd.f32 %v1287, %v1297
        %s1302 = sld [smem:[#allocation2 + $0x51]]
        %v1303 = vstv %s1302
        %v1304 = vmul.f32 %v1303, %v304
        %v1305 = vmul.f32 %v1303, %v305
        %1308 = vrot.lane.b32.xlu0 %v1304, 127
        %v1309 = vpop.permute.xlu0 %1308
        %1310 = vrot.lane.b32.xlu0 %v1305, 127
        %v1311 = vpop.permute.xlu0 %1310
        %v1314 = vadd.f32 %v1300, %v1309
        %v1315 = vadd.f32 %v1301, %v1311
        %s1316 = sld [smem:[#allocation2 + $0x52]]
        %v1317 = vstv %s1316
        %v1318 = vmul.f32 %v1317, %v307
        %v1319 = vmul.f32 %v1317, %v308
        %1322 = vrot.lane.b32.xlu0 %v1318, 127
        %v1323 = vpop.permute.xlu0 %1322
        %1324 = vrot.lane.b32.xlu0 %v1319, 127
        %v1325 = vpop.permute.xlu0 %1324
        %v1328 = vadd.f32 %v1314, %v1323
        %v1329 = vadd.f32 %v1315, %v1325
        %s1330 = sld [smem:[#allocation2 + $0x53]]
        %v1331 = vstv %s1330
        %v1332 = vmul.f32 %v1331, %v310
        %v1333 = vmul.f32 %v1331, %v311
        %1336 = vrot.lane.b32.xlu0 %v1332, 127
        %v1337 = vpop.permute.xlu0 %1336
        %1338 = vrot.lane.b32.xlu0 %v1333, 127
        %v1339 = vpop.permute.xlu0 %1338
        %v1342 = vadd.f32 %v1328, %v1337
        %v1343 = vadd.f32 %v1329, %v1339
        %s1344 = sld [smem:[#allocation2 + $0x60]]
        %v1345 = vstv %s1344
        %v1346 = vmul.f32 %v1345, %v301
        %v1347 = vmul.f32 %v1345, %v302
        %v1348 = vmul.f32 %v1345, %v303
        %v1352 = vrot.slane %v1346, 1
        %v1353 = vrot.slane %v1347, 1
        %v1354 = vsel %vm403, %v1352, %v1353
        %v1355 = vrot.slane %v1348, 1
        %v1356 = vsel %vm403, %v1353, %v1355
        %v1359 = vadd.f32 %v1342, %v1354
        %v1360 = vadd.f32 %v1343, %v1356
        %s1361 = sld [smem:[#allocation2 + $0x61]]
        %v1362 = vstv %s1361
        %v1363 = vmul.f32 %v1362, %v304
        %v1364 = vmul.f32 %v1362, %v305
        %v1365 = vmul.f32 %v1362, %v306
        %v1369 = vrot.slane %v1363, 1
        %v1370 = vrot.slane %v1364, 1
        %v1371 = vsel %vm403, %v1369, %v1370
        %v1372 = vrot.slane %v1365, 1
        %v1373 = vsel %vm403, %v1370, %v1372
        %v1376 = vadd.f32 %v1359, %v1371
        %v1377 = vadd.f32 %v1360, %v1373
        %s1378 = sld [smem:[#allocation2 + $0x62]]
        %v1379 = vstv %s1378
        %v1380 = vmul.f32 %v1379, %v307
        %v1381 = vmul.f32 %v1379, %v308
        %v1382 = vmul.f32 %v1379, %v309
        %v1386 = vrot.slane %v1380, 1
        %v1387 = vrot.slane %v1381, 1
        %v1388 = vsel %vm403, %v1386, %v1387
        %v1389 = vrot.slane %v1382, 1
        %v1390 = vsel %vm403, %v1387, %v1389
        %v1393 = vadd.f32 %v1376, %v1388
        %v1394 = vadd.f32 %v1377, %v1390
        %s1395 = sld [smem:[#allocation2 + $0x63]]
        %v1396 = vstv %s1395
        %v1397 = vmul.f32 %v1396, %v310
        %v1398 = vmul.f32 %v1396, %v311
        %v1399 = vmul.f32 %v1396, %v312
        %v1403 = vrot.slane %v1397, 1
        %v1404 = vrot.slane %v1398, 1
        %v1405 = vsel %vm403, %v1403, %v1404
        %v1406 = vrot.slane %v1399, 1
        %v1407 = vsel %vm403, %v1404, %v1406
        %v1410 = vadd.f32 %v1393, %v1405
        %v1411 = vadd.f32 %v1394, %v1407
        %s1412 = sld [smem:[#allocation2 + $0x70]]
        %v1413 = vstv %s1412
        %v1414 = vmul.f32 %v1413, %v301
        %v1415 = vmul.f32 %v1413, %v302
        %v1416 = vmul.f32 %v1413, %v303
        %v1420 = vrot.slane %v1414, 1
        %v1421 = vrot.slane %v1415, 1
        %v1422 = vsel %vm403, %v1420, %v1421
        %v1423 = vrot.slane %v1416, 1
        %v1424 = vsel %vm403, %v1421, %v1423
        %1425 = vrot.lane.b32.xlu0 %v1422, 127
        %v1426 = vpop.permute.xlu0 %1425
        %1427 = vrot.lane.b32.xlu0 %v1424, 127
        %v1428 = vpop.permute.xlu0 %1427
        %v1431 = vadd.f32 %v1410, %v1426
        %v1432 = vadd.f32 %v1411, %v1428
        %s1433 = sld [smem:[#allocation2 + $0x71]]
        %v1434 = vstv %s1433
        %v1435 = vmul.f32 %v1434, %v304
        %v1436 = vmul.f32 %v1434, %v305
        %v1437 = vmul.f32 %v1434, %v306
        %v1441 = vrot.slane %v1435, 1
        %v1442 = vrot.slane %v1436, 1
        %v1443 = vsel %vm403, %v1441, %v1442
        %v1444 = vrot.slane %v1437, 1
        %v1445 = vsel %vm403, %v1442, %v1444
        %1446 = vrot.lane.b32.xlu0 %v1443, 127
        %v1447 = vpop.permute.xlu0 %1446
        %1448 = vrot.lane.b32.xlu0 %v1445, 127
        %v1449 = vpop.permute.xlu0 %1448
        %v1452 = vadd.f32 %v1431, %v1447
        %v1453 = vadd.f32 %v1432, %v1449
        %s1454 = sld [smem:[#allocation2 + $0x72]]
        %v1455 = vstv %s1454
        %v1456 = vmul.f32 %v1455, %v307
        %v1457 = vmul.f32 %v1455, %v308
        %v1458 = vmul.f32 %v1455, %v309
        %v1462 = vrot.slane %v1456, 1
        %v1463 = vrot.slane %v1457, 1
        %v1464 = vsel %vm403, %v1462, %v1463
        %v1465 = vrot.slane %v1458, 1
        %v1466 = vsel %vm403, %v1463, %v1465
        %1467 = vrot.lane.b32.xlu0 %v1464, 127
        %v1468 = vpop.permute.xlu0 %1467
        %1469 = vrot.lane.b32.xlu0 %v1466, 127
        %v1470 = vpop.permute.xlu0 %1469
        %v1473 = vadd.f32 %v1452, %v1468
        %v1474 = vadd.f32 %v1453, %v1470
        %s1475 = sld [smem:[#allocation2 + $0x73]]
        %v1476 = vstv %s1475
        %v1477 = vmul.f32 %v1476, %v310
        %v1478 = vmul.f32 %v1476, %v311
        %v1479 = vmul.f32 %v1476, %v312
        %v1483 = vrot.slane %v1477, 1
        %v1484 = vrot.slane %v1478, 1
        %v1485 = vsel %vm403, %v1483, %v1484
        %v1486 = vrot.slane %v1479, 1
        %v1487 = vsel %vm403, %v1484, %v1486
        %1488 = vrot.lane.b32.xlu0 %v1485, 127
        %v1489 = vpop.permute.xlu0 %1488
        %1490 = vrot.lane.b32.xlu0 %v1487, 127
        %v1491 = vpop.permute.xlu0 %1490
        %v1494 = vadd.f32 %v1473, %v1489
        %v1495 = vadd.f32 %v1474, %v1491
        %1498 = vrot.lane.b32.xlu0 %v1494, 127
        %v1499 = vpop.permute.xlu0 %1498
        %1500 = vrot.lane.b32.xlu0 %v1495, 127
        %v1501 = vpop.permute.xlu0 %1500
        %s1504 = scalar_lea.vmem %s197, 64
        %1505 = vst.msk [vmem:[%s1504] sm:$0xff] %vm548, %v1499
        %1506 = vst.msk [vmem:[%s1504 + $0x8] sm:$0xff] %vm548, %v1501
        %s1507 = sld [smem:[#allocation4 + $0x1]]
        %v1508 = vstv %s1507
        %s1509 = sld [smem:[#allocation2 + $0x44]]
        %v1510 = vstv %s1509
        %v1511 = vmul.f32 %v1510, %v301
        %v1512 = vmul.f32 %v1510, %v302
        %v1513 = vadd.f32 %v1508, %v1511
        %v1514 = vadd.f32 %v1508, %v1512
        %s1515 = sld [smem:[#allocation2 + $0x45]]
        %v1516 = vstv %s1515
        %v1517 = vmul.f32 %v1516, %v304
        %v1518 = vmul.f32 %v1516, %v305
        %v1519 = vadd.f32 %v1513, %v1517
        %v1520 = vadd.f32 %v1514, %v1518
        %s1521 = sld [smem:[#allocation2 + $0x46]]
        %v1522 = vstv %s1521
        %v1523 = vmul.f32 %v1522, %v307
        %v1524 = vmul.f32 %v1522, %v308
        %v1525 = vadd.f32 %v1519, %v1523
        %v1526 = vadd.f32 %v1520, %v1524
        %s1527 = sld [smem:[#allocation2 + $0x47]]
        %v1528 = vstv %s1527
        %v1529 = vmul.f32 %v1528, %v310
        %v1530 = vmul.f32 %v1528, %v311
        %v1531 = vadd.f32 %v1525, %v1529
        %v1532 = vadd.f32 %v1526, %v1530
        %s1533 = sld [smem:[#allocation2 + $0x54]]
        %v1534 = vstv %s1533
        %v1535 = vmul.f32 %v1534, %v301
        %v1536 = vmul.f32 %v1534, %v302
        %1539 = vrot.lane.b32.xlu0 %v1535, 127
        %v1540 = vpop.permute.xlu0 %1539
        %1541 = vrot.lane.b32.xlu0 %v1536, 127
        %v1542 = vpop.permute.xlu0 %1541
        %v1545 = vadd.f32 %v1531, %v1540
        %v1546 = vadd.f32 %v1532, %v1542
        %s1547 = sld [smem:[#allocation2 + $0x55]]
        %v1548 = vstv %s1547
        %v1549 = vmul.f32 %v1548, %v304
        %v1550 = vmul.f32 %v1548, %v305
        %1553 = vrot.lane.b32.xlu0 %v1549, 127
        %v1554 = vpop.permute.xlu0 %1553
        %1555 = vrot.lane.b32.xlu0 %v1550, 127
        %v1556 = vpop.permute.xlu0 %1555
        %v1559 = vadd.f32 %v1545, %v1554
        %v1560 = vadd.f32 %v1546, %v1556
        %s1561 = sld [smem:[#allocation2 + $0x56]]
        %v1562 = vstv %s1561
        %v1563 = vmul.f32 %v1562, %v307
        %v1564 = vmul.f32 %v1562, %v308
        %1567 = vrot.lane.b32.xlu0 %v1563, 127
        %v1568 = vpop.permute.xlu0 %1567
        %1569 = vrot.lane.b32.xlu0 %v1564, 127
        %v1570 = vpop.permute.xlu0 %1569
        %v1573 = vadd.f32 %v1559, %v1568
        %v1574 = vadd.f32 %v1560, %v1570
        %s1575 = sld [smem:[#allocation2 + $0x57]]
        %v1576 = vstv %s1575
        %v1577 = vmul.f32 %v1576, %v310
        %v1578 = vmul.f32 %v1576, %v311
        %1581 = vrot.lane.b32.xlu0 %v1577, 127
        %v1582 = vpop.permute.xlu0 %1581
        %1583 = vrot.lane.b32.xlu0 %v1578, 127
        %v1584 = vpop.permute.xlu0 %1583
        %v1587 = vadd.f32 %v1573, %v1582
        %v1588 = vadd.f32 %v1574, %v1584
        %s1589 = sld [smem:[#allocation2 + $0x64]]
        %v1590 = vstv %s1589
        %v1591 = vmul.f32 %v1590, %v301
        %v1592 = vmul.f32 %v1590, %v302
        %v1593 = vmul.f32 %v1590, %v303
        %v1597 = vrot.slane %v1591, 1
        %v1598 = vrot.slane %v1592, 1
        %v1599 = vsel %vm403, %v1597, %v1598
        %v1600 = vrot.slane %v1593, 1
        %v1601 = vsel %vm403, %v1598, %v1600
        %v1604 = vadd.f32 %v1587, %v1599
        %v1605 = vadd.f32 %v1588, %v1601
        %s1606 = sld [smem:[#allocation2 + $0x65]]
        %v1607 = vstv %s1606
        %v1608 = vmul.f32 %v1607, %v304
        %v1609 = vmul.f32 %v1607, %v305
        %v1610 = vmul.f32 %v1607, %v306
        %v1614 = vrot.slane %v1608, 1
        %v1615 = vrot.slane %v1609, 1
        %v1616 = vsel %vm403, %v1614, %v1615
        %v1617 = vrot.slane %v1610, 1
        %v1618 = vsel %vm403, %v1615, %v1617
        %v1621 = vadd.f32 %v1604, %v1616
        %v1622 = vadd.f32 %v1605, %v1618
        %s1623 = sld [smem:[#allocation2 + $0x66]]
        %v1624 = vstv %s1623
        %v1625 = vmul.f32 %v1624, %v307
        %v1626 = vmul.f32 %v1624, %v308
        %v1627 = vmul.f32 %v1624, %v309
        %v1631 = vrot.slane %v1625, 1
        %v1632 = vrot.slane %v1626, 1
        %v1633 = vsel %vm403, %v1631, %v1632
        %v1634 = vrot.slane %v1627, 1
        %v1635 = vsel %vm403, %v1632, %v1634
        %v1638 = vadd.f32 %v1621, %v1633
        %v1639 = vadd.f32 %v1622, %v1635
        %s1640 = sld [smem:[#allocation2 + $0x67]]
        %v1641 = vstv %s1640
        %v1642 = vmul.f32 %v1641, %v310
        %v1643 = vmul.f32 %v1641, %v311
        %v1644 = vmul.f32 %v1641, %v312
        %v1648 = vrot.slane %v1642, 1
        %v1649 = vrot.slane %v1643, 1
        %v1650 = vsel %vm403, %v1648, %v1649
        %v1651 = vrot.slane %v1644, 1
        %v1652 = vsel %vm403, %v1649, %v1651
        %v1655 = vadd.f32 %v1638, %v1650
        %v1656 = vadd.f32 %v1639, %v1652
        %s1657 = sld [smem:[#allocation2 + $0x74]]
        %v1658 = vstv %s1657
        %v1659 = vmul.f32 %v1658, %v301
        %v1660 = vmul.f32 %v1658, %v302
        %v1661 = vmul.f32 %v1658, %v303
        %v1665 = vrot.slane %v1659, 1
        %v1666 = vrot.slane %v1660, 1
        %v1667 = vsel %vm403, %v1665, %v1666
        %v1668 = vrot.slane %v1661, 1
        %v1669 = vsel %vm403, %v1666, %v1668
        %1670 = vrot.lane.b32.xlu0 %v1667, 127
        %v1671 = vpop.permute.xlu0 %1670
        %1672 = vrot.lane.b32.xlu0 %v1669, 127
        %v1673 = vpop.permute.xlu0 %1672
        %v1676 = vadd.f32 %v1655, %v1671
        %v1677 = vadd.f32 %v1656, %v1673
        %s1678 = sld [smem:[#allocation2 + $0x75]]
        %v1679 = vstv %s1678
        %v1680 = vmul.f32 %v1679, %v304
        %v1681 = vmul.f32 %v1679, %v305
        %v1682 = vmul.f32 %v1679, %v306
        %v1686 = vrot.slane %v1680, 1
        %v1687 = vrot.slane %v1681, 1
        %v1688 = vsel %vm403, %v1686, %v1687
        %v1689 = vrot.slane %v1682, 1
        %v1690 = vsel %vm403, %v1687, %v1689
        %1691 = vrot.lane.b32.xlu0 %v1688, 127
        %v1692 = vpop.permute.xlu0 %1691
        %1693 = vrot.lane.b32.xlu0 %v1690, 127
        %v1694 = vpop.permute.xlu0 %1693
        %v1697 = vadd.f32 %v1676, %v1692
        %v1698 = vadd.f32 %v1677, %v1694
        %s1699 = sld [smem:[#allocation2 + $0x76]]
        %v1700 = vstv %s1699
        %v1701 = vmul.f32 %v1700, %v307
        %v1702 = vmul.f32 %v1700, %v308
        %v1703 = vmul.f32 %v1700, %v309
        %v1707 = vrot.slane %v1701, 1
        %v1708 = vrot.slane %v1702, 1
        %v1709 = vsel %vm403, %v1707, %v1708
        %v1710 = vrot.slane %v1703, 1
        %v1711 = vsel %vm403, %v1708, %v1710
        %1712 = vrot.lane.b32.xlu0 %v1709, 127
        %v1713 = vpop.permute.xlu0 %1712
        %1714 = vrot.lane.b32.xlu0 %v1711, 127
        %v1715 = vpop.permute.xlu0 %1714
        %v1718 = vadd.f32 %v1697, %v1713
        %v1719 = vadd.f32 %v1698, %v1715
        %s1720 = sld [smem:[#allocation2 + $0x77]]
        %v1721 = vstv %s1720
        %v1722 = vmul.f32 %v1721, %v310
        %v1723 = vmul.f32 %v1721, %v311
        %v1724 = vmul.f32 %v1721, %v312
        %v1728 = vrot.slane %v1722, 1
        %v1729 = vrot.slane %v1723, 1
        %v1730 = vsel %vm403, %v1728, %v1729
        %v1731 = vrot.slane %v1724, 1
        %v1732 = vsel %vm403, %v1729, %v1731
        %1733 = vrot.lane.b32.xlu0 %v1730, 127
        %v1734 = vpop.permute.xlu0 %1733
        %1735 = vrot.lane.b32.xlu0 %v1732, 127
        %v1736 = vpop.permute.xlu0 %1735
        %v1739 = vadd.f32 %v1718, %v1734
        %v1740 = vadd.f32 %v1719, %v1736
        %1743 = vrot.lane.b32.xlu0 %v1739, 127
        %v1744 = vpop.permute.xlu0 %1743
        %1745 = vrot.lane.b32.xlu0 %v1740, 127
        %v1746 = vpop.permute.xlu0 %1745
        %s1749 = scalar_lea.vmem %s197, 80
        %1750 = vst.msk [vmem:[%s1749] sm:$0xff] %vm548, %v1744
        %1751 = vst.msk [vmem:[%s1749 + $0x8] sm:$0xff] %vm548, %v1746
        %s1752 = sld [smem:[#allocation4 + $0x2]]
        %v1753 = vstv %s1752
        %s1754 = sld [smem:[#allocation2 + $0x48]]
        %v1755 = vstv %s1754
        %v1756 = vmul.f32 %v1755, %v301
        %v1757 = vmul.f32 %v1755, %v302
        %v1758 = vadd.f32 %v1753, %v1756
        %v1759 = vadd.f32 %v1753, %v1757
        %s1760 = sld [smem:[#allocation2 + $0x49]]
        %v1761 = vstv %s1760
        %v1762 = vmul.f32 %v1761, %v304
        %v1763 = vmul.f32 %v1761, %v305
        %v1764 = vadd.f32 %v1758, %v1762
        %v1765 = vadd.f32 %v1759, %v1763
        %s1766 = sld [smem:[#allocation2 + $0x4a]]
        %v1767 = vstv %s1766
        %v1768 = vmul.f32 %v1767, %v307
        %v1769 = vmul.f32 %v1767, %v308
        %v1770 = vadd.f32 %v1764, %v1768
        %v1771 = vadd.f32 %v1765, %v1769
        %s1772 = sld [smem:[#allocation2 + $0x4b]]
        %v1773 = vstv %s1772
        %v1774 = vmul.f32 %v1773, %v310
        %v1775 = vmul.f32 %v1773, %v311
        %v1776 = vadd.f32 %v1770, %v1774
        %v1777 = vadd.f32 %v1771, %v1775
        %s1778 = sld [smem:[#allocation2 + $0x58]]
        %v1779 = vstv %s1778
        %v1780 = vmul.f32 %v1779, %v301
        %v1781 = vmul.f32 %v1779, %v302
        %1784 = vrot.lane.b32.xlu0 %v1780, 127
        %v1785 = vpop.permute.xlu0 %1784
        %1786 = vrot.lane.b32.xlu0 %v1781, 127
        %v1787 = vpop.permute.xlu0 %1786
        %v1790 = vadd.f32 %v1776, %v1785
        %v1791 = vadd.f32 %v1777, %v1787
        %s1792 = sld [smem:[#allocation2 + $0x59]]
        %v1793 = vstv %s1792
        %v1794 = vmul.f32 %v1793, %v304
        %v1795 = vmul.f32 %v1793, %v305
        %1798 = vrot.lane.b32.xlu0 %v1794, 127
        %v1799 = vpop.permute.xlu0 %1798
        %1800 = vrot.lane.b32.xlu0 %v1795, 127
        %v1801 = vpop.permute.xlu0 %1800
        %v1804 = vadd.f32 %v1790, %v1799
        %v1805 = vadd.f32 %v1791, %v1801
        %s1806 = sld [smem:[#allocation2 + $0x5a]]
        %v1807 = vstv %s1806
        %v1808 = vmul.f32 %v1807, %v307
        %v1809 = vmul.f32 %v1807, %v308
        %1812 = vrot.lane.b32.xlu0 %v1808, 127
        %v1813 = vpop.permute.xlu0 %1812
        %1814 = vrot.lane.b32.xlu0 %v1809, 127
        %v1815 = vpop.permute.xlu0 %1814
        %v1818 = vadd.f32 %v1804, %v1813
        %v1819 = vadd.f32 %v1805, %v1815
        %s1820 = sld [smem:[#allocation2 + $0x5b]]
        %v1821 = vstv %s1820
        %v1822 = vmul.f32 %v1821, %v310
        %v1823 = vmul.f32 %v1821, %v311
        %1826 = vrot.lane.b32.xlu0 %v1822, 127
        %v1827 = vpop.permute.xlu0 %1826
        %1828 = vrot.lane.b32.xlu0 %v1823, 127
        %v1829 = vpop.permute.xlu0 %1828
        %v1832 = vadd.f32 %v1818, %v1827
        %v1833 = vadd.f32 %v1819, %v1829
        %s1834 = sld [smem:[#allocation2 + $0x68]]
        %v1835 = vstv %s1834
        %v1836 = vmul.f32 %v1835, %v301
        %v1837 = vmul.f32 %v1835, %v302
        %v1838 = vmul.f32 %v1835, %v303
        %v1842 = vrot.slane %v1836, 1
        %v1843 = vrot.slane %v1837, 1
        %v1844 = vsel %vm403, %v1842, %v1843
        %v1845 = vrot.slane %v1838, 1
        %v1846 = vsel %vm403, %v1843, %v1845
        %v1849 = vadd.f32 %v1832, %v1844
        %v1850 = vadd.f32 %v1833, %v1846
        %s1851 = sld [smem:[#allocation2 + $0x69]]
        %v1852 = vstv %s1851
        %v1853 = vmul.f32 %v1852, %v304
        %v1854 = vmul.f32 %v1852, %v305
        %v1855 = vmul.f32 %v1852, %v306
        %v1859 = vrot.slane %v1853, 1
        %v1860 = vrot.slane %v1854, 1
        %v1861 = vsel %vm403, %v1859, %v1860
        %v1862 = vrot.slane %v1855, 1
        %v1863 = vsel %vm403, %v1860, %v1862
        %v1866 = vadd.f32 %v1849, %v1861
        %v1867 = vadd.f32 %v1850, %v1863
        %s1868 = sld [smem:[#allocation2 + $0x6a]]
        %v1869 = vstv %s1868
        %v1870 = vmul.f32 %v1869, %v307
        %v1871 = vmul.f32 %v1869, %v308
        %v1872 = vmul.f32 %v1869, %v309
        %v1876 = vrot.slane %v1870, 1
        %v1877 = vrot.slane %v1871, 1
        %v1878 = vsel %vm403, %v1876, %v1877
        %v1879 = vrot.slane %v1872, 1
        %v1880 = vsel %vm403, %v1877, %v1879
        %v1883 = vadd.f32 %v1866, %v1878
        %v1884 = vadd.f32 %v1867, %v1880
        %s1885 = sld [smem:[#allocation2 + $0x6b]]
        %v1886 = vstv %s1885
        %v1887 = vmul.f32 %v1886, %v310
        %v1888 = vmul.f32 %v1886, %v311
        %v1889 = vmul.f32 %v1886, %v312
        %v1893 = vrot.slane %v1887, 1
        %v1894 = vrot.slane %v1888, 1
        %v1895 = vsel %vm403, %v1893, %v1894
        %v1896 = vrot.slane %v1889, 1
        %v1897 = vsel %vm403, %v1894, %v1896
        %v1900 = vadd.f32 %v1883, %v1895
        %v1901 = vadd.f32 %v1884, %v1897
        %s1902 = sld [smem:[#allocation2 + $0x78]]
        %v1903 = vstv %s1902
        %v1904 = vmul.f32 %v1903, %v301
        %v1905 = vmul.f32 %v1903, %v302
        %v1906 = vmul.f32 %v1903, %v303
        %v1910 = vrot.slane %v1904, 1
        %v1911 = vrot.slane %v1905, 1
        %v1912 = vsel %vm403, %v1910, %v1911
        %v1913 = vrot.slane %v1906, 1
        %v1914 = vsel %vm403, %v1911, %v1913
        %1915 = vrot.lane.b32.xlu0 %v1912, 127
        %v1916 = vpop.permute.xlu0 %1915
        %1917 = vrot.lane.b32.xlu0 %v1914, 127
        %v1918 = vpop.permute.xlu0 %1917
        %v1921 = vadd.f32 %v1900, %v1916
        %v1922 = vadd.f32 %v1901, %v1918
        %s1923 = sld [smem:[#allocation2 + $0x79]]
        %v1924 = vstv %s1923
        %v1925 = vmul.f32 %v1924, %v304
        %v1926 = vmul.f32 %v1924, %v305
        %v1927 = vmul.f32 %v1924, %v306
        %v1931 = vrot.slane %v1925, 1
        %v1932 = vrot.slane %v1926, 1
        %v1933 = vsel %vm403, %v1931, %v1932
        %v1934 = vrot.slane %v1927, 1
        %v1935 = vsel %vm403, %v1932, %v1934
        %1936 = vrot.lane.b32.xlu0 %v1933, 127
        %v1937 = vpop.permute.xlu0 %1936
        %1938 = vrot.lane.b32.xlu0 %v1935, 127
        %v1939 = vpop.permute.xlu0 %1938
        %v1942 = vadd.f32 %v1921, %v1937
        %v1943 = vadd.f32 %v1922, %v1939
        %s1944 = sld [smem:[#allocation2 + $0x7a]]
        %v1945 = vstv %s1944
        %v1946 = vmul.f32 %v1945, %v307
        %v1947 = vmul.f32 %v1945, %v308
        %v1948 = vmul.f32 %v1945, %v309
        %v1952 = vrot.slane %v1946, 1
        %v1953 = vrot.slane %v1947, 1
        %v1954 = vsel %vm403, %v1952, %v1953
        %v1955 = vrot.slane %v1948, 1
        %v1956 = vsel %vm403, %v1953, %v1955
        %1957 = vrot.lane.b32.xlu0 %v1954, 127
        %v1958 = vpop.permute.xlu0 %1957
        %1959 = vrot.lane.b32.xlu0 %v1956, 127
        %v1960 = vpop.permute.xlu0 %1959
        %v1963 = vadd.f32 %v1942, %v1958
        %v1964 = vadd.f32 %v1943, %v1960
        %s1965 = sld [smem:[#allocation2 + $0x7b]]
        %v1966 = vstv %s1965
        %v1967 = vmul.f32 %v1966, %v310
        %v1968 = vmul.f32 %v1966, %v311
        %v1969 = vmul.f32 %v1966, %v312
        %v1973 = vrot.slane %v1967, 1
        %v1974 = vrot.slane %v1968, 1
        %v1975 = vsel %vm403, %v1973, %v1974
        %v1976 = vrot.slane %v1969, 1
        %v1977 = vsel %vm403, %v1974, %v1976
        %1978 = vrot.lane.b32.xlu0 %v1975, 127
        %v1979 = vpop.permute.xlu0 %1978
        %1980 = vrot.lane.b32.xlu0 %v1977, 127
        %v1981 = vpop.permute.xlu0 %1980
        %v1984 = vadd.f32 %v1963, %v1979
        %v1985 = vadd.f32 %v1964, %v1981
        %1988 = vrot.lane.b32.xlu0 %v1984, 127
        %v1989 = vpop.permute.xlu0 %1988
        %1990 = vrot.lane.b32.xlu0 %v1985, 127
        %v1991 = vpop.permute.xlu0 %1990
        %s1994 = scalar_lea.vmem %s197, 96
        %1995 = vst.msk [vmem:[%s1994] sm:$0xff] %vm548, %v1989
        %1996 = vst.msk [vmem:[%s1994 + $0x8] sm:$0xff] %vm548, %v1991
        %s1997 = sld [smem:[#allocation4 + $0x3]]
        %v1998 = vstv %s1997
        %s1999 = sld [smem:[#allocation2 + $0x4c]]
        %v2000 = vstv %s1999
        %v2001 = vmul.f32 %v2000, %v301
        %v2002 = vmul.f32 %v2000, %v302
        %v2003 = vadd.f32 %v1998, %v2001
        %v2004 = vadd.f32 %v1998, %v2002
        %s2005 = sld [smem:[#allocation2 + $0x4d]]
        %v2006 = vstv %s2005
        %v2007 = vmul.f32 %v2006, %v304
        %v2008 = vmul.f32 %v2006, %v305
        %v2009 = vadd.f32 %v2003, %v2007
        %v2010 = vadd.f32 %v2004, %v2008
        %s2011 = sld [smem:[#allocation2 + $0x4e]]
        %v2012 = vstv %s2011
        %v2013 = vmul.f32 %v2012, %v307
        %v2014 = vmul.f32 %v2012, %v308
        %v2015 = vadd.f32 %v2009, %v2013
        %v2016 = vadd.f32 %v2010, %v2014
        %s2017 = sld [smem:[#allocation2 + $0x4f]]
        %v2018 = vstv %s2017
        %v2019 = vmul.f32 %v2018, %v310
        %v2020 = vmul.f32 %v2018, %v311
        %v2021 = vadd.f32 %v2015, %v2019
        %v2022 = vadd.f32 %v2016, %v2020
        %s2023 = sld [smem:[#allocation2 + $0x5c]]
        %v2024 = vstv %s2023
        %v2025 = vmul.f32 %v2024, %v301
        %v2026 = vmul.f32 %v2024, %v302
        %2029 = vrot.lane.b32.xlu0 %v2025, 127
        %v2030 = vpop.permute.xlu0 %2029
        %2031 = vrot.lane.b32.xlu0 %v2026, 127
        %v2032 = vpop.permute.xlu0 %2031
        %v2035 = vadd.f32 %v2021, %v2030
        %v2036 = vadd.f32 %v2022, %v2032
        %s2037 = sld [smem:[#allocation2 + $0x5d]]
        %v2038 = vstv %s2037
        %v2039 = vmul.f32 %v2038, %v304
        %v2040 = vmul.f32 %v2038, %v305
        %2043 = vrot.lane.b32.xlu0 %v2039, 127
        %v2044 = vpop.permute.xlu0 %2043
        %2045 = vrot.lane.b32.xlu0 %v2040, 127
        %v2046 = vpop.permute.xlu0 %2045
        %v2049 = vadd.f32 %v2035, %v2044
        %v2050 = vadd.f32 %v2036, %v2046
        %s2051 = sld [smem:[#allocation2 + $0x5e]]
        %v2052 = vstv %s2051
        %v2053 = vmul.f32 %v2052, %v307
        %v2054 = vmul.f32 %v2052, %v308
        %2057 = vrot.lane.b32.xlu0 %v2053, 127
        %v2058 = vpop.permute.xlu0 %2057
        %2059 = vrot.lane.b32.xlu0 %v2054, 127
        %v2060 = vpop.permute.xlu0 %2059
        %v2063 = vadd.f32 %v2049, %v2058
        %v2064 = vadd.f32 %v2050, %v2060
        %s2065 = sld [smem:[#allocation2 + $0x5f]]
        %v2066 = vstv %s2065
        %v2067 = vmul.f32 %v2066, %v310
        %v2068 = vmul.f32 %v2066, %v311
        %2071 = vrot.lane.b32.xlu0 %v2067, 127
        %v2072 = vpop.permute.xlu0 %2071
        %2073 = vrot.lane.b32.xlu0 %v2068, 127
        %v2074 = vpop.permute.xlu0 %2073
        %v2077 = vadd.f32 %v2063, %v2072
        %v2078 = vadd.f32 %v2064, %v2074
        %s2079 = sld [smem:[#allocation2 + $0x6c]]
        %v2080 = vstv %s2079
        %v2081 = vmul.f32 %v2080, %v301
        %v2082 = vmul.f32 %v2080, %v302
        %v2083 = vmul.f32 %v2080, %v303
        %v2087 = vrot.slane %v2081, 1
        %v2088 = vrot.slane %v2082, 1
        %v2089 = vsel %vm403, %v2087, %v2088
        %v2090 = vrot.slane %v2083, 1
        %v2091 = vsel %vm403, %v2088, %v2090
        %v2094 = vadd.f32 %v2077, %v2089
        %v2095 = vadd.f32 %v2078, %v2091
        %s2096 = sld [smem:[#allocation2 + $0x6d]]
        %v2097 = vstv %s2096
        %v2098 = vmul.f32 %v2097, %v304
        %v2099 = vmul.f32 %v2097, %v305
        %v2100 = vmul.f32 %v2097, %v306
        %v2104 = vrot.slane %v2098, 1
        %v2105 = vrot.slane %v2099, 1
        %v2106 = vsel %vm403, %v2104, %v2105
        %v2107 = vrot.slane %v2100, 1
        %v2108 = vsel %vm403, %v2105, %v2107
        %v2111 = vadd.f32 %v2094, %v2106
        %v2112 = vadd.f32 %v2095, %v2108
        %s2113 = sld [smem:[#allocation2 + $0x6e]]
        %v2114 = vstv %s2113
        %v2115 = vmul.f32 %v2114, %v307
        %v2116 = vmul.f32 %v2114, %v308
        %v2117 = vmul.f32 %v2114, %v309
        %v2121 = vrot.slane %v2115, 1
        %v2122 = vrot.slane %v2116, 1
        %v2123 = vsel %vm403, %v2121, %v2122
        %v2124 = vrot.slane %v2117, 1
        %v2125 = vsel %vm403, %v2122, %v2124
        %v2128 = vadd.f32 %v2111, %v2123
        %v2129 = vadd.f32 %v2112, %v2125
        %s2130 = sld [smem:[#allocation2 + $0x6f]]
        %v2131 = vstv %s2130
        %v2132 = vmul.f32 %v2131, %v310
        %v2133 = vmul.f32 %v2131, %v311
        %v2134 = vmul.f32 %v2131, %v312
        %v2138 = vrot.slane %v2132, 1
        %v2139 = vrot.slane %v2133, 1
        %v2140 = vsel %vm403, %v2138, %v2139
        %v2141 = vrot.slane %v2134, 1
        %v2142 = vsel %vm403, %v2139, %v2141
        %v2145 = vadd.f32 %v2128, %v2140
        %v2146 = vadd.f32 %v2129, %v2142
        %s2147 = sld [smem:[#allocation2 + $0x7c]]
        %v2148 = vstv %s2147
        %v2149 = vmul.f32 %v2148, %v301
        %v2150 = vmul.f32 %v2148, %v302
        %v2151 = vmul.f32 %v2148, %v303
        %v2155 = vrot.slane %v2149, 1
        %v2156 = vrot.slane %v2150, 1
        %v2157 = vsel %vm403, %v2155, %v2156
        %v2158 = vrot.slane %v2151, 1
        %v2159 = vsel %vm403, %v2156, %v2158
        %2160 = vrot.lane.b32.xlu0 %v2157, 127
        %v2161 = vpop.permute.xlu0 %2160
        %2162 = vrot.lane.b32.xlu0 %v2159, 127
        %v2163 = vpop.permute.xlu0 %2162
        %v2166 = vadd.f32 %v2145, %v2161
        %v2167 = vadd.f32 %v2146, %v2163
        %s2168 = sld [smem:[#allocation2 + $0x7d]]
        %v2169 = vstv %s2168
        %v2170 = vmul.f32 %v2169, %v304
        %v2171 = vmul.f32 %v2169, %v305
        %v2172 = vmul.f32 %v2169, %v306
        %v2176 = vrot.slane %v2170, 1
        %v2177 = vrot.slane %v2171, 1
        %v2178 = vsel %vm403, %v2176, %v2177
        %v2179 = vrot.slane %v2172, 1
        %v2180 = vsel %vm403, %v2177, %v2179
        %2181 = vrot.lane.b32.xlu0 %v2178, 127
        %v2182 = vpop.permute.xlu0 %2181
        %2183 = vrot.lane.b32.xlu0 %v2180, 127
        %v2184 = vpop.permute.xlu0 %2183
        %v2187 = vadd.f32 %v2166, %v2182
        %v2188 = vadd.f32 %v2167, %v2184
        %s2189 = sld [smem:[#allocation2 + $0x7e]]
        %v2190 = vstv %s2189
        %v2191 = vmul.f32 %v2190, %v307
        %v2192 = vmul.f32 %v2190, %v308
        %v2193 = vmul.f32 %v2190, %v309
        %v2197 = vrot.slane %v2191, 1
        %v2198 = vrot.slane %v2192, 1
        %v2199 = vsel %vm403, %v2197, %v2198
        %v2200 = vrot.slane %v2193, 1
        %v2201 = vsel %vm403, %v2198, %v2200
        %2202 = vrot.lane.b32.xlu0 %v2199, 127
        %v2203 = vpop.permute.xlu0 %2202
        %2204 = vrot.lane.b32.xlu0 %v2201, 127
        %v2205 = vpop.permute.xlu0 %2204
        %v2208 = vadd.f32 %v2187, %v2203
        %v2209 = vadd.f32 %v2188, %v2205
        %s2210 = sld [smem:[#allocation2 + $0x7f]]
        %v2211 = vstv %s2210
        %v2212 = vmul.f32 %v2211, %v310
        %v2213 = vmul.f32 %v2211, %v311
        %v2214 = vmul.f32 %v2211, %v312
        %v2218 = vrot.slane %v2212, 1
        %v2219 = vrot.slane %v2213, 1
        %v2220 = vsel %vm403, %v2218, %v2219
        %v2221 = vrot.slane %v2214, 1
        %v2222 = vsel %vm403, %v2219, %v2221
        %2223 = vrot.lane.b32.xlu0 %v2220, 127
        %v2224 = vpop.permute.xlu0 %2223
        %2225 = vrot.lane.b32.xlu0 %v2222, 127
        %v2226 = vpop.permute.xlu0 %2225
        %v2229 = vadd.f32 %v2208, %v2224
        %v2230 = vadd.f32 %v2209, %v2226
        %2233 = vrot.lane.b32.xlu0 %v2229, 127
        %v2234 = vpop.permute.xlu0 %2233
        %2235 = vrot.lane.b32.xlu0 %v2230, 127
        %v2236 = vpop.permute.xlu0 %2235
        %s2239 = scalar_lea.vmem %s197, 112
        %2240 = vst.msk [vmem:[%s2239] sm:$0xff] %vm548, %v2234
        %2241 = vst.msk [vmem:[%s2239 + $0x8] sm:$0xff] %vm548, %v2236
        %s2242 = sld [smem:[#allocation4]]
        %v2243 = vstv %s2242
        %s2244 = sld [smem:[#allocation2 + $0x80]]
        %v2245 = vstv %s2244
        %v2246 = vmul.f32 %v2245, %v301
        %v2247 = vmul.f32 %v2245, %v302
        %v2248 = vmul.f32 %v2245, %v303
        %v2249 = vadd.f32 %v2243, %v2246
        %v2250 = vadd.f32 %v2243, %v2247
        %v2251 = vadd.f32 %v2243, %v2248
        %s2252 = sld [smem:[#allocation2 + $0x81]]
        %v2253 = vstv %s2252
        %v2254 = vmul.f32 %v2253, %v304
        %v2255 = vmul.f32 %v2253, %v305
        %v2256 = vmul.f32 %v2253, %v306
        %v2257 = vadd.f32 %v2249, %v2254
        %v2258 = vadd.f32 %v2250, %v2255
        %v2259 = vadd.f32 %v2251, %v2256
        %s2260 = sld [smem:[#allocation2 + $0x82]]
        %v2261 = vstv %s2260
        %v2262 = vmul.f32 %v2261, %v307
        %v2263 = vmul.f32 %v2261, %v308
        %v2264 = vmul.f32 %v2261, %v309
        %v2265 = vadd.f32 %v2257, %v2262
        %v2266 = vadd.f32 %v2258, %v2263
        %v2267 = vadd.f32 %v2259, %v2264
        %s2268 = sld [smem:[#allocation2 + $0x83]]
        %v2269 = vstv %s2268
        %v2270 = vmul.f32 %v2269, %v310
        %v2271 = vmul.f32 %v2269, %v311
        %v2272 = vmul.f32 %v2269, %v312
        %v2273 = vadd.f32 %v2265, %v2270
        %v2274 = vadd.f32 %v2266, %v2271
        %v2275 = vadd.f32 %v2267, %v2272
        %s2276 = sld [smem:[#allocation2 + $0x90]]
        %v2277 = vstv %s2276
        %v2278 = vmul.f32 %v2277, %v301
        %v2279 = vmul.f32 %v2277, %v302
        %v2280 = vmul.f32 %v2277, %v303
        %2284 = vrot.lane.b32.xlu0 %v2278, 127
        %v2285 = vpop.permute.xlu0 %2284
        %2286 = vrot.lane.b32.xlu0 %v2279, 127
        %v2287 = vpop.permute.xlu0 %2286
        %2288 = vrot.lane.b32.xlu0 %v2280, 127
        %v2289 = vpop.permute.xlu0 %2288
        %v2293 = vadd.f32 %v2273, %v2285
        %v2294 = vadd.f32 %v2274, %v2287
        %v2295 = vadd.f32 %v2275, %v2289
        %s2296 = sld [smem:[#allocation2 + $0x91]]
        %v2297 = vstv %s2296
        %v2298 = vmul.f32 %v2297, %v304
        %v2299 = vmul.f32 %v2297, %v305
        %v2300 = vmul.f32 %v2297, %v306
        %2304 = vrot.lane.b32.xlu0 %v2298, 127
        %v2305 = vpop.permute.xlu0 %2304
        %2306 = vrot.lane.b32.xlu0 %v2299, 127
        %v2307 = vpop.permute.xlu0 %2306
        %2308 = vrot.lane.b32.xlu0 %v2300, 127
        %v2309 = vpop.permute.xlu0 %2308
        %v2313 = vadd.f32 %v2293, %v2305
        %v2314 = vadd.f32 %v2294, %v2307
        %v2315 = vadd.f32 %v2295, %v2309
        %s2316 = sld [smem:[#allocation2 + $0x92]]
        %v2317 = vstv %s2316
        %v2318 = vmul.f32 %v2317, %v307
        %v2319 = vmul.f32 %v2317, %v308
        %v2320 = vmul.f32 %v2317, %v309
        %2324 = vrot.lane.b32.xlu0 %v2318, 127
        %v2325 = vpop.permute.xlu0 %2324
        %2326 = vrot.lane.b32.xlu0 %v2319, 127
        %v2327 = vpop.permute.xlu0 %2326
        %2328 = vrot.lane.b32.xlu0 %v2320, 127
        %v2329 = vpop.permute.xlu0 %2328
        %v2333 = vadd.f32 %v2313, %v2325
        %v2334 = vadd.f32 %v2314, %v2327
        %v2335 = vadd.f32 %v2315, %v2329
        %s2336 = sld [smem:[#allocation2 + $0x93]]
        %v2337 = vstv %s2336
        %v2338 = vmul.f32 %v2337, %v310
        %v2339 = vmul.f32 %v2337, %v311
        %v2340 = vmul.f32 %v2337, %v312
        %2344 = vrot.lane.b32.xlu0 %v2338, 127
        %v2345 = vpop.permute.xlu0 %2344
        %2346 = vrot.lane.b32.xlu0 %v2339, 127
        %v2347 = vpop.permute.xlu0 %2346
        %2348 = vrot.lane.b32.xlu0 %v2340, 127
        %v2349 = vpop.permute.xlu0 %2348
        %v2353 = vadd.f32 %v2333, %v2345
        %v2354 = vadd.f32 %v2334, %v2347
        %v2355 = vadd.f32 %v2335, %v2349
        %s2356 = sld [smem:[#allocation2 + $0xa0]]
        %v2357 = vstv %s2356
        %v2358 = vmul.f32 %v2357, %v301
        %v2359 = vmul.f32 %v2357, %v302
        %v2360 = vmul.f32 %v2357, %v303
        %v2364 = vrot.slane %v2358, 1
        %v2365 = vrot.slane %v2359, 1
        %v2366 = vsel %vm403, %v2364, %v2365
        %v2367 = vrot.slane %v2360, 1
        %v2368 = vsel %vm403, %v2365, %v2367
        %v2372 = vadd.f32 %v2353, %v2366
        %v2373 = vadd.f32 %v2354, %v2368
        %v2374 = vadd.f32 %v2355, %v2367
        %s2375 = sld [smem:[#allocation2 + $0xa1]]
        %v2376 = vstv %s2375
        %v2377 = vmul.f32 %v2376, %v304
        %v2378 = vmul.f32 %v2376, %v305
        %v2379 = vmul.f32 %v2376, %v306
        %v2383 = vrot.slane %v2377, 1
        %v2384 = vrot.slane %v2378, 1
        %v2385 = vsel %vm403, %v2383, %v2384
        %v2386 = vrot.slane %v2379, 1
        %v2387 = vsel %vm403, %v2384, %v2386
        %v2391 = vadd.f32 %v2372, %v2385
        %v2392 = vadd.f32 %v2373, %v2387
        %v2393 = vadd.f32 %v2374, %v2386
        %s2394 = sld [smem:[#allocation2 + $0xa2]]
        %v2395 = vstv %s2394
        %v2396 = vmul.f32 %v2395, %v307
        %v2397 = vmul.f32 %v2395, %v308
        %v2398 = vmul.f32 %v2395, %v309
        %v2402 = vrot.slane %v2396, 1
        %v2403 = vrot.slane %v2397, 1
        %v2404 = vsel %vm403, %v2402, %v2403
        %v2405 = vrot.slane %v2398, 1
        %v2406 = vsel %vm403, %v2403, %v2405
        %v2410 = vadd.f32 %v2391, %v2404
        %v2411 = vadd.f32 %v2392, %v2406
        %v2412 = vadd.f32 %v2393, %v2405
        %s2413 = sld [smem:[#allocation2 + $0xa3]]
        %v2414 = vstv %s2413
        %v2415 = vmul.f32 %v2414, %v310
        %v2416 = vmul.f32 %v2414, %v311
        %v2417 = vmul.f32 %v2414, %v312
        %v2421 = vrot.slane %v2415, 1
        %v2422 = vrot.slane %v2416, 1
        %v2423 = vsel %vm403, %v2421, %v2422
        %v2424 = vrot.slane %v2417, 1
        %v2425 = vsel %vm403, %v2422, %v2424
        %v2429 = vadd.f32 %v2410, %v2423
        %v2430 = vadd.f32 %v2411, %v2425
        %v2431 = vadd.f32 %v2412, %v2424
        %s2432 = sld [smem:[#allocation2 + $0xb0]]
        %v2433 = vstv %s2432
        %v2434 = vmul.f32 %v2433, %v301
        %v2435 = vmul.f32 %v2433, %v302
        %v2436 = vmul.f32 %v2433, %v303
        %v2440 = vrot.slane %v2434, 1
        %v2441 = vrot.slane %v2435, 1
        %v2442 = vsel %vm403, %v2440, %v2441
        %v2443 = vrot.slane %v2436, 1
        %v2444 = vsel %vm403, %v2441, %v2443
        %2445 = vrot.lane.b32.xlu0 %v2442, 127
        %v2446 = vpop.permute.xlu0 %2445
        %2447 = vrot.lane.b32.xlu0 %v2444, 127
        %v2448 = vpop.permute.xlu0 %2447
        %2449 = vrot.lane.b32.xlu0 %v2443, 127
        %v2450 = vpop.permute.xlu0 %2449
        %v2454 = vadd.f32 %v2429, %v2446
        %v2455 = vadd.f32 %v2430, %v2448
        %v2456 = vadd.f32 %v2431, %v2450
        %s2457 = sld [smem:[#allocation2 + $0xb1]]
        %v2458 = vstv %s2457
        %v2459 = vmul.f32 %v2458, %v304
        %v2460 = vmul.f32 %v2458, %v305
        %v2461 = vmul.f32 %v2458, %v306
        %v2465 = vrot.slane %v2459, 1
        %v2466 = vrot.slane %v2460, 1
        %v2467 = vsel %vm403, %v2465, %v2466
        %v2468 = vrot.slane %v2461, 1
        %v2469 = vsel %vm403, %v2466, %v2468
        %2470 = vrot.lane.b32.xlu0 %v2467, 127
        %v2471 = vpop.permute.xlu0 %2470
        %2472 = vrot.lane.b32.xlu0 %v2469, 127
        %v2473 = vpop.permute.xlu0 %2472
        %2474 = vrot.lane.b32.xlu0 %v2468, 127
        %v2475 = vpop.permute.xlu0 %2474
        %v2479 = vadd.f32 %v2454, %v2471
        %v2480 = vadd.f32 %v2455, %v2473
        %v2481 = vadd.f32 %v2456, %v2475
        %s2482 = sld [smem:[#allocation2 + $0xb2]]
        %v2483 = vstv %s2482
        %v2484 = vmul.f32 %v2483, %v307
        %v2485 = vmul.f32 %v2483, %v308
        %v2486 = vmul.f32 %v2483, %v309
        %v2490 = vrot.slane %v2484, 1
        %v2491 = vrot.slane %v2485, 1
        %v2492 = vsel %vm403, %v2490, %v2491
        %v2493 = vrot.slane %v2486, 1
        %v2494 = vsel %vm403, %v2491, %v2493
        %2495 = vrot.lane.b32.xlu0 %v2492, 127
        %v2496 = vpop.permute.xlu0 %2495
        %2497 = vrot.lane.b32.xlu0 %v2494, 127
        %v2498 = vpop.permute.xlu0 %2497
        %2499 = vrot.lane.b32.xlu0 %v2493, 127
        %v2500 = vpop.permute.xlu0 %2499
        %v2504 = vadd.f32 %v2479, %v2496
        %v2505 = vadd.f32 %v2480, %v2498
        %v2506 = vadd.f32 %v2481, %v2500
        %s2507 = sld [smem:[#allocation2 + $0xb3]]
        %v2508 = vstv %s2507
        %v2509 = vmul.f32 %v2508, %v310
        %v2510 = vmul.f32 %v2508, %v311
        %v2511 = vmul.f32 %v2508, %v312
        %v2515 = vrot.slane %v2509, 1
        %v2516 = vrot.slane %v2510, 1
        %v2517 = vsel %vm403, %v2515, %v2516
        %v2518 = vrot.slane %v2511, 1
        %v2519 = vsel %vm403, %v2516, %v2518
        %2520 = vrot.lane.b32.xlu0 %v2517, 127
        %v2521 = vpop.permute.xlu0 %2520
        %2522 = vrot.lane.b32.xlu0 %v2519, 127
        %v2523 = vpop.permute.xlu0 %2522
        %2524 = vrot.lane.b32.xlu0 %v2518, 127
        %v2525 = vpop.permute.xlu0 %2524
        %v2529 = vadd.f32 %v2504, %v2521
        %v2530 = vadd.f32 %v2505, %v2523
        %v2531 = vadd.f32 %v2506, %v2525
        %s2532 = scalar_lea.vmem %s197, 128
        %vm2533 = vcmask 130049
        %2534 = vst.msk [vmem:[%s2532 - $0x1] sm:$0xfe] %vm2533, %v2529
        %2535 = vst.msk [vmem:[%s2532 + $0x7] sm:$0xff] %vm548, %v2530
        %vm2536 = vcmask 122880
        %2537 = vst.msk [vmem:[%s2532 + $0xf] sm:$0x1] %vm2536, %v2531
        %s2538 = sld [smem:[#allocation4 + $0x1]]
        %v2539 = vstv %s2538
        %s2540 = sld [smem:[#allocation2 + $0x84]]
        %v2541 = vstv %s2540
        %v2542 = vmul.f32 %v2541, %v301
        %v2543 = vmul.f32 %v2541, %v302
        %v2544 = vmul.f32 %v2541, %v303
        %v2545 = vadd.f32 %v2539, %v2542
        %v2546 = vadd.f32 %v2539, %v2543
        %v2547 = vadd.f32 %v2539, %v2544
        %s2548 = sld [smem:[#allocation2 + $0x85]]
        %v2549 = vstv %s2548
        %v2550 = vmul.f32 %v2549, %v304
        %v2551 = vmul.f32 %v2549, %v305
        %v2552 = vmul.f32 %v2549, %v306
        %v2553 = vadd.f32 %v2545, %v2550
        %v2554 = vadd.f32 %v2546, %v2551
        %v2555 = vadd.f32 %v2547, %v2552
        %s2556 = sld [smem:[#allocation2 + $0x86]]
        %v2557 = vstv %s2556
        %v2558 = vmul.f32 %v2557, %v307
        %v2559 = vmul.f32 %v2557, %v308
        %v2560 = vmul.f32 %v2557, %v309
        %v2561 = vadd.f32 %v2553, %v2558
        %v2562 = vadd.f32 %v2554, %v2559
        %v2563 = vadd.f32 %v2555, %v2560
        %s2564 = sld [smem:[#allocation2 + $0x87]]
        %v2565 = vstv %s2564
        %v2566 = vmul.f32 %v2565, %v310
        %v2567 = vmul.f32 %v2565, %v311
        %v2568 = vmul.f32 %v2565, %v312
        %v2569 = vadd.f32 %v2561, %v2566
        %v2570 = vadd.f32 %v2562, %v2567
        %v2571 = vadd.f32 %v2563, %v2568
        %s2572 = sld [smem:[#allocation2 + $0x94]]
        %v2573 = vstv %s2572
        %v2574 = vmul.f32 %v2573, %v301
        %v2575 = vmul.f32 %v2573, %v302
        %v2576 = vmul.f32 %v2573, %v303
        %2580 = vrot.lane.b32.xlu0 %v2574, 127
        %v2581 = vpop.permute.xlu0 %2580
        %2582 = vrot.lane.b32.xlu0 %v2575, 127
        %v2583 = vpop.permute.xlu0 %2582
        %2584 = vrot.lane.b32.xlu0 %v2576, 127
        %v2585 = vpop.permute.xlu0 %2584
        %v2589 = vadd.f32 %v2569, %v2581
        %v2590 = vadd.f32 %v2570, %v2583
        %v2591 = vadd.f32 %v2571, %v2585
        %s2592 = sld [smem:[#allocation2 + $0x95]]
        %v2593 = vstv %s2592
        %v2594 = vmul.f32 %v2593, %v304
        %v2595 = vmul.f32 %v2593, %v305
        %v2596 = vmul.f32 %v2593, %v306
        %2600 = vrot.lane.b32.xlu0 %v2594, 127
        %v2601 = vpop.permute.xlu0 %2600
        %2602 = vrot.lane.b32.xlu0 %v2595, 127
        %v2603 = vpop.permute.xlu0 %2602
        %2604 = vrot.lane.b32.xlu0 %v2596, 127
        %v2605 = vpop.permute.xlu0 %2604
        %v2609 = vadd.f32 %v2589, %v2601
        %v2610 = vadd.f32 %v2590, %v2603
        %v2611 = vadd.f32 %v2591, %v2605
        %s2612 = sld [smem:[#allocation2 + $0x96]]
        %v2613 = vstv %s2612
        %v2614 = vmul.f32 %v2613, %v307
        %v2615 = vmul.f32 %v2613, %v308
        %v2616 = vmul.f32 %v2613, %v309
        %2620 = vrot.lane.b32.xlu0 %v2614, 127
        %v2621 = vpop.permute.xlu0 %2620
        %2622 = vrot.lane.b32.xlu0 %v2615, 127
        %v2623 = vpop.permute.xlu0 %2622
        %2624 = vrot.lane.b32.xlu0 %v2616, 127
        %v2625 = vpop.permute.xlu0 %2624
        %v2629 = vadd.f32 %v2609, %v2621
        %v2630 = vadd.f32 %v2610, %v2623
        %v2631 = vadd.f32 %v2611, %v2625
        %s2632 = sld [smem:[#allocation2 + $0x97]]
        %v2633 = vstv %s2632
        %v2634 = vmul.f32 %v2633, %v310
        %v2635 = vmul.f32 %v2633, %v311
        %v2636 = vmul.f32 %v2633, %v312
        %2640 = vrot.lane.b32.xlu0 %v2634, 127
        %v2641 = vpop.permute.xlu0 %2640
        %2642 = vrot.lane.b32.xlu0 %v2635, 127
        %v2643 = vpop.permute.xlu0 %2642
        %2644 = vrot.lane.b32.xlu0 %v2636, 127
        %v2645 = vpop.permute.xlu0 %2644
        %v2649 = vadd.f32 %v2629, %v2641
        %v2650 = vadd.f32 %v2630, %v2643
        %v2651 = vadd.f32 %v2631, %v2645
        %s2652 = sld [smem:[#allocation2 + $0xa4]]
        %v2653 = vstv %s2652
        %v2654 = vmul.f32 %v2653, %v301
        %v2655 = vmul.f32 %v2653, %v302
        %v2656 = vmul.f32 %v2653, %v303
        %v2660 = vrot.slane %v2654, 1
        %v2661 = vrot.slane %v2655, 1
        %v2662 = vsel %vm403, %v2660, %v2661
        %v2663 = vrot.slane %v2656, 1
        %v2664 = vsel %vm403, %v2661, %v2663
        %v2668 = vadd.f32 %v2649, %v2662
        %v2669 = vadd.f32 %v2650, %v2664
        %v2670 = vadd.f32 %v2651, %v2663
        %s2671 = sld [smem:[#allocation2 + $0xa5]]
        %v2672 = vstv %s2671
        %v2673 = vmul.f32 %v2672, %v304
        %v2674 = vmul.f32 %v2672, %v305
        %v2675 = vmul.f32 %v2672, %v306
        %v2679 = vrot.slane %v2673, 1
        %v2680 = vrot.slane %v2674, 1
        %v2681 = vsel %vm403, %v2679, %v2680
        %v2682 = vrot.slane %v2675, 1
        %v2683 = vsel %vm403, %v2680, %v2682
        %v2687 = vadd.f32 %v2668, %v2681
        %v2688 = vadd.f32 %v2669, %v2683
        %v2689 = vadd.f32 %v2670, %v2682
        %s2690 = sld [smem:[#allocation2 + $0xa6]]
        %v2691 = vstv %s2690
        %v2692 = vmul.f32 %v2691, %v307
        %v2693 = vmul.f32 %v2691, %v308
        %v2694 = vmul.f32 %v2691, %v309
        %v2698 = vrot.slane %v2692, 1
        %v2699 = vrot.slane %v2693, 1
        %v2700 = vsel %vm403, %v2698, %v2699
        %v2701 = vrot.slane %v2694, 1
        %v2702 = vsel %vm403, %v2699, %v2701
        %v2706 = vadd.f32 %v2687, %v2700
        %v2707 = vadd.f32 %v2688, %v2702
        %v2708 = vadd.f32 %v2689, %v2701
        %s2709 = sld [smem:[#allocation2 + $0xa7]]
        %v2710 = vstv %s2709
        %v2711 = vmul.f32 %v2710, %v310
        %v2712 = vmul.f32 %v2710, %v311
        %v2713 = vmul.f32 %v2710, %v312
        %v2717 = vrot.slane %v2711, 1
        %v2718 = vrot.slane %v2712, 1
        %v2719 = vsel %vm403, %v2717, %v2718
        %v2720 = vrot.slane %v2713, 1
        %v2721 = vsel %vm403, %v2718, %v2720
        %v2725 = vadd.f32 %v2706, %v2719
        %v2726 = vadd.f32 %v2707, %v2721
        %v2727 = vadd.f32 %v2708, %v2720
        %s2728 = sld [smem:[#allocation2 + $0xb4]]
        %v2729 = vstv %s2728
        %v2730 = vmul.f32 %v2729, %v301
        %v2731 = vmul.f32 %v2729, %v302
        %v2732 = vmul.f32 %v2729, %v303
        %v2736 = vrot.slane %v2730, 1
        %v2737 = vrot.slane %v2731, 1
        %v2738 = vsel %vm403, %v2736, %v2737
        %v2739 = vrot.slane %v2732, 1
        %v2740 = vsel %vm403, %v2737, %v2739
        %2741 = vrot.lane.b32.xlu0 %v2738, 127
        %v2742 = vpop.permute.xlu0 %2741
        %2743 = vrot.lane.b32.xlu0 %v2740, 127
        %v2744 = vpop.permute.xlu0 %2743
        %2745 = vrot.lane.b32.xlu0 %v2739, 127
        %v2746 = vpop.permute.xlu0 %2745
        %v2750 = vadd.f32 %v2725, %v2742
        %v2751 = vadd.f32 %v2726, %v2744
        %v2752 = vadd.f32 %v2727, %v2746
        %s2753 = sld [smem:[#allocation2 + $0xb5]]
        %v2754 = vstv %s2753
        %v2755 = vmul.f32 %v2754, %v304
        %v2756 = vmul.f32 %v2754, %v305
        %v2757 = vmul.f32 %v2754, %v306
        %v2761 = vrot.slane %v2755, 1
        %v2762 = vrot.slane %v2756, 1
        %v2763 = vsel %vm403, %v2761, %v2762
        %v2764 = vrot.slane %v2757, 1
        %v2765 = vsel %vm403, %v2762, %v2764
        %2766 = vrot.lane.b32.xlu0 %v2763, 127
        %v2767 = vpop.permute.xlu0 %2766
        %2768 = vrot.lane.b32.xlu0 %v2765, 127
        %v2769 = vpop.permute.xlu0 %2768
        %2770 = vrot.lane.b32.xlu0 %v2764, 127
        %v2771 = vpop.permute.xlu0 %2770
        %v2775 = vadd.f32 %v2750, %v2767
        %v2776 = vadd.f32 %v2751, %v2769
        %v2777 = vadd.f32 %v2752, %v2771
        %s2778 = sld [smem:[#allocation2 + $0xb6]]
        %v2779 = vstv %s2778
        %v2780 = vmul.f32 %v2779, %v307
        %v2781 = vmul.f32 %v2779, %v308
        %v2782 = vmul.f32 %v2779, %v309
        %v2786 = vrot.slane %v2780, 1
        %v2787 = vrot.slane %v2781, 1
        %v2788 = vsel %vm403, %v2786, %v2787
        %v2789 = vrot.slane %v2782, 1
        %v2790 = vsel %vm403, %v2787, %v2789
        %2791 = vrot.lane.b32.xlu0 %v2788, 127
        %v2792 = vpop.permute.xlu0 %2791
        %2793 = vrot.lane.b32.xlu0 %v2790, 127
        %v2794 = vpop.permute.xlu0 %2793
        %2795 = vrot.lane.b32.xlu0 %v2789, 127
        %v2796 = vpop.permute.xlu0 %2795
        %v2800 = vadd.f32 %v2775, %v2792
        %v2801 = vadd.f32 %v2776, %v2794
        %v2802 = vadd.f32 %v2777, %v2796
        %s2803 = sld [smem:[#allocation2 + $0xb7]]
        %v2804 = vstv %s2803
        %v2805 = vmul.f32 %v2804, %v310
        %v2806 = vmul.f32 %v2804, %v311
        %v2807 = vmul.f32 %v2804, %v312
        %v2811 = vrot.slane %v2805, 1
        %v2812 = vrot.slane %v2806, 1
        %v2813 = vsel %vm403, %v2811, %v2812
        %v2814 = vrot.slane %v2807, 1
        %v2815 = vsel %vm403, %v2812, %v2814
        %2816 = vrot.lane.b32.xlu0 %v2813, 127
        %v2817 = vpop.permute.xlu0 %2816
        %2818 = vrot.lane.b32.xlu0 %v2815, 127
        %v2819 = vpop.permute.xlu0 %2818
        %2820 = vrot.lane.b32.xlu0 %v2814, 127
        %v2821 = vpop.permute.xlu0 %2820
        %v2825 = vadd.f32 %v2800, %v2817
        %v2826 = vadd.f32 %v2801, %v2819
        %v2827 = vadd.f32 %v2802, %v2821
        %s2828 = scalar_lea.vmem %s197, 144
        %2829 = vst.msk [vmem:[%s2828 - $0x1] sm:$0xfe] %vm2533, %v2825
        %2830 = vst.msk [vmem:[%s2828 + $0x7] sm:$0xff] %vm548, %v2826
        %2831 = vst.msk [vmem:[%s2828 + $0xf] sm:$0x1] %vm2536, %v2827
        %s2832 = sld [smem:[#allocation4 + $0x2]]
        %v2833 = vstv %s2832
        %s2834 = sld [smem:[#allocation2 + $0x88]]
        %v2835 = vstv %s2834
        %v2836 = vmul.f32 %v2835, %v301
        %v2837 = vmul.f32 %v2835, %v302
        %v2838 = vmul.f32 %v2835, %v303
        %v2839 = vadd.f32 %v2833, %v2836
        %v2840 = vadd.f32 %v2833, %v2837
        %v2841 = vadd.f32 %v2833, %v2838
        %s2842 = sld [smem:[#allocation2 + $0x89]]
        %v2843 = vstv %s2842
        %v2844 = vmul.f32 %v2843, %v304
        %v2845 = vmul.f32 %v2843, %v305
        %v2846 = vmul.f32 %v2843, %v306
        %v2847 = vadd.f32 %v2839, %v2844
        %v2848 = vadd.f32 %v2840, %v2845
        %v2849 = vadd.f32 %v2841, %v2846
        %s2850 = sld [smem:[#allocation2 + $0x8a]]
        %v2851 = vstv %s2850
        %v2852 = vmul.f32 %v2851, %v307
        %v2853 = vmul.f32 %v2851, %v308
        %v2854 = vmul.f32 %v2851, %v309
        %v2855 = vadd.f32 %v2847, %v2852
        %v2856 = vadd.f32 %v2848, %v2853
        %v2857 = vadd.f32 %v2849, %v2854
        %s2858 = sld [smem:[#allocation2 + $0x8b]]
        %v2859 = vstv %s2858
        %v2860 = vmul.f32 %v2859, %v310
        %v2861 = vmul.f32 %v2859, %v311
        %v2862 = vmul.f32 %v2859, %v312
        %v2863 = vadd.f32 %v2855, %v2860
        %v2864 = vadd.f32 %v2856, %v2861
        %v2865 = vadd.f32 %v2857, %v2862
        %s2866 = sld [smem:[#allocation2 + $0x98]]
        %v2867 = vstv %s2866
        %v2868 = vmul.f32 %v2867, %v301
        %v2869 = vmul.f32 %v2867, %v302
        %v2870 = vmul.f32 %v2867, %v303
        %2874 = vrot.lane.b32.xlu0 %v2868, 127
        %v2875 = vpop.permute.xlu0 %2874
        %2876 = vrot.lane.b32.xlu0 %v2869, 127
        %v2877 = vpop.permute.xlu0 %2876
        %2878 = vrot.lane.b32.xlu0 %v2870, 127
        %v2879 = vpop.permute.xlu0 %2878
        %v2883 = vadd.f32 %v2863, %v2875
        %v2884 = vadd.f32 %v2864, %v2877
        %v2885 = vadd.f32 %v2865, %v2879
        %s2886 = sld [smem:[#allocation2 + $0x99]]
        %v2887 = vstv %s2886
        %v2888 = vmul.f32 %v2887, %v304
        %v2889 = vmul.f32 %v2887, %v305
        %v2890 = vmul.f32 %v2887, %v306
        %2894 = vrot.lane.b32.xlu0 %v2888, 127
        %v2895 = vpop.permute.xlu0 %2894
        %2896 = vrot.lane.b32.xlu0 %v2889, 127
        %v2897 = vpop.permute.xlu0 %2896
        %2898 = vrot.lane.b32.xlu0 %v2890, 127
        %v2899 = vpop.permute.xlu0 %2898
        %v2903 = vadd.f32 %v2883, %v2895
        %v2904 = vadd.f32 %v2884, %v2897
        %v2905 = vadd.f32 %v2885, %v2899
        %s2906 = sld [smem:[#allocation2 + $0x9a]]
        %v2907 = vstv %s2906
        %v2908 = vmul.f32 %v2907, %v307
        %v2909 = vmul.f32 %v2907, %v308
        %v2910 = vmul.f32 %v2907, %v309
        %2914 = vrot.lane.b32.xlu0 %v2908, 127
        %v2915 = vpop.permute.xlu0 %2914
        %2916 = vrot.lane.b32.xlu0 %v2909, 127
        %v2917 = vpop.permute.xlu0 %2916
        %2918 = vrot.lane.b32.xlu0 %v2910, 127
        %v2919 = vpop.permute.xlu0 %2918
        %v2923 = vadd.f32 %v2903, %v2915
        %v2924 = vadd.f32 %v2904, %v2917
        %v2925 = vadd.f32 %v2905, %v2919
        %s2926 = sld [smem:[#allocation2 + $0x9b]]
        %v2927 = vstv %s2926
        %v2928 = vmul.f32 %v2927, %v310
        %v2929 = vmul.f32 %v2927, %v311
        %v2930 = vmul.f32 %v2927, %v312
        %2934 = vrot.lane.b32.xlu0 %v2928, 127
        %v2935 = vpop.permute.xlu0 %2934
        %2936 = vrot.lane.b32.xlu0 %v2929, 127
        %v2937 = vpop.permute.xlu0 %2936
        %2938 = vrot.lane.b32.xlu0 %v2930, 127
        %v2939 = vpop.permute.xlu0 %2938
        %v2943 = vadd.f32 %v2923, %v2935
        %v2944 = vadd.f32 %v2924, %v2937
        %v2945 = vadd.f32 %v2925, %v2939
        %s2946 = sld [smem:[#allocation2 + $0xa8]]
        %v2947 = vstv %s2946
        %v2948 = vmul.f32 %v2947, %v301
        %v2949 = vmul.f32 %v2947, %v302
        %v2950 = vmul.f32 %v2947, %v303
        %v2954 = vrot.slane %v2948, 1
        %v2955 = vrot.slane %v2949, 1
        %v2956 = vsel %vm403, %v2954, %v2955
        %v2957 = vrot.slane %v2950, 1
        %v2958 = vsel %vm403, %v2955, %v2957
        %v2962 = vadd.f32 %v2943, %v2956
        %v2963 = vadd.f32 %v2944, %v2958
        %v2964 = vadd.f32 %v2945, %v2957
        %s2965 = sld [smem:[#allocation2 + $0xa9]]
        %v2966 = vstv %s2965
        %v2967 = vmul.f32 %v2966, %v304
        %v2968 = vmul.f32 %v2966, %v305
        %v2969 = vmul.f32 %v2966, %v306
        %v2973 = vrot.slane %v2967, 1
        %v2974 = vrot.slane %v2968, 1
        %v2975 = vsel %vm403, %v2973, %v2974
        %v2976 = vrot.slane %v2969, 1
        %v2977 = vsel %vm403, %v2974, %v2976
        %v2981 = vadd.f32 %v2962, %v2975
        %v2982 = vadd.f32 %v2963, %v2977
        %v2983 = vadd.f32 %v2964, %v2976
        %s2984 = sld [smem:[#allocation2 + $0xaa]]
        %v2985 = vstv %s2984
        %v2986 = vmul.f32 %v2985, %v307
        %v2987 = vmul.f32 %v2985, %v308
        %v2988 = vmul.f32 %v2985, %v309
        %v2992 = vrot.slane %v2986, 1
        %v2993 = vrot.slane %v2987, 1
        %v2994 = vsel %vm403, %v2992, %v2993
        %v2995 = vrot.slane %v2988, 1
        %v2996 = vsel %vm403, %v2993, %v2995
        %v3000 = vadd.f32 %v2981, %v2994
        %v3001 = vadd.f32 %v2982, %v2996
        %v3002 = vadd.f32 %v2983, %v2995
        %s3003 = sld [smem:[#allocation2 + $0xab]]
        %v3004 = vstv %s3003
        %v3005 = vmul.f32 %v3004, %v310
        %v3006 = vmul.f32 %v3004, %v311
        %v3007 = vmul.f32 %v3004, %v312
        %v3011 = vrot.slane %v3005, 1
        %v3012 = vrot.slane %v3006, 1
        %v3013 = vsel %vm403, %v3011, %v3012
        %v3014 = vrot.slane %v3007, 1
        %v3015 = vsel %vm403, %v3012, %v3014
        %v3019 = vadd.f32 %v3000, %v3013
        %v3020 = vadd.f32 %v3001, %v3015
        %v3021 = vadd.f32 %v3002, %v3014
        %s3022 = sld [smem:[#allocation2 + $0xb8]]
        %v3023 = vstv %s3022
        %v3024 = vmul.f32 %v3023, %v301
        %v3025 = vmul.f32 %v3023, %v302
        %v3026 = vmul.f32 %v3023, %v303
        %v3030 = vrot.slane %v3024, 1
        %v3031 = vrot.slane %v3025, 1
        %v3032 = vsel %vm403, %v3030, %v3031
        %v3033 = vrot.slane %v3026, 1
        %v3034 = vsel %vm403, %v3031, %v3033
        %3035 = vrot.lane.b32.xlu0 %v3032, 127
        %v3036 = vpop.permute.xlu0 %3035
        %3037 = vrot.lane.b32.xlu0 %v3034, 127
        %v3038 = vpop.permute.xlu0 %3037
        %3039 = vrot.lane.b32.xlu0 %v3033, 127
        %v3040 = vpop.permute.xlu0 %3039
        %v3044 = vadd.f32 %v3019, %v3036
        %v3045 = vadd.f32 %v3020, %v3038
        %v3046 = vadd.f32 %v3021, %v3040
        %s3047 = sld [smem:[#allocation2 + $0xb9]]
        %v3048 = vstv %s3047
        %v3049 = vmul.f32 %v3048, %v304
        %v3050 = vmul.f32 %v3048, %v305
        %v3051 = vmul.f32 %v3048, %v306
        %v3055 = vrot.slane %v3049, 1
        %v3056 = vrot.slane %v3050, 1
        %v3057 = vsel %vm403, %v3055, %v3056
        %v3058 = vrot.slane %v3051, 1
        %v3059 = vsel %vm403, %v3056, %v3058
        %3060 = vrot.lane.b32.xlu0 %v3057, 127
        %v3061 = vpop.permute.xlu0 %3060
        %3062 = vrot.lane.b32.xlu0 %v3059, 127
        %v3063 = vpop.permute.xlu0 %3062
        %3064 = vrot.lane.b32.xlu0 %v3058, 127
        %v3065 = vpop.permute.xlu0 %3064
        %v3069 = vadd.f32 %v3044, %v3061
        %v3070 = vadd.f32 %v3045, %v3063
        %v3071 = vadd.f32 %v3046, %v3065
        %s3072 = sld [smem:[#allocation2 + $0xba]]
        %v3073 = vstv %s3072
        %v3074 = vmul.f32 %v3073, %v307
        %v3075 = vmul.f32 %v3073, %v308
        %v3076 = vmul.f32 %v3073, %v309
        %v3080 = vrot.slane %v3074, 1
        %v3081 = vrot.slane %v3075, 1
        %v3082 = vsel %vm403, %v3080, %v3081
        %v3083 = vrot.slane %v3076, 1
        %v3084 = vsel %vm403, %v3081, %v3083
        %3085 = vrot.lane.b32.xlu0 %v3082, 127
        %v3086 = vpop.permute.xlu0 %3085
        %3087 = vrot.lane.b32.xlu0 %v3084, 127
        %v3088 = vpop.permute.xlu0 %3087
        %3089 = vrot.lane.b32.xlu0 %v3083, 127
        %v3090 = vpop.permute.xlu0 %3089
        %v3094 = vadd.f32 %v3069, %v3086
        %v3095 = vadd.f32 %v3070, %v3088
        %v3096 = vadd.f32 %v3071, %v3090
        %s3097 = sld [smem:[#allocation2 + $0xbb]]
        %v3098 = vstv %s3097
        %v3099 = vmul.f32 %v3098, %v310
        %v3100 = vmul.f32 %v3098, %v311
        %v3101 = vmul.f32 %v3098, %v312
        %v3105 = vrot.slane %v3099, 1
        %v3106 = vrot.slane %v3100, 1
        %v3107 = vsel %vm403, %v3105, %v3106
        %v3108 = vrot.slane %v3101, 1
        %v3109 = vsel %vm403, %v3106, %v3108
        %3110 = vrot.lane.b32.xlu0 %v3107, 127
        %v3111 = vpop.permute.xlu0 %3110
        %3112 = vrot.lane.b32.xlu0 %v3109, 127
        %v3113 = vpop.permute.xlu0 %3112
        %3114 = vrot.lane.b32.xlu0 %v3108, 127
        %v3115 = vpop.permute.xlu0 %3114
        %v3119 = vadd.f32 %v3094, %v3111
        %v3120 = vadd.f32 %v3095, %v3113
        %v3121 = vadd.f32 %v3096, %v3115
        %s3122 = scalar_lea.vmem %s197, 160
        %3123 = vst.msk [vmem:[%s3122 - $0x1] sm:$0xfe] %vm2533, %v3119
        %3124 = vst.msk [vmem:[%s3122 + $0x7] sm:$0xff] %vm548, %v3120
        %3125 = vst.msk [vmem:[%s3122 + $0xf] sm:$0x1] %vm2536, %v3121
        %s3126 = sld [smem:[#allocation4 + $0x3]]
        %v3127 = vstv %s3126
        %s3128 = sld [smem:[#allocation2 + $0x8c]]
        %v3129 = vstv %s3128
        %v3130 = vmul.f32 %v3129, %v301
        %v3131 = vmul.f32 %v3129, %v302
        %v3132 = vmul.f32 %v3129, %v303
        %v3133 = vadd.f32 %v3127, %v3130
        %v3134 = vadd.f32 %v3127, %v3131
        %v3135 = vadd.f32 %v3127, %v3132
        %s3136 = sld [smem:[#allocation2 + $0x8d]]
        %v3137 = vstv %s3136
        %v3138 = vmul.f32 %v3137, %v304
        %v3139 = vmul.f32 %v3137, %v305
        %v3140 = vmul.f32 %v3137, %v306
        %v3141 = vadd.f32 %v3133, %v3138
        %v3142 = vadd.f32 %v3134, %v3139
        %v3143 = vadd.f32 %v3135, %v3140
        %s3144 = sld [smem:[#allocation2 + $0x8e]]
        %v3145 = vstv %s3144
        %v3146 = vmul.f32 %v3145, %v307
        %v3147 = vmul.f32 %v3145, %v308
        %v3148 = vmul.f32 %v3145, %v309
        %v3149 = vadd.f32 %v3141, %v3146
        %v3150 = vadd.f32 %v3142, %v3147
        %v3151 = vadd.f32 %v3143, %v3148
        %s3152 = sld [smem:[#allocation2 + $0x8f]]
        %v3153 = vstv %s3152
        %v3154 = vmul.f32 %v3153, %v310
        %v3155 = vmul.f32 %v3153, %v311
        %v3156 = vmul.f32 %v3153, %v312
        %v3157 = vadd.f32 %v3149, %v3154
        %v3158 = vadd.f32 %v3150, %v3155
        %v3159 = vadd.f32 %v3151, %v3156
        %s3160 = sld [smem:[#allocation2 + $0x9c]]
        %v3161 = vstv %s3160
        %v3162 = vmul.f32 %v3161, %v301
        %v3163 = vmul.f32 %v3161, %v302
        %v3164 = vmul.f32 %v3161, %v303
        %3168 = vrot.lane.b32.xlu0 %v3162, 127
        %v3169 = vpop.permute.xlu0 %3168
        %3170 = vrot.lane.b32.xlu0 %v3163, 127
        %v3171 = vpop.permute.xlu0 %3170
        %3172 = vrot.lane.b32.xlu0 %v3164, 127
        %v3173 = vpop.permute.xlu0 %3172
        %v3177 = vadd.f32 %v3157, %v3169
        %v3178 = vadd.f32 %v3158, %v3171
        %v3179 = vadd.f32 %v3159, %v3173
        %s3180 = sld [smem:[#allocation2 + $0x9d]]
        %v3181 = vstv %s3180
        %v3182 = vmul.f32 %v3181, %v304
        %v3183 = vmul.f32 %v3181, %v305
        %v3184 = vmul.f32 %v3181, %v306
        %3188 = vrot.lane.b32.xlu0 %v3182, 127
        %v3189 = vpop.permute.xlu0 %3188
        %3190 = vrot.lane.b32.xlu0 %v3183, 127
        %v3191 = vpop.permute.xlu0 %3190
        %3192 = vrot.lane.b32.xlu0 %v3184, 127
        %v3193 = vpop.permute.xlu0 %3192
        %v3197 = vadd.f32 %v3177, %v3189
        %v3198 = vadd.f32 %v3178, %v3191
        %v3199 = vadd.f32 %v3179, %v3193
        %s3200 = sld [smem:[#allocation2 + $0x9e]]
        %v3201 = vstv %s3200
        %v3202 = vmul.f32 %v3201, %v307
        %v3203 = vmul.f32 %v3201, %v308
        %v3204 = vmul.f32 %v3201, %v309
        %3208 = vrot.lane.b32.xlu0 %v3202, 127
        %v3209 = vpop.permute.xlu0 %3208
        %3210 = vrot.lane.b32.xlu0 %v3203, 127
        %v3211 = vpop.permute.xlu0 %3210
        %3212 = vrot.lane.b32.xlu0 %v3204, 127
        %v3213 = vpop.permute.xlu0 %3212
        %v3217 = vadd.f32 %v3197, %v3209
        %v3218 = vadd.f32 %v3198, %v3211
        %v3219 = vadd.f32 %v3199, %v3213
        %s3220 = sld [smem:[#allocation2 + $0x9f]]
        %v3221 = vstv %s3220
        %v3222 = vmul.f32 %v3221, %v310
        %v3223 = vmul.f32 %v3221, %v311
        %v3224 = vmul.f32 %v3221, %v312
        %3228 = vrot.lane.b32.xlu0 %v3222, 127
        %v3229 = vpop.permute.xlu0 %3228
        %3230 = vrot.lane.b32.xlu0 %v3223, 127
        %v3231 = vpop.permute.xlu0 %3230
        %3232 = vrot.lane.b32.xlu0 %v3224, 127
        %v3233 = vpop.permute.xlu0 %3232
        %v3237 = vadd.f32 %v3217, %v3229
        %v3238 = vadd.f32 %v3218, %v3231
        %v3239 = vadd.f32 %v3219, %v3233
        %s3240 = sld [smem:[#allocation2 + $0xac]]
        %v3241 = vstv %s3240
        %v3242 = vmul.f32 %v3241, %v301
        %v3243 = vmul.f32 %v3241, %v302
        %v3244 = vmul.f32 %v3241, %v303
        %v3248 = vrot.slane %v3242, 1
        %v3249 = vrot.slane %v3243, 1
        %v3250 = vsel %vm403, %v3248, %v3249
        %v3251 = vrot.slane %v3244, 1
        %v3252 = vsel %vm403, %v3249, %v3251
        %v3256 = vadd.f32 %v3237, %v3250
        %v3257 = vadd.f32 %v3238, %v3252
        %v3258 = vadd.f32 %v3239, %v3251
        %s3259 = sld [smem:[#allocation2 + $0xad]]
        %v3260 = vstv %s3259
        %v3261 = vmul.f32 %v3260, %v304
        %v3262 = vmul.f32 %v3260, %v305
        %v3263 = vmul.f32 %v3260, %v306
        %v3267 = vrot.slane %v3261, 1
        %v3268 = vrot.slane %v3262, 1
        %v3269 = vsel %vm403, %v3267, %v3268
        %v3270 = vrot.slane %v3263, 1
        %v3271 = vsel %vm403, %v3268, %v3270
        %v3275 = vadd.f32 %v3256, %v3269
        %v3276 = vadd.f32 %v3257, %v3271
        %v3277 = vadd.f32 %v3258, %v3270
        %s3278 = sld [smem:[#allocation2 + $0xae]]
        %v3279 = vstv %s3278
        %v3280 = vmul.f32 %v3279, %v307
        %v3281 = vmul.f32 %v3279, %v308
        %v3282 = vmul.f32 %v3279, %v309
        %v3286 = vrot.slane %v3280, 1
        %v3287 = vrot.slane %v3281, 1
        %v3288 = vsel %vm403, %v3286, %v3287
        %v3289 = vrot.slane %v3282, 1
        %v3290 = vsel %vm403, %v3287, %v3289
        %v3294 = vadd.f32 %v3275, %v3288
        %v3295 = vadd.f32 %v3276, %v3290
        %v3296 = vadd.f32 %v3277, %v3289
        %s3297 = sld [smem:[#allocation2 + $0xaf]]
        %v3298 = vstv %s3297
        %v3299 = vmul.f32 %v3298, %v310
        %v3300 = vmul.f32 %v3298, %v311
        %v3301 = vmul.f32 %v3298, %v312
        %v3305 = vrot.slane %v3299, 1
        %v3306 = vrot.slane %v3300, 1
        %v3307 = vsel %vm403, %v3305, %v3306
        %v3308 = vrot.slane %v3301, 1
        %v3309 = vsel %vm403, %v3306, %v3308
        %v3313 = vadd.f32 %v3294, %v3307
        %v3314 = vadd.f32 %v3295, %v3309
        %v3315 = vadd.f32 %v3296, %v3308
        %s3316 = sld [smem:[#allocation2 + $0xbc]]
        %v3317 = vstv %s3316
        %v3318 = vmul.f32 %v3317, %v301
        %v3319 = vmul.f32 %v3317, %v302
        %v3320 = vmul.f32 %v3317, %v303
        %v3324 = vrot.slane %v3318, 1
        %v3325 = vrot.slane %v3319, 1
        %v3326 = vsel %vm403, %v3324, %v3325
        %v3327 = vrot.slane %v3320, 1
        %v3328 = vsel %vm403, %v3325, %v3327
        %3329 = vrot.lane.b32.xlu0 %v3326, 127
        %v3330 = vpop.permute.xlu0 %3329
        %3331 = vrot.lane.b32.xlu0 %v3328, 127
        %v3332 = vpop.permute.xlu0 %3331
        %3333 = vrot.lane.b32.xlu0 %v3327, 127
        %v3334 = vpop.permute.xlu0 %3333
        %v3338 = vadd.f32 %v3313, %v3330
        %v3339 = vadd.f32 %v3314, %v3332
        %v3340 = vadd.f32 %v3315, %v3334
        %s3341 = sld [smem:[#allocation2 + $0xbd]]
        %v3342 = vstv %s3341
        %v3343 = vmul.f32 %v3342, %v304
        %v3344 = vmul.f32 %v3342, %v305
        %v3345 = vmul.f32 %v3342, %v306
        %v3349 = vrot.slane %v3343, 1
        %v3350 = vrot.slane %v3344, 1
        %v3351 = vsel %vm403, %v3349, %v3350
        %v3352 = vrot.slane %v3345, 1
        %v3353 = vsel %vm403, %v3350, %v3352
        %3354 = vrot.lane.b32.xlu0 %v3351, 127
        %v3355 = vpop.permute.xlu0 %3354
        %3356 = vrot.lane.b32.xlu0 %v3353, 127
        %v3357 = vpop.permute.xlu0 %3356
        %3358 = vrot.lane.b32.xlu0 %v3352, 127
        %v3359 = vpop.permute.xlu0 %3358
        %v3363 = vadd.f32 %v3338, %v3355
        %v3364 = vadd.f32 %v3339, %v3357
        %v3365 = vadd.f32 %v3340, %v3359
        %s3366 = sld [smem:[#allocation2 + $0xbe]]
        %v3367 = vstv %s3366
        %v3368 = vmul.f32 %v3367, %v307
        %v3369 = vmul.f32 %v3367, %v308
        %v3370 = vmul.f32 %v3367, %v309
        %v3374 = vrot.slane %v3368, 1
        %v3375 = vrot.slane %v3369, 1
        %v3376 = vsel %vm403, %v3374, %v3375
        %v3377 = vrot.slane %v3370, 1
        %v3378 = vsel %vm403, %v3375, %v3377
        %3379 = vrot.lane.b32.xlu0 %v3376, 127
        %v3380 = vpop.permute.xlu0 %3379
        %3381 = vrot.lane.b32.xlu0 %v3378, 127
        %v3382 = vpop.permute.xlu0 %3381
        %3383 = vrot.lane.b32.xlu0 %v3377, 127
        %v3384 = vpop.permute.xlu0 %3383
        %v3388 = vadd.f32 %v3363, %v3380
        %v3389 = vadd.f32 %v3364, %v3382
        %v3390 = vadd.f32 %v3365, %v3384
        %s3391 = sld [smem:[#allocation2 + $0xbf]]
        %v3392 = vstv %s3391
        %v3393 = vmul.f32 %v3392, %v310
        %v3394 = vmul.f32 %v3392, %v311
        %v3395 = vmul.f32 %v3392, %v312
        %v3399 = vrot.slane %v3393, 1
        %v3400 = vrot.slane %v3394, 1
        %v3401 = vsel %vm403, %v3399, %v3400
        %v3402 = vrot.slane %v3395, 1
        %v3403 = vsel %vm403, %v3400, %v3402
        %3404 = vrot.lane.b32.xlu0 %v3401, 127
        %v3405 = vpop.permute.xlu0 %3404
        %3406 = vrot.lane.b32.xlu0 %v3403, 127
        %v3407 = vpop.permute.xlu0 %3406
        %3408 = vrot.lane.b32.xlu0 %v3402, 127
        %v3409 = vpop.permute.xlu0 %3408
        %v3413 = vadd.f32 %v3388, %v3405
        %v3414 = vadd.f32 %v3389, %v3407
        %v3415 = vadd.f32 %v3390, %v3409
        %s3416 = scalar_lea.vmem %s197, 176
        %3417 = vst.msk [vmem:[%s3416 - $0x1] sm:$0xfe] %vm2533, %v3413
        %3418 = vst.msk [vmem:[%s3416 + $0x7] sm:$0xff] %vm548, %v3414
        %3419 = vst.msk [vmem:[%s3416 + $0xf] sm:$0x1] %vm2536, %v3415
        %s3420 = sld [smem:[#allocation4]]
        %v3421 = vstv %s3420
        %s3422 = sld [smem:[#allocation2 + $0xc0]]
        %v3423 = vstv %s3422
        %v3424 = vmul.f32 %v3423, %v301
        %v3425 = vmul.f32 %v3423, %v302
        %v3426 = vmul.f32 %v3423, %v303
        %v3427 = vadd.f32 %v3421, %v3424
        %v3428 = vadd.f32 %v3421, %v3425
        %v3429 = vadd.f32 %v3421, %v3426
        %s3430 = sld [smem:[#allocation2 + $0xc1]]
        %v3431 = vstv %s3430
        %v3432 = vmul.f32 %v3431, %v304
        %v3433 = vmul.f32 %v3431, %v305
        %v3434 = vmul.f32 %v3431, %v306
        %v3435 = vadd.f32 %v3427, %v3432
        %v3436 = vadd.f32 %v3428, %v3433
        %v3437 = vadd.f32 %v3429, %v3434
        %s3438 = sld [smem:[#allocation2 + $0xc2]]
        %v3439 = vstv %s3438
        %v3440 = vmul.f32 %v3439, %v307
        %v3441 = vmul.f32 %v3439, %v308
        %v3442 = vmul.f32 %v3439, %v309
        %v3443 = vadd.f32 %v3435, %v3440
        %v3444 = vadd.f32 %v3436, %v3441
        %v3445 = vadd.f32 %v3437, %v3442
        %s3446 = sld [smem:[#allocation2 + $0xc3]]
        %v3447 = vstv %s3446
        %v3448 = vmul.f32 %v3447, %v310
        %v3449 = vmul.f32 %v3447, %v311
        %v3450 = vmul.f32 %v3447, %v312
        %v3451 = vadd.f32 %v3443, %v3448
        %v3452 = vadd.f32 %v3444, %v3449
        %v3453 = vadd.f32 %v3445, %v3450
        %s3454 = sld [smem:[#allocation2 + $0xd0]]
        %v3455 = vstv %s3454
        %v3456 = vmul.f32 %v3455, %v301
        %v3457 = vmul.f32 %v3455, %v302
        %v3458 = vmul.f32 %v3455, %v303
        %3462 = vrot.lane.b32.xlu0 %v3456, 127
        %v3463 = vpop.permute.xlu0 %3462
        %3464 = vrot.lane.b32.xlu0 %v3457, 127
        %v3465 = vpop.permute.xlu0 %3464
        %3466 = vrot.lane.b32.xlu0 %v3458, 127
        %v3467 = vpop.permute.xlu0 %3466
        %v3471 = vadd.f32 %v3451, %v3463
        %v3472 = vadd.f32 %v3452, %v3465
        %v3473 = vadd.f32 %v3453, %v3467
        %s3474 = sld [smem:[#allocation2 + $0xd1]]
        %v3475 = vstv %s3474
        %v3476 = vmul.f32 %v3475, %v304
        %v3477 = vmul.f32 %v3475, %v305
        %v3478 = vmul.f32 %v3475, %v306
        %3482 = vrot.lane.b32.xlu0 %v3476, 127
        %v3483 = vpop.permute.xlu0 %3482
        %3484 = vrot.lane.b32.xlu0 %v3477, 127
        %v3485 = vpop.permute.xlu0 %3484
        %3486 = vrot.lane.b32.xlu0 %v3478, 127
        %v3487 = vpop.permute.xlu0 %3486
        %v3491 = vadd.f32 %v3471, %v3483
        %v3492 = vadd.f32 %v3472, %v3485
        %v3493 = vadd.f32 %v3473, %v3487
        %s3494 = sld [smem:[#allocation2 + $0xd2]]
        %v3495 = vstv %s3494
        %v3496 = vmul.f32 %v3495, %v307
        %v3497 = vmul.f32 %v3495, %v308
        %v3498 = vmul.f32 %v3495, %v309
        %3502 = vrot.lane.b32.xlu0 %v3496, 127
        %v3503 = vpop.permute.xlu0 %3502
        %3504 = vrot.lane.b32.xlu0 %v3497, 127
        %v3505 = vpop.permute.xlu0 %3504
        %3506 = vrot.lane.b32.xlu0 %v3498, 127
        %v3507 = vpop.permute.xlu0 %3506
        %v3511 = vadd.f32 %v3491, %v3503
        %v3512 = vadd.f32 %v3492, %v3505
        %v3513 = vadd.f32 %v3493, %v3507
        %s3514 = sld [smem:[#allocation2 + $0xd3]]
        %v3515 = vstv %s3514
        %v3516 = vmul.f32 %v3515, %v310
        %v3517 = vmul.f32 %v3515, %v311
        %v3518 = vmul.f32 %v3515, %v312
        %3522 = vrot.lane.b32.xlu0 %v3516, 127
        %v3523 = vpop.permute.xlu0 %3522
        %3524 = vrot.lane.b32.xlu0 %v3517, 127
        %v3525 = vpop.permute.xlu0 %3524
        %3526 = vrot.lane.b32.xlu0 %v3518, 127
        %v3527 = vpop.permute.xlu0 %3526
        %v3531 = vadd.f32 %v3511, %v3523
        %v3532 = vadd.f32 %v3512, %v3525
        %v3533 = vadd.f32 %v3513, %v3527
        %s3534 = sld [smem:[#allocation2 + $0xe0]]
        %v3535 = vstv %s3534
        %v3536 = vmul.f32 %v3535, %v301
        %v3537 = vmul.f32 %v3535, %v302
        %v3538 = vmul.f32 %v3535, %v303
        %v3542 = vrot.slane %v3536, 1
        %v3543 = vrot.slane %v3537, 1
        %v3544 = vsel %vm403, %v3542, %v3543
        %v3545 = vrot.slane %v3538, 1
        %v3546 = vsel %vm403, %v3543, %v3545
        %v3550 = vadd.f32 %v3531, %v3544
        %v3551 = vadd.f32 %v3532, %v3546
        %v3552 = vadd.f32 %v3533, %v3545
        %s3553 = sld [smem:[#allocation2 + $0xe1]]
        %v3554 = vstv %s3553
        %v3555 = vmul.f32 %v3554, %v304
        %v3556 = vmul.f32 %v3554, %v305
        %v3557 = vmul.f32 %v3554, %v306
        %v3561 = vrot.slane %v3555, 1
        %v3562 = vrot.slane %v3556, 1
        %v3563 = vsel %vm403, %v3561, %v3562
        %v3564 = vrot.slane %v3557, 1
        %v3565 = vsel %vm403, %v3562, %v3564
        %v3569 = vadd.f32 %v3550, %v3563
        %v3570 = vadd.f32 %v3551, %v3565
        %v3571 = vadd.f32 %v3552, %v3564
        %s3572 = sld [smem:[#allocation2 + $0xe2]]
        %v3573 = vstv %s3572
        %v3574 = vmul.f32 %v3573, %v307
        %v3575 = vmul.f32 %v3573, %v308
        %v3576 = vmul.f32 %v3573, %v309
        %v3580 = vrot.slane %v3574, 1
        %v3581 = vrot.slane %v3575, 1
        %v3582 = vsel %vm403, %v3580, %v3581
        %v3583 = vrot.slane %v3576, 1
        %v3584 = vsel %vm403, %v3581, %v3583
        %v3588 = vadd.f32 %v3569, %v3582
        %v3589 = vadd.f32 %v3570, %v3584
        %v3590 = vadd.f32 %v3571, %v3583
        %s3591 = sld [smem:[#allocation2 + $0xe3]]
        %v3592 = vstv %s3591
        %v3593 = vmul.f32 %v3592, %v310
        %v3594 = vmul.f32 %v3592, %v311
        %v3595 = vmul.f32 %v3592, %v312
        %v3599 = vrot.slane %v3593, 1
        %v3600 = vrot.slane %v3594, 1
        %v3601 = vsel %vm403, %v3599, %v3600
        %v3602 = vrot.slane %v3595, 1
        %v3603 = vsel %vm403, %v3600, %v3602
        %v3607 = vadd.f32 %v3588, %v3601
        %v3608 = vadd.f32 %v3589, %v3603
        %v3609 = vadd.f32 %v3590, %v3602
        %s3610 = sld [smem:[#allocation2 + $0xf0]]
        %v3611 = vstv %s3610
        %v3612 = vmul.f32 %v3611, %v301
        %v3613 = vmul.f32 %v3611, %v302
        %v3614 = vmul.f32 %v3611, %v303
        %v3618 = vrot.slane %v3612, 1
        %v3619 = vrot.slane %v3613, 1
        %v3620 = vsel %vm403, %v3618, %v3619
        %v3621 = vrot.slane %v3614, 1
        %v3622 = vsel %vm403, %v3619, %v3621
        %3623 = vrot.lane.b32.xlu0 %v3620, 127
        %v3624 = vpop.permute.xlu0 %3623
        %3625 = vrot.lane.b32.xlu0 %v3622, 127
        %v3626 = vpop.permute.xlu0 %3625
        %3627 = vrot.lane.b32.xlu0 %v3621, 127
        %v3628 = vpop.permute.xlu0 %3627
        %v3632 = vadd.f32 %v3607, %v3624
        %v3633 = vadd.f32 %v3608, %v3626
        %v3634 = vadd.f32 %v3609, %v3628
        %s3635 = sld [smem:[#allocation2 + $0xf1]]
        %v3636 = vstv %s3635
        %v3637 = vmul.f32 %v3636, %v304
        %v3638 = vmul.f32 %v3636, %v305
        %v3639 = vmul.f32 %v3636, %v306
        %v3643 = vrot.slane %v3637, 1
        %v3644 = vrot.slane %v3638, 1
        %v3645 = vsel %vm403, %v3643, %v3644
        %v3646 = vrot.slane %v3639, 1
        %v3647 = vsel %vm403, %v3644, %v3646
        %3648 = vrot.lane.b32.xlu0 %v3645, 127
        %v3649 = vpop.permute.xlu0 %3648
        %3650 = vrot.lane.b32.xlu0 %v3647, 127
        %v3651 = vpop.permute.xlu0 %3650
        %3652 = vrot.lane.b32.xlu0 %v3646, 127
        %v3653 = vpop.permute.xlu0 %3652
        %v3657 = vadd.f32 %v3632, %v3649
        %v3658 = vadd.f32 %v3633, %v3651
        %v3659 = vadd.f32 %v3634, %v3653
        %s3660 = sld [smem:[#allocation2 + $0xf2]]
        %v3661 = vstv %s3660
        %v3662 = vmul.f32 %v3661, %v307
        %v3663 = vmul.f32 %v3661, %v308
        %v3664 = vmul.f32 %v3661, %v309
        %v3668 = vrot.slane %v3662, 1
        %v3669 = vrot.slane %v3663, 1
        %v3670 = vsel %vm403, %v3668, %v3669
        %v3671 = vrot.slane %v3664, 1
        %v3672 = vsel %vm403, %v3669, %v3671
        %3673 = vrot.lane.b32.xlu0 %v3670, 127
        %v3674 = vpop.permute.xlu0 %3673
        %3675 = vrot.lane.b32.xlu0 %v3672, 127
        %v3676 = vpop.permute.xlu0 %3675
        %3677 = vrot.lane.b32.xlu0 %v3671, 127
        %v3678 = vpop.permute.xlu0 %3677
        %v3682 = vadd.f32 %v3657, %v3674
        %v3683 = vadd.f32 %v3658, %v3676
        %v3684 = vadd.f32 %v3659, %v3678
        %s3685 = sld [smem:[#allocation2 + $0xf3]]
        %v3686 = vstv %s3685
        %v3687 = vmul.f32 %v3686, %v310
        %v3688 = vmul.f32 %v3686, %v311
        %v3689 = vmul.f32 %v3686, %v312
        %v3693 = vrot.slane %v3687, 1
        %v3694 = vrot.slane %v3688, 1
        %v3695 = vsel %vm403, %v3693, %v3694
        %v3696 = vrot.slane %v3689, 1
        %v3697 = vsel %vm403, %v3694, %v3696
        %3698 = vrot.lane.b32.xlu0 %v3695, 127
        %v3699 = vpop.permute.xlu0 %3698
        %3700 = vrot.lane.b32.xlu0 %v3697, 127
        %v3701 = vpop.permute.xlu0 %3700
        %3702 = vrot.lane.b32.xlu0 %v3696, 127
        %v3703 = vpop.permute.xlu0 %3702
        %v3707 = vadd.f32 %v3682, %v3699
        %v3708 = vadd.f32 %v3683, %v3701
        %v3709 = vadd.f32 %v3684, %v3703
        %3713 = vrot.lane.b32.xlu0 %v3707, 127
        %v3714 = vpop.permute.xlu0 %3713
        %3715 = vrot.lane.b32.xlu0 %v3708, 127
        %v3716 = vpop.permute.xlu0 %3715
        %3717 = vrot.lane.b32.xlu0 %v3709, 127
        %v3718 = vpop.permute.xlu0 %3717
        %s3722 = scalar_lea.vmem %s197, 192
        %3723 = vst.msk [vmem:[%s3722 - $0x1] sm:$0xfe] %vm2533, %v3714
        %3724 = vst.msk [vmem:[%s3722 + $0x7] sm:$0xff] %vm548, %v3716
        %3725 = vst.msk [vmem:[%s3722 + $0xf] sm:$0x1] %vm2536, %v3718
        %s3726 = sld [smem:[#allocation4 + $0x1]]
        %v3727 = vstv %s3726
        %s3728 = sld [smem:[#allocation2 + $0xc4]]
        %v3729 = vstv %s3728
        %v3730 = vmul.f32 %v3729, %v301
        %v3731 = vmul.f32 %v3729, %v302
        %v3732 = vmul.f32 %v3729, %v303
        %v3733 = vadd.f32 %v3727, %v3730
        %v3734 = vadd.f32 %v3727, %v3731
        %v3735 = vadd.f32 %v3727, %v3732
        %s3736 = sld [smem:[#allocation2 + $0xc5]]
        %v3737 = vstv %s3736
        %v3738 = vmul.f32 %v3737, %v304
        %v3739 = vmul.f32 %v3737, %v305
        %v3740 = vmul.f32 %v3737, %v306
        %v3741 = vadd.f32 %v3733, %v3738
        %v3742 = vadd.f32 %v3734, %v3739
        %v3743 = vadd.f32 %v3735, %v3740
        %s3744 = sld [smem:[#allocation2 + $0xc6]]
        %v3745 = vstv %s3744
        %v3746 = vmul.f32 %v3745, %v307
        %v3747 = vmul.f32 %v3745, %v308
        %v3748 = vmul.f32 %v3745, %v309
        %v3749 = vadd.f32 %v3741, %v3746
        %v3750 = vadd.f32 %v3742, %v3747
        %v3751 = vadd.f32 %v3743, %v3748
        %s3752 = sld [smem:[#allocation2 + $0xc7]]
        %v3753 = vstv %s3752
        %v3754 = vmul.f32 %v3753, %v310
        %v3755 = vmul.f32 %v3753, %v311
        %v3756 = vmul.f32 %v3753, %v312
        %v3757 = vadd.f32 %v3749, %v3754
        %v3758 = vadd.f32 %v3750, %v3755
        %v3759 = vadd.f32 %v3751, %v3756
        %s3760 = sld [smem:[#allocation2 + $0xd4]]
        %v3761 = vstv %s3760
        %v3762 = vmul.f32 %v3761, %v301
        %v3763 = vmul.f32 %v3761, %v302
        %v3764 = vmul.f32 %v3761, %v303
        %3768 = vrot.lane.b32.xlu0 %v3762, 127
        %v3769 = vpop.permute.xlu0 %3768
        %3770 = vrot.lane.b32.xlu0 %v3763, 127
        %v3771 = vpop.permute.xlu0 %3770
        %3772 = vrot.lane.b32.xlu0 %v3764, 127
        %v3773 = vpop.permute.xlu0 %3772
        %v3777 = vadd.f32 %v3757, %v3769
        %v3778 = vadd.f32 %v3758, %v3771
        %v3779 = vadd.f32 %v3759, %v3773
        %s3780 = sld [smem:[#allocation2 + $0xd5]]
        %v3781 = vstv %s3780
        %v3782 = vmul.f32 %v3781, %v304
        %v3783 = vmul.f32 %v3781, %v305
        %v3784 = vmul.f32 %v3781, %v306
        %3788 = vrot.lane.b32.xlu0 %v3782, 127
        %v3789 = vpop.permute.xlu0 %3788
        %3790 = vrot.lane.b32.xlu0 %v3783, 127
        %v3791 = vpop.permute.xlu0 %3790
        %3792 = vrot.lane.b32.xlu0 %v3784, 127
        %v3793 = vpop.permute.xlu0 %3792
        %v3797 = vadd.f32 %v3777, %v3789
        %v3798 = vadd.f32 %v3778, %v3791
        %v3799 = vadd.f32 %v3779, %v3793
        %s3800 = sld [smem:[#allocation2 + $0xd6]]
        %v3801 = vstv %s3800
        %v3802 = vmul.f32 %v3801, %v307
        %v3803 = vmul.f32 %v3801, %v308
        %v3804 = vmul.f32 %v3801, %v309
        %3808 = vrot.lane.b32.xlu0 %v3802, 127
        %v3809 = vpop.permute.xlu0 %3808
        %3810 = vrot.lane.b32.xlu0 %v3803, 127
        %v3811 = vpop.permute.xlu0 %3810
        %3812 = vrot.lane.b32.xlu0 %v3804, 127
        %v3813 = vpop.permute.xlu0 %3812
        %v3817 = vadd.f32 %v3797, %v3809
        %v3818 = vadd.f32 %v3798, %v3811
        %v3819 = vadd.f32 %v3799, %v3813
        %s3820 = sld [smem:[#allocation2 + $0xd7]]
        %v3821 = vstv %s3820
        %v3822 = vmul.f32 %v3821, %v310
        %v3823 = vmul.f32 %v3821, %v311
        %v3824 = vmul.f32 %v3821, %v312
        %3828 = vrot.lane.b32.xlu0 %v3822, 127
        %v3829 = vpop.permute.xlu0 %3828
        %3830 = vrot.lane.b32.xlu0 %v3823, 127
        %v3831 = vpop.permute.xlu0 %3830
        %3832 = vrot.lane.b32.xlu0 %v3824, 127
        %v3833 = vpop.permute.xlu0 %3832
        %v3837 = vadd.f32 %v3817, %v3829
        %v3838 = vadd.f32 %v3818, %v3831
        %v3839 = vadd.f32 %v3819, %v3833
        %s3840 = sld [smem:[#allocation2 + $0xe4]]
        %v3841 = vstv %s3840
        %v3842 = vmul.f32 %v3841, %v301
        %v3843 = vmul.f32 %v3841, %v302
        %v3844 = vmul.f32 %v3841, %v303
        %v3848 = vrot.slane %v3842, 1
        %v3849 = vrot.slane %v3843, 1
        %v3850 = vsel %vm403, %v3848, %v3849
        %v3851 = vrot.slane %v3844, 1
        %v3852 = vsel %vm403, %v3849, %v3851
        %v3856 = vadd.f32 %v3837, %v3850
        %v3857 = vadd.f32 %v3838, %v3852
        %v3858 = vadd.f32 %v3839, %v3851
        %s3859 = sld [smem:[#allocation2 + $0xe5]]
        %v3860 = vstv %s3859
        %v3861 = vmul.f32 %v3860, %v304
        %v3862 = vmul.f32 %v3860, %v305
        %v3863 = vmul.f32 %v3860, %v306
        %v3867 = vrot.slane %v3861, 1
        %v3868 = vrot.slane %v3862, 1
        %v3869 = vsel %vm403, %v3867, %v3868
        %v3870 = vrot.slane %v3863, 1
        %v3871 = vsel %vm403, %v3868, %v3870
        %v3875 = vadd.f32 %v3856, %v3869
        %v3876 = vadd.f32 %v3857, %v3871
        %v3877 = vadd.f32 %v3858, %v3870
        %s3878 = sld [smem:[#allocation2 + $0xe6]]
        %v3879 = vstv %s3878
        %v3880 = vmul.f32 %v3879, %v307
        %v3881 = vmul.f32 %v3879, %v308
        %v3882 = vmul.f32 %v3879, %v309
        %v3886 = vrot.slane %v3880, 1
        %v3887 = vrot.slane %v3881, 1
        %v3888 = vsel %vm403, %v3886, %v3887
        %v3889 = vrot.slane %v3882, 1
        %v3890 = vsel %vm403, %v3887, %v3889
        %v3894 = vadd.f32 %v3875, %v3888
        %v3895 = vadd.f32 %v3876, %v3890
        %v3896 = vadd.f32 %v3877, %v3889
        %s3897 = sld [smem:[#allocation2 + $0xe7]]
        %v3898 = vstv %s3897
        %v3899 = vmul.f32 %v3898, %v310
        %v3900 = vmul.f32 %v3898, %v311
        %v3901 = vmul.f32 %v3898, %v312
        %v3905 = vrot.slane %v3899, 1
        %v3906 = vrot.slane %v3900, 1
        %v3907 = vsel %vm403, %v3905, %v3906
        %v3908 = vrot.slane %v3901, 1
        %v3909 = vsel %vm403, %v3906, %v3908
        %v3913 = vadd.f32 %v3894, %v3907
        %v3914 = vadd.f32 %v3895, %v3909
        %v3915 = vadd.f32 %v3896, %v3908
        %s3916 = sld [smem:[#allocation2 + $0xf4]]
        %v3917 = vstv %s3916
        %v3918 = vmul.f32 %v3917, %v301
        %v3919 = vmul.f32 %v3917, %v302
        %v3920 = vmul.f32 %v3917, %v303
        %v3924 = vrot.slane %v3918, 1
        %v3925 = vrot.slane %v3919, 1
        %v3926 = vsel %vm403, %v3924, %v3925
        %v3927 = vrot.slane %v3920, 1
        %v3928 = vsel %vm403, %v3925, %v3927
        %3929 = vrot.lane.b32.xlu0 %v3926, 127
        %v3930 = vpop.permute.xlu0 %3929
        %3931 = vrot.lane.b32.xlu0 %v3928, 127
        %v3932 = vpop.permute.xlu0 %3931
        %3933 = vrot.lane.b32.xlu0 %v3927, 127
        %v3934 = vpop.permute.xlu0 %3933
        %v3938 = vadd.f32 %v3913, %v3930
        %v3939 = vadd.f32 %v3914, %v3932
        %v3940 = vadd.f32 %v3915, %v3934
        %s3941 = sld [smem:[#allocation2 + $0xf5]]
        %v3942 = vstv %s3941
        %v3943 = vmul.f32 %v3942, %v304
        %v3944 = vmul.f32 %v3942, %v305
        %v3945 = vmul.f32 %v3942, %v306
        %v3949 = vrot.slane %v3943, 1
        %v3950 = vrot.slane %v3944, 1
        %v3951 = vsel %vm403, %v3949, %v3950
        %v3952 = vrot.slane %v3945, 1
        %v3953 = vsel %vm403, %v3950, %v3952
        %3954 = vrot.lane.b32.xlu0 %v3951, 127
        %v3955 = vpop.permute.xlu0 %3954
        %3956 = vrot.lane.b32.xlu0 %v3953, 127
        %v3957 = vpop.permute.xlu0 %3956
        %3958 = vrot.lane.b32.xlu0 %v3952, 127
        %v3959 = vpop.permute.xlu0 %3958
        %v3963 = vadd.f32 %v3938, %v3955
        %v3964 = vadd.f32 %v3939, %v3957
        %v3965 = vadd.f32 %v3940, %v3959
        %s3966 = sld [smem:[#allocation2 + $0xf6]]
        %v3967 = vstv %s3966
        %v3968 = vmul.f32 %v3967, %v307
        %v3969 = vmul.f32 %v3967, %v308
        %v3970 = vmul.f32 %v3967, %v309
        %v3974 = vrot.slane %v3968, 1
        %v3975 = vrot.slane %v3969, 1
        %v3976 = vsel %vm403, %v3974, %v3975
        %v3977 = vrot.slane %v3970, 1
        %v3978 = vsel %vm403, %v3975, %v3977
        %3979 = vrot.lane.b32.xlu0 %v3976, 127
        %v3980 = vpop.permute.xlu0 %3979
        %3981 = vrot.lane.b32.xlu0 %v3978, 127
        %v3982 = vpop.permute.xlu0 %3981
        %3983 = vrot.lane.b32.xlu0 %v3977, 127
        %v3984 = vpop.permute.xlu0 %3983
        %v3988 = vadd.f32 %v3963, %v3980
        %v3989 = vadd.f32 %v3964, %v3982
        %v3990 = vadd.f32 %v3965, %v3984
        %s3991 = sld [smem:[#allocation2 + $0xf7]]
        %v3992 = vstv %s3991
        %v3993 = vmul.f32 %v3992, %v310
        %v3994 = vmul.f32 %v3992, %v311
        %v3995 = vmul.f32 %v3992, %v312
        %v3999 = vrot.slane %v3993, 1
        %v4000 = vrot.slane %v3994, 1
        %v4001 = vsel %vm403, %v3999, %v4000
        %v4002 = vrot.slane %v3995, 1
        %v4003 = vsel %vm403, %v4000, %v4002
        %4004 = vrot.lane.b32.xlu0 %v4001, 127
        %v4005 = vpop.permute.xlu0 %4004
        %4006 = vrot.lane.b32.xlu0 %v4003, 127
        %v4007 = vpop.permute.xlu0 %4006
        %4008 = vrot.lane.b32.xlu0 %v4002, 127
        %v4009 = vpop.permute.xlu0 %4008
        %v4013 = vadd.f32 %v3988, %v4005
        %v4014 = vadd.f32 %v3989, %v4007
        %v4015 = vadd.f32 %v3990, %v4009
        %4019 = vrot.lane.b32.xlu0 %v4013, 127
        %v4020 = vpop.permute.xlu0 %4019
        %4021 = vrot.lane.b32.xlu0 %v4014, 127
        %v4022 = vpop.permute.xlu0 %4021
        %4023 = vrot.lane.b32.xlu0 %v4015, 127
        %v4024 = vpop.permute.xlu0 %4023
        %s4028 = scalar_lea.vmem %s197, 208
        %4029 = vst.msk [vmem:[%s4028 - $0x1] sm:$0xfe] %vm2533, %v4020
        %4030 = vst.msk [vmem:[%s4028 + $0x7] sm:$0xff] %vm548, %v4022
        %4031 = vst.msk [vmem:[%s4028 + $0xf] sm:$0x1] %vm2536, %v4024
        %s4032 = sld [smem:[#allocation4 + $0x2]]
        %v4033 = vstv %s4032
        %s4034 = sld [smem:[#allocation2 + $0xc8]]
        %v4035 = vstv %s4034
        %v4036 = vmul.f32 %v4035, %v301
        %v4037 = vmul.f32 %v4035, %v302
        %v4038 = vmul.f32 %v4035, %v303
        %v4039 = vadd.f32 %v4033, %v4036
        %v4040 = vadd.f32 %v4033, %v4037
        %v4041 = vadd.f32 %v4033, %v4038
        %s4042 = sld [smem:[#allocation2 + $0xc9]]
        %v4043 = vstv %s4042
        %v4044 = vmul.f32 %v4043, %v304
        %v4045 = vmul.f32 %v4043, %v305
        %v4046 = vmul.f32 %v4043, %v306
        %v4047 = vadd.f32 %v4039, %v4044
        %v4048 = vadd.f32 %v4040, %v4045
        %v4049 = vadd.f32 %v4041, %v4046
        %s4050 = sld [smem:[#allocation2 + $0xca]]
        %v4051 = vstv %s4050
        %v4052 = vmul.f32 %v4051, %v307
        %v4053 = vmul.f32 %v4051, %v308
        %v4054 = vmul.f32 %v4051, %v309
        %v4055 = vadd.f32 %v4047, %v4052
        %v4056 = vadd.f32 %v4048, %v4053
        %v4057 = vadd.f32 %v4049, %v4054
        %s4058 = sld [smem:[#allocation2 + $0xcb]]
        %v4059 = vstv %s4058
        %v4060 = vmul.f32 %v4059, %v310
        %v4061 = vmul.f32 %v4059, %v311
        %v4062 = vmul.f32 %v4059, %v312
        %v4063 = vadd.f32 %v4055, %v4060
        %v4064 = vadd.f32 %v4056, %v4061
        %v4065 = vadd.f32 %v4057, %v4062
        %s4066 = sld [smem:[#allocation2 + $0xd8]]
        %v4067 = vstv %s4066
        %v4068 = vmul.f32 %v4067, %v301
        %v4069 = vmul.f32 %v4067, %v302
        %v4070 = vmul.f32 %v4067, %v303
        %4074 = vrot.lane.b32.xlu0 %v4068, 127
        %v4075 = vpop.permute.xlu0 %4074
        %4076 = vrot.lane.b32.xlu0 %v4069, 127
        %v4077 = vpop.permute.xlu0 %4076
        %4078 = vrot.lane.b32.xlu0 %v4070, 127
        %v4079 = vpop.permute.xlu0 %4078
        %v4083 = vadd.f32 %v4063, %v4075
        %v4084 = vadd.f32 %v4064, %v4077
        %v4085 = vadd.f32 %v4065, %v4079
        %s4086 = sld [smem:[#allocation2 + $0xd9]]
        %v4087 = vstv %s4086
        %v4088 = vmul.f32 %v4087, %v304
        %v4089 = vmul.f32 %v4087, %v305
        %v4090 = vmul.f32 %v4087, %v306
        %4094 = vrot.lane.b32.xlu0 %v4088, 127
        %v4095 = vpop.permute.xlu0 %4094
        %4096 = vrot.lane.b32.xlu0 %v4089, 127
        %v4097 = vpop.permute.xlu0 %4096
        %4098 = vrot.lane.b32.xlu0 %v4090, 127
        %v4099 = vpop.permute.xlu0 %4098
        %v4103 = vadd.f32 %v4083, %v4095
        %v4104 = vadd.f32 %v4084, %v4097
        %v4105 = vadd.f32 %v4085, %v4099
        %s4106 = sld [smem:[#allocation2 + $0xda]]
        %v4107 = vstv %s4106
        %v4108 = vmul.f32 %v4107, %v307
        %v4109 = vmul.f32 %v4107, %v308
        %v4110 = vmul.f32 %v4107, %v309
        %4114 = vrot.lane.b32.xlu0 %v4108, 127
        %v4115 = vpop.permute.xlu0 %4114
        %4116 = vrot.lane.b32.xlu0 %v4109, 127
        %v4117 = vpop.permute.xlu0 %4116
        %4118 = vrot.lane.b32.xlu0 %v4110, 127
        %v4119 = vpop.permute.xlu0 %4118
        %v4123 = vadd.f32 %v4103, %v4115
        %v4124 = vadd.f32 %v4104, %v4117
        %v4125 = vadd.f32 %v4105, %v4119
        %s4126 = sld [smem:[#allocation2 + $0xdb]]
        %v4127 = vstv %s4126
        %v4128 = vmul.f32 %v4127, %v310
        %v4129 = vmul.f32 %v4127, %v311
        %v4130 = vmul.f32 %v4127, %v312
        %4134 = vrot.lane.b32.xlu0 %v4128, 127
        %v4135 = vpop.permute.xlu0 %4134
        %4136 = vrot.lane.b32.xlu0 %v4129, 127
        %v4137 = vpop.permute.xlu0 %4136
        %4138 = vrot.lane.b32.xlu0 %v4130, 127
        %v4139 = vpop.permute.xlu0 %4138
        %v4143 = vadd.f32 %v4123, %v4135
        %v4144 = vadd.f32 %v4124, %v4137
        %v4145 = vadd.f32 %v4125, %v4139
        %s4146 = sld [smem:[#allocation2 + $0xe8]]
        %v4147 = vstv %s4146
        %v4148 = vmul.f32 %v4147, %v301
        %v4149 = vmul.f32 %v4147, %v302
        %v4150 = vmul.f32 %v4147, %v303
        %v4154 = vrot.slane %v4148, 1
        %v4155 = vrot.slane %v4149, 1
        %v4156 = vsel %vm403, %v4154, %v4155
        %v4157 = vrot.slane %v4150, 1
        %v4158 = vsel %vm403, %v4155, %v4157
        %v4162 = vadd.f32 %v4143, %v4156
        %v4163 = vadd.f32 %v4144, %v4158
        %v4164 = vadd.f32 %v4145, %v4157
        %s4165 = sld [smem:[#allocation2 + $0xe9]]
        %v4166 = vstv %s4165
        %v4167 = vmul.f32 %v4166, %v304
        %v4168 = vmul.f32 %v4166, %v305
        %v4169 = vmul.f32 %v4166, %v306
        %v4173 = vrot.slane %v4167, 1
        %v4174 = vrot.slane %v4168, 1
        %v4175 = vsel %vm403, %v4173, %v4174
        %v4176 = vrot.slane %v4169, 1
        %v4177 = vsel %vm403, %v4174, %v4176
        %v4181 = vadd.f32 %v4162, %v4175
        %v4182 = vadd.f32 %v4163, %v4177
        %v4183 = vadd.f32 %v4164, %v4176
        %s4184 = sld [smem:[#allocation2 + $0xea]]
        %v4185 = vstv %s4184
        %v4186 = vmul.f32 %v4185, %v307
        %v4187 = vmul.f32 %v4185, %v308
        %v4188 = vmul.f32 %v4185, %v309
        %v4192 = vrot.slane %v4186, 1
        %v4193 = vrot.slane %v4187, 1
        %v4194 = vsel %vm403, %v4192, %v4193
        %v4195 = vrot.slane %v4188, 1
        %v4196 = vsel %vm403, %v4193, %v4195
        %v4200 = vadd.f32 %v4181, %v4194
        %v4201 = vadd.f32 %v4182, %v4196
        %v4202 = vadd.f32 %v4183, %v4195
        %s4203 = sld [smem:[#allocation2 + $0xeb]]
        %v4204 = vstv %s4203
        %v4205 = vmul.f32 %v4204, %v310
        %v4206 = vmul.f32 %v4204, %v311
        %v4207 = vmul.f32 %v4204, %v312
        %v4211 = vrot.slane %v4205, 1
        %v4212 = vrot.slane %v4206, 1
        %v4213 = vsel %vm403, %v4211, %v4212
        %v4214 = vrot.slane %v4207, 1
        %v4215 = vsel %vm403, %v4212, %v4214
        %v4219 = vadd.f32 %v4200, %v4213
        %v4220 = vadd.f32 %v4201, %v4215
        %v4221 = vadd.f32 %v4202, %v4214
        %s4222 = sld [smem:[#allocation2 + $0xf8]]
        %v4223 = vstv %s4222
        %v4224 = vmul.f32 %v4223, %v301
        %v4225 = vmul.f32 %v4223, %v302
        %v4226 = vmul.f32 %v4223, %v303
        %v4230 = vrot.slane %v4224, 1
        %v4231 = vrot.slane %v4225, 1
        %v4232 = vsel %vm403, %v4230, %v4231
        %v4233 = vrot.slane %v4226, 1
        %v4234 = vsel %vm403, %v4231, %v4233
        %4235 = vrot.lane.b32.xlu0 %v4232, 127
        %v4236 = vpop.permute.xlu0 %4235
        %4237 = vrot.lane.b32.xlu0 %v4234, 127
        %v4238 = vpop.permute.xlu0 %4237
        %4239 = vrot.lane.b32.xlu0 %v4233, 127
        %v4240 = vpop.permute.xlu0 %4239
        %v4244 = vadd.f32 %v4219, %v4236
        %v4245 = vadd.f32 %v4220, %v4238
        %v4246 = vadd.f32 %v4221, %v4240
        %s4247 = sld [smem:[#allocation2 + $0xf9]]
        %v4248 = vstv %s4247
        %v4249 = vmul.f32 %v4248, %v304
        %v4250 = vmul.f32 %v4248, %v305
        %v4251 = vmul.f32 %v4248, %v306
        %v4255 = vrot.slane %v4249, 1
        %v4256 = vrot.slane %v4250, 1
        %v4257 = vsel %vm403, %v4255, %v4256
        %v4258 = vrot.slane %v4251, 1
        %v4259 = vsel %vm403, %v4256, %v4258
        %4260 = vrot.lane.b32.xlu0 %v4257, 127
        %v4261 = vpop.permute.xlu0 %4260
        %4262 = vrot.lane.b32.xlu0 %v4259, 127
        %v4263 = vpop.permute.xlu0 %4262
        %4264 = vrot.lane.b32.xlu0 %v4258, 127
        %v4265 = vpop.permute.xlu0 %4264
        %v4269 = vadd.f32 %v4244, %v4261
        %v4270 = vadd.f32 %v4245, %v4263
        %v4271 = vadd.f32 %v4246, %v4265
        %s4272 = sld [smem:[#allocation2 + $0xfa]]
        %v4273 = vstv %s4272
        %v4274 = vmul.f32 %v4273, %v307
        %v4275 = vmul.f32 %v4273, %v308
        %v4276 = vmul.f32 %v4273, %v309
        %v4280 = vrot.slane %v4274, 1
        %v4281 = vrot.slane %v4275, 1
        %v4282 = vsel %vm403, %v4280, %v4281
        %v4283 = vrot.slane %v4276, 1
        %v4284 = vsel %vm403, %v4281, %v4283
        %4285 = vrot.lane.b32.xlu0 %v4282, 127
        %v4286 = vpop.permute.xlu0 %4285
        %4287 = vrot.lane.b32.xlu0 %v4284, 127
        %v4288 = vpop.permute.xlu0 %4287
        %4289 = vrot.lane.b32.xlu0 %v4283, 127
        %v4290 = vpop.permute.xlu0 %4289
        %v4294 = vadd.f32 %v4269, %v4286
        %v4295 = vadd.f32 %v4270, %v4288
        %v4296 = vadd.f32 %v4271, %v4290
        %s4297 = sld [smem:[#allocation2 + $0xfb]]
        %v4298 = vstv %s4297
        %v4299 = vmul.f32 %v4298, %v310
        %v4300 = vmul.f32 %v4298, %v311
        %v4301 = vmul.f32 %v4298, %v312
        %v4305 = vrot.slane %v4299, 1
        %v4306 = vrot.slane %v4300, 1
        %v4307 = vsel %vm403, %v4305, %v4306
        %v4308 = vrot.slane %v4301, 1
        %v4309 = vsel %vm403, %v4306, %v4308
        %4310 = vrot.lane.b32.xlu0 %v4307, 127
        %v4311 = vpop.permute.xlu0 %4310
        %4312 = vrot.lane.b32.xlu0 %v4309, 127
        %v4313 = vpop.permute.xlu0 %4312
        %4314 = vrot.lane.b32.xlu0 %v4308, 127
        %v4315 = vpop.permute.xlu0 %4314
        %v4319 = vadd.f32 %v4294, %v4311
        %v4320 = vadd.f32 %v4295, %v4313
        %v4321 = vadd.f32 %v4296, %v4315
        %4325 = vrot.lane.b32.xlu0 %v4319, 127
        %v4326 = vpop.permute.xlu0 %4325
        %4327 = vrot.lane.b32.xlu0 %v4320, 127
        %v4328 = vpop.permute.xlu0 %4327
        %4329 = vrot.lane.b32.xlu0 %v4321, 127
        %v4330 = vpop.permute.xlu0 %4329
        %s4334 = scalar_lea.vmem %s197, 224
        %4335 = vst.msk [vmem:[%s4334 - $0x1] sm:$0xfe] %vm2533, %v4326
        %4336 = vst.msk [vmem:[%s4334 + $0x7] sm:$0xff] %vm548, %v4328
        %4337 = vst.msk [vmem:[%s4334 + $0xf] sm:$0x1] %vm2536, %v4330
        %s4338 = sld [smem:[#allocation4 + $0x3]]
        %v4339 = vstv %s4338
        %s4340 = sld [smem:[#allocation2 + $0xcc]]
        %v4341 = vstv %s4340
        %v4342 = vmul.f32 %v4341, %v301
        %v4343 = vmul.f32 %v4341, %v302
        %v4344 = vmul.f32 %v4341, %v303
        %v4345 = vadd.f32 %v4339, %v4342
        %v4346 = vadd.f32 %v4339, %v4343
        %v4347 = vadd.f32 %v4339, %v4344
        %s4348 = sld [smem:[#allocation2 + $0xcd]]
        %v4349 = vstv %s4348
        %v4350 = vmul.f32 %v4349, %v304
        %v4351 = vmul.f32 %v4349, %v305
        %v4352 = vmul.f32 %v4349, %v306
        %v4353 = vadd.f32 %v4345, %v4350
        %v4354 = vadd.f32 %v4346, %v4351
        %v4355 = vadd.f32 %v4347, %v4352
        %s4356 = sld [smem:[#allocation2 + $0xce]]
        %v4357 = vstv %s4356
        %v4358 = vmul.f32 %v4357, %v307
        %v4359 = vmul.f32 %v4357, %v308
        %v4360 = vmul.f32 %v4357, %v309
        %v4361 = vadd.f32 %v4353, %v4358
        %v4362 = vadd.f32 %v4354, %v4359
        %v4363 = vadd.f32 %v4355, %v4360
        %s4364 = sld [smem:[#allocation2 + $0xcf]]
        %v4365 = vstv %s4364
        %v4366 = vmul.f32 %v4365, %v310
        %v4367 = vmul.f32 %v4365, %v311
        %v4368 = vmul.f32 %v4365, %v312
        %v4369 = vadd.f32 %v4361, %v4366
        %v4370 = vadd.f32 %v4362, %v4367
        %v4371 = vadd.f32 %v4363, %v4368
        %s4372 = sld [smem:[#allocation2 + $0xdc]]
        %v4373 = vstv %s4372
        %v4374 = vmul.f32 %v4373, %v301
        %v4375 = vmul.f32 %v4373, %v302
        %v4376 = vmul.f32 %v4373, %v303
        %4380 = vrot.lane.b32.xlu0 %v4374, 127
        %v4381 = vpop.permute.xlu0 %4380
        %4382 = vrot.lane.b32.xlu0 %v4375, 127
        %v4383 = vpop.permute.xlu0 %4382
        %4384 = vrot.lane.b32.xlu0 %v4376, 127
        %v4385 = vpop.permute.xlu0 %4384
        %v4389 = vadd.f32 %v4369, %v4381
        %v4390 = vadd.f32 %v4370, %v4383
        %v4391 = vadd.f32 %v4371, %v4385
        %s4392 = sld [smem:[#allocation2 + $0xdd]]
        %v4393 = vstv %s4392
        %v4394 = vmul.f32 %v4393, %v304
        %v4395 = vmul.f32 %v4393, %v305
        %v4396 = vmul.f32 %v4393, %v306
        %4400 = vrot.lane.b32.xlu0 %v4394, 127
        %v4401 = vpop.permute.xlu0 %4400
        %4402 = vrot.lane.b32.xlu0 %v4395, 127
        %v4403 = vpop.permute.xlu0 %4402
        %4404 = vrot.lane.b32.xlu0 %v4396, 127
        %v4405 = vpop.permute.xlu0 %4404
        %v4409 = vadd.f32 %v4389, %v4401
        %v4410 = vadd.f32 %v4390, %v4403
        %v4411 = vadd.f32 %v4391, %v4405
        %s4412 = sld [smem:[#allocation2 + $0xde]]
        %v4413 = vstv %s4412
        %v4414 = vmul.f32 %v4413, %v307
        %v4415 = vmul.f32 %v4413, %v308
        %v4416 = vmul.f32 %v4413, %v309
        %4420 = vrot.lane.b32.xlu0 %v4414, 127
        %v4421 = vpop.permute.xlu0 %4420
        %4422 = vrot.lane.b32.xlu0 %v4415, 127
        %v4423 = vpop.permute.xlu0 %4422
        %4424 = vrot.lane.b32.xlu0 %v4416, 127
        %v4425 = vpop.permute.xlu0 %4424
        %v4429 = vadd.f32 %v4409, %v4421
        %v4430 = vadd.f32 %v4410, %v4423
        %v4431 = vadd.f32 %v4411, %v4425
        %s4432 = sld [smem:[#allocation2 + $0xdf]]
        %v4433 = vstv %s4432
        %v4434 = vmul.f32 %v4433, %v310
        %v4435 = vmul.f32 %v4433, %v311
        %v4436 = vmul.f32 %v4433, %v312
        %4440 = vrot.lane.b32.xlu0 %v4434, 127
        %v4441 = vpop.permute.xlu0 %4440
        %4442 = vrot.lane.b32.xlu0 %v4435, 127
        %v4443 = vpop.permute.xlu0 %4442
        %4444 = vrot.lane.b32.xlu0 %v4436, 127
        %v4445 = vpop.permute.xlu0 %4444
        %v4449 = vadd.f32 %v4429, %v4441
        %v4450 = vadd.f32 %v4430, %v4443
        %v4451 = vadd.f32 %v4431, %v4445
        %s4452 = sld [smem:[#allocation2 + $0xec]]
        %v4453 = vstv %s4452
        %v4454 = vmul.f32 %v4453, %v301
        %v4455 = vmul.f32 %v4453, %v302
        %v4456 = vmul.f32 %v4453, %v303
        %v4460 = vrot.slane %v4454, 1
        %v4461 = vrot.slane %v4455, 1
        %v4462 = vsel %vm403, %v4460, %v4461
        %v4463 = vrot.slane %v4456, 1
        %v4464 = vsel %vm403, %v4461, %v4463
        %v4468 = vadd.f32 %v4449, %v4462
        %v4469 = vadd.f32 %v4450, %v4464
        %v4470 = vadd.f32 %v4451, %v4463
        %s4471 = sld [smem:[#allocation2 + $0xed]]
        %v4472 = vstv %s4471
        %v4473 = vmul.f32 %v4472, %v304
        %v4474 = vmul.f32 %v4472, %v305
        %v4475 = vmul.f32 %v4472, %v306
        %v4479 = vrot.slane %v4473, 1
        %v4480 = vrot.slane %v4474, 1
        %v4481 = vsel %vm403, %v4479, %v4480
        %v4482 = vrot.slane %v4475, 1
        %v4483 = vsel %vm403, %v4480, %v4482
        %v4487 = vadd.f32 %v4468, %v4481
        %v4488 = vadd.f32 %v4469, %v4483
        %v4489 = vadd.f32 %v4470, %v4482
        %s4490 = sld [smem:[#allocation2 + $0xee]]
        %v4491 = vstv %s4490
        %v4492 = vmul.f32 %v4491, %v307
        %v4493 = vmul.f32 %v4491, %v308
        %v4494 = vmul.f32 %v4491, %v309
        %v4498 = vrot.slane %v4492, 1
        %v4499 = vrot.slane %v4493, 1
        %v4500 = vsel %vm403, %v4498, %v4499
        %v4501 = vrot.slane %v4494, 1
        %v4502 = vsel %vm403, %v4499, %v4501
        %v4506 = vadd.f32 %v4487, %v4500
        %v4507 = vadd.f32 %v4488, %v4502
        %v4508 = vadd.f32 %v4489, %v4501
        %s4509 = sld [smem:[#allocation2 + $0xef]]
        %v4510 = vstv %s4509
        %v4511 = vmul.f32 %v4510, %v310
        %v4512 = vmul.f32 %v4510, %v311
        %v4513 = vmul.f32 %v4510, %v312
        %v4517 = vrot.slane %v4511, 1
        %v4518 = vrot.slane %v4512, 1
        %v4519 = vsel %vm403, %v4517, %v4518
        %v4520 = vrot.slane %v4513, 1
        %v4521 = vsel %vm403, %v4518, %v4520
        %v4525 = vadd.f32 %v4506, %v4519
        %v4526 = vadd.f32 %v4507, %v4521
        %v4527 = vadd.f32 %v4508, %v4520
        %s4528 = sld [smem:[#allocation2 + $0xfc]]
        %v4529 = vstv %s4528
        %v4530 = vmul.f32 %v4529, %v301
        %v4531 = vmul.f32 %v4529, %v302
        %v4532 = vmul.f32 %v4529, %v303
        %v4536 = vrot.slane %v4530, 1
        %v4537 = vrot.slane %v4531, 1
        %v4538 = vsel %vm403, %v4536, %v4537
        %v4539 = vrot.slane %v4532, 1
        %v4540 = vsel %vm403, %v4537, %v4539
        %4541 = vrot.lane.b32.xlu0 %v4538, 127
        %v4542 = vpop.permute.xlu0 %4541
        %4543 = vrot.lane.b32.xlu0 %v4540, 127
        %v4544 = vpop.permute.xlu0 %4543
        %4545 = vrot.lane.b32.xlu0 %v4539, 127
        %v4546 = vpop.permute.xlu0 %4545
        %v4550 = vadd.f32 %v4525, %v4542
        %v4551 = vadd.f32 %v4526, %v4544
        %v4552 = vadd.f32 %v4527, %v4546
        %s4553 = sld [smem:[#allocation2 + $0xfd]]
        %v4554 = vstv %s4553
        %v4555 = vmul.f32 %v4554, %v304
        %v4556 = vmul.f32 %v4554, %v305
        %v4557 = vmul.f32 %v4554, %v306
        %v4561 = vrot.slane %v4555, 1
        %v4562 = vrot.slane %v4556, 1
        %v4563 = vsel %vm403, %v4561, %v4562
        %v4564 = vrot.slane %v4557, 1
        %v4565 = vsel %vm403, %v4562, %v4564
        %4566 = vrot.lane.b32.xlu0 %v4563, 127
        %v4567 = vpop.permute.xlu0 %4566
        %4568 = vrot.lane.b32.xlu0 %v4565, 127
        %v4569 = vpop.permute.xlu0 %4568
        %4570 = vrot.lane.b32.xlu0 %v4564, 127
        %v4571 = vpop.permute.xlu0 %4570
        %v4575 = vadd.f32 %v4550, %v4567
        %v4576 = vadd.f32 %v4551, %v4569
        %v4577 = vadd.f32 %v4552, %v4571
        %s4578 = sld [smem:[#allocation2 + $0xfe]]
        %v4579 = vstv %s4578
        %v4580 = vmul.f32 %v4579, %v307
        %v4581 = vmul.f32 %v4579, %v308
        %v4582 = vmul.f32 %v4579, %v309
        %v4586 = vrot.slane %v4580, 1
        %v4587 = vrot.slane %v4581, 1
        %v4588 = vsel %vm403, %v4586, %v4587
        %v4589 = vrot.slane %v4582, 1
        %v4590 = vsel %vm403, %v4587, %v4589
        %4591 = vrot.lane.b32.xlu0 %v4588, 127
        %v4592 = vpop.permute.xlu0 %4591
        %4593 = vrot.lane.b32.xlu0 %v4590, 127
        %v4594 = vpop.permute.xlu0 %4593
        %4595 = vrot.lane.b32.xlu0 %v4589, 127
        %v4596 = vpop.permute.xlu0 %4595
        %v4600 = vadd.f32 %v4575, %v4592
        %v4601 = vadd.f32 %v4576, %v4594
        %v4602 = vadd.f32 %v4577, %v4596
        %s4603 = sld [smem:[#allocation2 + $0xff]]
        %v4604 = vstv %s4603
        %v4605 = vmul.f32 %v4604, %v310
        %v4606 = vmul.f32 %v4604, %v311
        %v4607 = vmul.f32 %v4604, %v312
        %v4611 = vrot.slane %v4605, 1
        %v4612 = vrot.slane %v4606, 1
        %v4613 = vsel %vm403, %v4611, %v4612
        %v4614 = vrot.slane %v4607, 1
        %v4615 = vsel %vm403, %v4612, %v4614
        %4616 = vrot.lane.b32.xlu0 %v4613, 127
        %v4617 = vpop.permute.xlu0 %4616
        %4618 = vrot.lane.b32.xlu0 %v4615, 127
        %v4619 = vpop.permute.xlu0 %4618
        %4620 = vrot.lane.b32.xlu0 %v4614, 127
        %v4621 = vpop.permute.xlu0 %4620
        %v4625 = vadd.f32 %v4600, %v4617
        %v4626 = vadd.f32 %v4601, %v4619
        %v4627 = vadd.f32 %v4602, %v4621
        %4631 = vrot.lane.b32.xlu0 %v4625, 127
        %v4632 = vpop.permute.xlu0 %4631
        %4633 = vrot.lane.b32.xlu0 %v4626, 127
        %v4634 = vpop.permute.xlu0 %4633
        %4635 = vrot.lane.b32.xlu0 %v4627, 127
        %v4636 = vpop.permute.xlu0 %4635
        %s4640 = scalar_lea.vmem %s197, 240
        %4641 = vst.msk [vmem:[%s4640 - $0x1] sm:$0xfe] %vm2533, %v4632
        %4642 = vst.msk [vmem:[%s4640 + $0x7] sm:$0xff] %vm548, %v4634
        %4643 = vst.msk [vmem:[%s4640 + $0xf] sm:$0x1] %vm2536, %v4636
        %p4644 = scmp.lt.s32.totalorder %s16, 1
        %s4645 = scalar_select %p4644, %s16, 1
        %s4646 = smul.addr %s4645, 32
        %s4647 = smul.addr %s4646, 8
        %s4648 = scalar_lea.vmem %s3, %s4647
        // Predicated region
        $region41: #{upsample_module.1} parent=31 // pred_check
          %p4649 = pneg %p102
        $region42: #{upsample_module.1} parent=31 // pred_check_branch
          %4651 = sbr.rel (%p4649) target = $region44
        $region43: #{upsample_module.1} parent=31 // pred_region
          _
        $region44: #{upsample_module.1} parent=31 // pred_fallthru
          _
      $region32: #{upsample_module.1} parent=5 // pred_fallthru
        _
      %p4652 = scmp.le.s32.totalorder 2, %s11
      // Predicated region
      $region45: #{upsample_module.1} parent=5 // pred_check
        %p4653 = pneg %p4652
      $region46: #{upsample_module.1} parent=5 // pred_check_branch
        %4655 = sbr.rel (%p4653) target = $region48
      $region47: #{upsample_module.1} parent=5 // pred_region
        %s4656 = ssub.s32 %s11, 2
        // Predicated region
        $region49: #{upsample_module.1} parent=47 // pred_check
          %p4657 = pneg %p108
        $region50: #{upsample_module.1} parent=47 // pred_check_branch
          %4659 = sbr.rel (%p4657) target = $region52
        $region51: #{upsample_module.1} parent=47 // pred_region
          %p4660 = scmp.lt.s32.totalorder %s17, 1
          %s4661 = scalar_select %p4660, %s17, 1
          %s4662 = smul.addr %s4661, 32
          %s4663 = smul.addr %s4662, 8
          %s4664 = scalar_lea.vmem %s3, %s4663
        $region52: #{upsample_module.1} parent=47 // pred_fallthru
          _
      $region48: #{upsample_module.1} parent=5 // pred_fallthru
        _
    $region6: #{upsample_module.1} parent=1 // loop_footer
      %s15 = sadd.s32 1, %s11
    $region7: #{upsample_module.1} parent=1 // loop_footer_branch
      %10 = sbr.rel target = $region3
    $region8: #{upsample_module.1} parent=1 // loop_exit
      _
    %4665 = vsyncpa [#allocation3], 1
    %s4666 = scalar_lea.sflag [#allocation3], 1
    %4667 = vsyncpa %s4666, 1
    %4668 = vsyncpa [#allocation5], 1

</llo_original>
